<compile_context>
chip_gen: v5e
topology: v5e:2x2
jax: 0.10.0
libtpu: 0.0.40
codegen_flags: <defaults>
</compile_context>

<pallas_src>
import jax
import jax.numpy as jnp
from jax import lax
from jax.experimental import pallas as pl
from jax.experimental.pallas import tpu as pltpu


# ----------------------------------------------------------------------------
# Pallas kernel: one (direction, batch-tile, time-chunk) step of the LSTM.
# ----------------------------------------------------------------------------
def _bidir_lstm_kernel(g_ref, w_hh_ref, o_ref, h_sc, c_sc):
    """g_ref:    (Tc, BT, 4Hp) bf16  precomputed X @ W_ih + b
       w_hh_ref: (Hp, 4Hp)     bf16  recurrent weights (one direction)
       o_ref:    (Tc, BT, Hp)  f32   hidden states (one direction's half)
       h_sc/c_sc:(BT, Hp)      f32   carries across time chunks
    """
    d = pl.program_id(0)            # 0 = forward, 1 = reverse
    t_blk = pl.program_id(2)        # time-chunk index (sequential axis)
    Tc = g_ref.shape[0]
    Hp = o_ref.shape[2]

    @pl.when(t_blk == 0)
    def _():
        h_sc[...] = jnp.zeros_like(h_sc)
        c_sc[...] = jnp.zeros_like(c_sc)

    # Direction select hoisted out of the loop: fwd walks 0..Tc-1, rev Tc-1..0.
    base = jnp.where(d == 0, 0, Tc - 1)
    sign = jnp.where(d == 0, 1, -1)

    def sigm(x):
        # sigmoid(x) = 0.5*(tanh(0.5*x)+1): one EUP op instead of exp+divide.
        return 0.5 * jnp.tanh(0.5 * x) + 0.5

    def step(tl, carry):
        h, c = carry
        t = base + sign * tl
        # bf16 MXU matmul, f32 accumulation.  w_hh stays a VMEM ref (do not
        # hoist the full read into vregs at production H).
        rec = jnp.dot(h.astype(jnp.bfloat16), w_hh_ref[...],
                      preferred_element_type=jnp.float32)
        gates = g_ref[t].astype(jnp.float32) + rec
        i_g = sigm(gates[:, 0:Hp])
        f_g = sigm(gates[:, Hp:2 * Hp])
        g_g = jnp.tanh(gates[:, 2 * Hp:3 * Hp])
        o_g = sigm(gates[:, 3 * Hp:4 * Hp])
        c_new = f_g * c + i_g * g_g
        h_new = o_g * jnp.tanh(c_new)
        o_ref[t] = h_new
        return (h_new, c_new)

    h0 = h_sc[...]
    c0 = c_sc[...]
    hT, cT = lax.fori_loop(0, Tc, step, (h0, c0),
                           unroll=max(1, min(8, Tc)))
    h_sc[...] = hT
    c_sc[...] = cT


# ----------------------------------------------------------------------------
# Layer wrapper.
# ----------------------------------------------------------------------------
def _round_up(x, m):
    return (x + m - 1) // m * m


def _pick_chunk(t, target):
    c = min(t, target)
    while t % c != 0:
        c -= 1
    return c


def bidir_lstm_layer(x, w_ih, w_hh, b, *, batch_major=False,
                     batch_tile=16, time_chunk=64):
    """One bidirectional LSTM layer.

    x:    (Bp, T, D) if batch_major else (T, Bp, D)   (Bp multiple of batch_tile)
    w_ih: (2, D, 4Hp) f32    w_hh: (2, Hp, 4Hp) bf16    b: (2, 4Hp) f32
    Returns (T, Bp, 2Hp) f32: fwd half in lanes [0:Hp], rev half in [Hp:2Hp].
    """
    Hp = w_hh.shape[1]
    G4 = 4 * Hp

    # Hoisted input projection, bias folded in, bf16 operands / f32 accum.
    # Layer-0 einsum contracts directly from batch-major input (no transpose).
    eq = "btd,ndg->ntbg" if batch_major else "tbd,ndg->ntbg"
    g = jnp.einsum(eq, x.astype(jnp.bfloat16), w_ih.astype(jnp.bfloat16),
                   preferred_element_type=jnp.float32)
    g = (g + b[:, None, None, :]).astype(jnp.bfloat16)      # (2, T, Bp, 4Hp)

    _, T, Bp, _ = g.shape
    assert Bp % batch_tile == 0
    Tc = _pick_chunk(T, time_chunk)
    nt = T // Tc
    nb = Bp // batch_tile

    def g_map(d, bb, tt):
        return (d, (1 - d) * tt + d * (nt - 1 - tt), bb, 0)

    def w_map(d, bb, tt):
        return (d, 0, 0)

    def o_map(d, bb, tt):
        return ((1 - d) * tt + d * (nt - 1 - tt), bb, d)

    # Explicit VMEM budget from the actual block sizes (double-buffered).
    vmem_bytes = (2 * Tc * batch_tile * G4 * 2      # gate blocks (bf16)
                  + 2 * Hp * G4 * 2                 # w_hh blocks (bf16)
                  + 2 * Tc * batch_tile * Hp * 4    # output blocks (f32)
                  + 2 * batch_tile * Hp * 4         # h/c scratch
                  + (2 << 20))                      # headroom
    vmem_limit = int(min(64 << 20, max(32 << 20, vmem_bytes)))

    out = pl.pallas_call(
        _bidir_lstm_kernel,
        out_shape=jax.ShapeDtypeStruct((T, Bp, 2 * Hp), jnp.float32),
        grid_spec=pltpu.PrefetchScalarGridSpec(
            num_scalar_prefetch=0,
            grid=(2, nb, nt),                       # (direction, batch, time)
            in_specs=[
                pl.BlockSpec((None, Tc, batch_tile, G4), g_map),
                pl.BlockSpec((None, Hp, G4), w_map),
            ],
            out_specs=pl.BlockSpec((Tc, batch_tile, Hp), o_map),
            scratch_shapes=[
                pltpu.VMEM((batch_tile, Hp), jnp.float32),   # h carry
                pltpu.VMEM((batch_tile, Hp), jnp.float32),   # c carry
            ],
        ),
        compiler_params=pltpu.CompilerParams(
            dimension_semantics=("parallel", "parallel", "arbitrary"),
            vmem_limit_bytes=vmem_limit,
        ),
    )(g, w_hh)
    return out


# ----------------------------------------------------------------------------
# Zero-padding helpers (padded lanes provably stay exactly 0 through the LSTM).
# ----------------------------------------------------------------------------
def _pad_gate_axis(w, h, hp):
    """Pad trailing 4*h gate axis to 4*hp, per-gate (i|f|g|o)."""
    if h == hp:
        return w
    lead = w.shape[:-1]
    w = w.reshape(lead + (4, h))
    pad = [(0, 0)] * (len(lead) + 1) + [(0, hp - h)]
    return jnp.pad(w, pad).reshape(lead + (4 * hp,))


def _pad_bidir_input_axis(w, h, hp):
    """(2, 2*h, G) -> (2, 2*hp, G): pad each direction's input block."""
    if h == hp:
        return w
    n, _, g4 = w.shape
    w = w.reshape(n, 2, h, g4)
    return jnp.pad(w, ((0, 0), (0, 0), (0, hp - h), (0, 0))).reshape(n, 2 * hp, g4)


def _pad_hidden_axis(w, h, hp):
    """(2, h, G) -> (2, hp, G)."""
    if h == hp:
        return w
    return jnp.pad(w, ((0, 0), (0, hp - h), (0, 0)))


# ----------------------------------------------------------------------------
# Parameters + forward pass.
# ----------------------------------------------------------------------------
def init_encoder_params(key, n_vocab, embedding_dim, hidden_dim, num_layers=3):
    """PyTorch-like init: embedding ~ N(0,1); LSTM weights ~ U(+/- 1/sqrt(H))."""
    params = {}
    k_emb, key = jax.random.split(key)
    params["embedding"] = jax.random.normal(
        k_emb, (n_vocab, embedding_dim), dtype=jnp.float32)

    bound = 1.0 / float(hidden_dim) ** 0.5
    layers = []
    for layer in range(num_layers):
        d_in = embedding_dim if layer == 0 else 2 * hidden_dim
        key, k1, k2, k3 = jax.random.split(key, 4)
        w_ih = jax.random.uniform(k1, (2, d_in, 4 * hidden_dim),
                                  minval=-bound, maxval=bound, dtype=jnp.float32)
        w_hh = jax.random.uniform(k2, (2, hidden_dim, 4 * hidden_dim),
                                  minval=-bound, maxval=bound, dtype=jnp.float32)
        # PyTorch keeps bias_ih/bias_hh separately; only their sum is used.
        b = jax.random.uniform(k3, (2, 4 * hidden_dim),
                               minval=-bound, maxval=bound, dtype=jnp.float32)
        layers.append({"w_ih": w_ih, "w_hh": w_hh, "b": b})
    params["lstm"] = layers
    return params


@jax.jit
def encoder_forward(params, tokens):
    """tokens: (B, T) int32 -> outputs: (B, T, 2*hidden_dim) float32."""
    B, _ = tokens.shape
    H = params["lstm"][0]["w_hh"].shape[1]
    Hp = _round_up(H, 128)          # lane-aligned per-gate width
    BT = 16                         # batch tile = bf16 sublane granule
    Bp = _round_up(B, BT)

    embedded = jnp.take(params["embedding"], tokens, axis=0)     # (B, T, E)
    x = jnp.pad(embedded, ((0, Bp - B), (0, 0), (0, 0)))          # (Bp, T, E)

    # TODO(synk): nn.LSTM inter-layer dropout (p=0.1) only applies in training
    # mode; this implements eval-mode semantics (dropout = identity).
    for li, layer in enumerate(params["lstm"]):
        w_ih = layer["w_ih"]
        if li > 0:
            w_ih = _pad_bidir_input_axis(w_ih, H, Hp)
        w_ih = _pad_gate_axis(w_ih, H, Hp)
        w_hh = _pad_gate_axis(_pad_hidden_axis(layer["w_hh"], H, Hp),
                              H, Hp).astype(jnp.bfloat16)
        b = _pad_gate_axis(layer["b"], H, Hp)
        x = bidir_lstm_layer(x, w_ih, w_hh, b,
                             batch_major=(li == 0), batch_tile=BT)
        # x: (T, Bp, 2*Hp), stays padded & time-major between layers.

    # Unpad once on the final output and restore PyTorch's (B, T, 2H) layout.
    if Hp != H:
        x = jnp.concatenate([x[..., :H], x[..., Hp:Hp + H]], axis=-1)
    return jnp.transpose(x[:, :B], (1, 0, 2))


if __name__ == "__main__":
    # Small shapes consistent with the module's forward pass.
    n_vocab = 50
    embedding_dim = 32
    hidden_dim = 32
    batch = 2
    seq = 8

    key = jax.random.PRNGKey(0)
    k_params, k_tokens = jax.random.split(key)

    params = init_encoder_params(k_params, n_vocab, embedding_dim, hidden_dim)
    tokens = jax.random.randint(k_tokens, (batch, seq), 0, n_vocab,
                                dtype=jnp.int32)

    out = jax.block_until_ready(encoder_forward(params, tokens))

    assert out.shape == (batch, seq, 2 * hidden_dim), out.shape
    assert out.dtype == jnp.float32
    assert bool(jnp.all(jnp.isfinite(out)))
    print("KERNEL_OK")
</pallas_src>

<mosaic_0001>
module attributes {stable_mosaic.version = 11 : i64} {
  func.func @_bidir_lstm_kernel(%arg0: i32, %arg1: i32, %arg2: i32, %arg3: memref<1x8x16x512xbf16, #tpu.memory_space<vmem>>, %arg4: memref<1x128x512xbf16, #tpu.memory_space<vmem>>, %arg5: memref<8x16x128xf32, #tpu.memory_space<vmem>>, %arg6: memref<16x128xf32, #tpu.memory_space<vmem>>, %arg7: memref<16x128xf32, #tpu.memory_space<vmem>>) attributes {dimension_semantics = [#tpu.dimension_semantics<parallel>, #tpu.dimension_semantics<parallel>, #tpu.dimension_semantics<arbitrary>], iteration_bounds = array<i64: 2, 1, 1>, scalar_prefetch = 0 : i64, scratch_operands = 2 : i64, tpu.core_type = #tpu.core_type<tc>, window_params = [{transform_indices = @transform_0, window_bounds = array<i64: 1, 8, 16, 512>}, {transform_indices = @transform_1, window_bounds = array<i64: 1, 128, 512>}, {transform_indices = @transform_2, window_bounds = array<i64: 8, 16, 128>}]} {
    %c0_i32 = arith.constant 0 : i32
    %0 = arith.cmpi eq, %arg2, %c0_i32 : i32
    %1 = arith.extui %0 : i1 to i32
    %c0_i32_0 = arith.constant 0 : i32
    %2 = arith.cmpi ne, %1, %c0_i32_0 : i32
    scf.if %2 {
      %cst_157 = arith.constant 0.000000e+00 : f32
      %379 = vector.broadcast %cst_157 : f32 to vector<16x128xf32>
      %c0_158 = arith.constant 0 : index
      %c0_159 = arith.constant 0 : index
      %380 = vector.load %arg6[%c0_158, %c0_159] : memref<16x128xf32, #tpu.memory_space<vmem>>, vector<16x128xf32>
      tpu.vector_store %arg6[%c0_158, %c0_159], %379 {strides = array<i32>} : memref<16x128xf32, #tpu.memory_space<vmem>>, vector<16x128xf32>,
      %cst_160 = arith.constant 0.000000e+00 : f32
      %381 = vector.broadcast %cst_160 : f32 to vector<16x128xf32>
      %c0_161 = arith.constant 0 : index
      %c0_162 = arith.constant 0 : index
      %382 = vector.load %arg7[%c0_161, %c0_162] : memref<16x128xf32, #tpu.memory_space<vmem>>, vector<16x128xf32>
      tpu.vector_store %arg7[%c0_161, %c0_162], %381 {strides = array<i32>} : memref<16x128xf32, #tpu.memory_space<vmem>>, vector<16x128xf32>,
    } else {
    }
    %c0_i32_1 = arith.constant 0 : i32
    %3 = arith.cmpi eq, %arg0, %c0_i32_1 : i32
    %c0_i32_2 = arith.constant 0 : i32
    %c7_i32 = arith.constant 7 : i32
    %4 = arith.select %3, %c0_i32_2, %c7_i32 : i32
    %c0_i32_3 = arith.constant 0 : i32
    %5 = arith.cmpi eq, %arg0, %c0_i32_3 : i32
    %c1_i32 = arith.constant 1 : i32
    %c-1_i32 = arith.constant -1 : i32
    %6 = arith.select %5, %c1_i32, %c-1_i32 : i32
    %c0 = arith.constant 0 : index
    %c0_4 = arith.constant 0 : index
    %7 = vector.load %arg6[%c0, %c0_4] : memref<16x128xf32, #tpu.memory_space<vmem>>, vector<16x128xf32>
    %c0_5 = arith.constant 0 : index
    %c0_6 = arith.constant 0 : index
    %8 = vector.load %arg7[%c0_5, %c0_6] : memref<16x128xf32, #tpu.memory_space<vmem>>, vector<16x128xf32>
    %c0_i32_7 = arith.constant 0 : i32
    %9 = arith.muli %6, %c0_i32_7 : i32
    %10 = arith.addi %4, %9 : i32
    %11 = arith.truncf %7 : vector<16x128xf32> to vector<16x128xbf16>
    %c0_8 = arith.constant 0 : index
    %c0_9 = arith.constant 0 : index
    %c0_10 = arith.constant 0 : index
    %12 = vector.load %arg4[%c0_8, %c0_9, %c0_10] : memref<1x128x512xbf16, #tpu.memory_space<vmem>>, vector<1x128x512xbf16>
    %13 = vector.shape_cast %12 : vector<1x128x512xbf16> to vector<128x512xbf16>
    %cst = arith.constant dense<0.000000e+00> : vector<16x512xf32>
    %14 = tpu.matmul %11, %13, %cst {dimension_numbers = #tpu.dot_dimension_numbers<[1], [0], [0], [1], [0, 0, 1, 1], [], []>} : vector<16x128xbf16>, vector<128x512xbf16>, vector<16x512xf32> -> vector<16x512xf32>
    %c0_11 = arith.constant 0 : index
    %15 = arith.index_cast %10 : i32 to index
    %c0_12 = arith.constant 0 : index
    %c0_13 = arith.constant 0 : index
    %16 = vector.load %arg3[%c0_11, %15, %c0_12, %c0_13] : memref<1x8x16x512xbf16, #tpu.memory_space<vmem>>, vector<1x1x16x512xbf16>
    %17 = vector.shape_cast %16 : vector<1x1x16x512xbf16> to vector<16x512xbf16>
    %18 = arith.extf %17 : vector<16x512xbf16> to vector<16x512xf32>
    %19 = arith.addf %18, %14 : vector<16x512xf32>
    %20 = vector.extract_strided_slice %19 {offsets = [0, 0], sizes = [16, 128], strides = [1, 1]} : vector<16x512xf32> to vector<16x128xf32>
    %cst_14 = arith.constant 5.000000e-01 : f32
    %21 = vector.broadcast %cst_14 : f32 to vector<16x128xf32>
    %22 = arith.mulf %21, %20 : vector<16x128xf32>
    %23 = math.tanh %22 : vector<16x128xf32>
    %cst_15 = arith.constant 5.000000e-01 : f32
    %24 = vector.broadcast %cst_15 : f32 to vector<16x128xf32>
    %25 = arith.mulf %24, %23 : vector<16x128xf32>
    %cst_16 = arith.constant 5.000000e-01 : f32
    %26 = vector.broadcast %cst_16 : f32 to vector<16x128xf32>
    %27 = arith.addf %25, %26 : vector<16x128xf32>
    %28 = vector.extract_strided_slice %19 {offsets = [0, 128], sizes = [16, 128], strides = [1, 1]} : vector<16x512xf32> to vector<16x128xf32>
    %cst_17 = arith.constant 5.000000e-01 : f32
    %29 = vector.broadcast %cst_17 : f32 to vector<16x128xf32>
    %30 = arith.mulf %29, %28 : vector<16x128xf32>
    %31 = math.tanh %30 : vector<16x128xf32>
    %cst_18 = arith.constant 5.000000e-01 : f32
    %32 = vector.broadcast %cst_18 : f32 to vector<16x128xf32>
    %33 = arith.mulf %32, %31 : vector<16x128xf32>
    %cst_19 = arith.constant 5.000000e-01 : f32
    %34 = vector.broadcast %cst_19 : f32 to vector<16x128xf32>
    %35 = arith.addf %33, %34 : vector<16x128xf32>
    %36 = vector.extract_strided_slice %19 {offsets = [0, 256], sizes = [16, 128], strides = [1, 1]} : vector<16x512xf32> to vector<16x128xf32>
    %37 = math.tanh %36 : vector<16x128xf32>
    %38 = vector.extract_strided_slice %19 {offsets = [0, 384], sizes = [16, 128], strides = [1, 1]} : vector<16x512xf32> to vector<16x128xf32>
    %cst_20 = arith.constant 5.000000e-01 : f32
    %39 = vector.broadcast %cst_20 : f32 to vector<16x128xf32>
    %40 = arith.mulf %39, %38 : vector<16x128xf32>
    %41 = math.tanh %40 : vector<16x128xf32>
    %cst_21 = arith.constant 5.000000e-01 : f32
    %42 = vector.broadcast %cst_21 : f32 to vector<16x128xf32>
    %43 = arith.mulf %42, %41 : vector<16x128xf32>
    %cst_22 = arith.constant 5.000000e-01 : f32
    %44 = vector.broadcast %cst_22 : f32 to vector<16x128xf32>
    %45 = arith.addf %43, %44 : vector<16x128xf32>
    %46 = arith.mulf %35, %8 : vector<16x128xf32>
    %47 = arith.mulf %27, %37 : vector<16x128xf32>
    %48 = arith.addf %46, %47 : vector<16x128xf32>
    %49 = math.tanh %48 : vector<16x128xf32>
    %50 = arith.mulf %45, %49 : vector<16x128xf32>
    %51 = arith.index_cast %10 : i32 to index
    %c0_23 = arith.constant 0 : index
    %c0_24 = arith.constant 0 : index
    %52 = vector.load %arg5[%51, %c0_23, %c0_24] : memref<8x16x128xf32, #tpu.memory_space<vmem>>, vector<1x16x128xf32>
    %53 = vector.shape_cast %52 : vector<1x16x128xf32> to vector<16x128xf32>
    %54 = vector.shape_cast %50 : vector<16x128xf32> to vector<1x16x128xf32>
    tpu.vector_store %arg5[%51, %c0_23, %c0_24], %54 {strides = array<i32>} : memref<8x16x128xf32, #tpu.memory_space<vmem>>, vector<1x16x128xf32>,
    %c1_i32_25 = arith.constant 1 : i32
    %55 = arith.muli %6, %c1_i32_25 : i32
    %56 = arith.addi %4, %55 : i32
    %57 = arith.truncf %50 : vector<16x128xf32> to vector<16x128xbf16>
    %c0_26 = arith.constant 0 : index
    %c0_27 = arith.constant 0 : index
    %c0_28 = arith.constant 0 : index
    %58 = vector.load %arg4[%c0_26, %c0_27, %c0_28] : memref<1x128x512xbf16, #tpu.memory_space<vmem>>, vector<1x128x512xbf16>
    %59 = vector.shape_cast %58 : vector<1x128x512xbf16> to vector<128x512xbf16>
    %cst_29 = arith.constant dense<0.000000e+00> : vector<16x512xf32>
    %60 = tpu.matmul %57, %59, %cst_29 {dimension_numbers = #tpu.dot_dimension_numbers<[1], [0], [0], [1], [0, 0, 1, 1], [], []>} : vector<16x128xbf16>, vector<128x512xbf16>, vector<16x512xf32> -> vector<16x512xf32>
    %c0_30 = arith.constant 0 : index
    %61 = arith.index_cast %56 : i32 to index
    %c0_31 = arith.constant 0 : index
    %c0_32 = arith.constant 0 : index
    %62 = vector.load %arg3[%c0_30, %61, %c0_31, %c0_32] : memref<1x8x16x512xbf16, #tpu.memory_space<vmem>>, vector<1x1x16x512xbf16>
    %63 = vector.shape_cast %62 : vector<1x1x16x512xbf16> to vector<16x512xbf16>
    %64 = arith.extf %63 : vector<16x512xbf16> to vector<16x512xf32>
    %65 = arith.addf %64, %60 : vector<16x512xf32>
    %66 = vector.extract_strided_slice %65 {offsets = [0, 0], sizes = [16, 128], strides = [1, 1]} : vector<16x512xf32> to vector<16x128xf32>
    %cst_33 = arith.constant 5.000000e-01 : f32
    %67 = vector.broadcast %cst_33 : f32 to vector<16x128xf32>
    %68 = arith.mulf %67, %66 : vector<16x128xf32>
    %69 = math.tanh %68 : vector<16x128xf32>
    %cst_34 = arith.constant 5.000000e-01 : f32
    %70 = vector.broadcast %cst_34 : f32 to vector<16x128xf32>
    %71 = arith.mulf %70, %69 : vector<16x128xf32>
    %cst_35 = arith.constant 5.000000e-01 : f32
    %72 = vector.broadcast %cst_35 : f32 to vector<16x128xf32>
    %73 = arith.addf %71, %72 : vector<16x128xf32>
    %74 = vector.extract_strided_slice %65 {offsets = [0, 128], sizes = [16, 128], strides = [1, 1]} : vector<16x512xf32> to vector<16x128xf32>
    %cst_36 = arith.constant 5.000000e-01 : f32
    %75 = vector.broadcast %cst_36 : f32 to vector<16x128xf32>
    %76 = arith.mulf %75, %74 : vector<16x128xf32>
    %77 = math.tanh %76 : vector<16x128xf32>
    %cst_37 = arith.constant 5.000000e-01 : f32
    %78 = vector.broadcast %cst_37 : f32 to vector<16x128xf32>
    %79 = arith.mulf %78, %77 : vector<16x128xf32>
    %cst_38 = arith.constant 5.000000e-01 : f32
    %80 = vector.broadcast %cst_38 : f32 to vector<16x128xf32>
    %81 = arith.addf %79, %80 : vector<16x128xf32>
    %82 = vector.extract_strided_slice %65 {offsets = [0, 256], sizes = [16, 128], strides = [1, 1]} : vector<16x512xf32> to vector<16x128xf32>
    %83 = math.tanh %82 : vector<16x128xf32>
    %84 = vector.extract_strided_slice %65 {offsets = [0, 384], sizes = [16, 128], strides = [1, 1]} : vector<16x512xf32> to vector<16x128xf32>
    %cst_39 = arith.constant 5.000000e-01 : f32
    %85 = vector.broadcast %cst_39 : f32 to vector<16x128xf32>
    %86 = arith.mulf %85, %84 : vector<16x128xf32>
    %87 = math.tanh %86 : vector<16x128xf32>
    %cst_40 = arith.constant 5.000000e-01 : f32
    %88 = vector.broadcast %cst_40 : f32 to vector<16x128xf32>
    %89 = arith.mulf %88, %87 : vector<16x128xf32>
    %cst_41 = arith.constant 5.000000e-01 : f32
    %90 = vector.broadcast %cst_41 : f32 to vector<16x128xf32>
    %91 = arith.addf %89, %90 : vector<16x128xf32>
    %92 = arith.mulf %81, %48 : vector<16x128xf32>
    %93 = arith.mulf %73, %83 : vector<16x128xf32>
    %94 = arith.addf %92, %93 : vector<16x128xf32>
    %95 = math.tanh %94 : vector<16x128xf32>
    %96 = arith.mulf %91, %95 : vector<16x128xf32>
    %97 = arith.index_cast %56 : i32 to index
    %c0_42 = arith.constant 0 : index
    %c0_43 = arith.constant 0 : index
    %98 = vector.load %arg5[%97, %c0_42, %c0_43] : memref<8x16x128xf32, #tpu.memory_space<vmem>>, vector<1x16x128xf32>
    %99 = vector.shape_cast %98 : vector<1x16x128xf32> to vector<16x128xf32>
    %100 = vector.shape_cast %96 : vector<16x128xf32> to vector<1x16x128xf32>
    tpu.vector_store %arg5[%97, %c0_42, %c0_43], %100 {strides = array<i32>} : memref<8x16x128xf32, #tpu.memory_space<vmem>>, vector<1x16x128xf32>,
    %c2_i32 = arith.constant 2 : i32
    %101 = arith.muli %6, %c2_i32 : i32
    %102 = arith.addi %4, %101 : i32
    %103 = arith.truncf %96 : vector<16x128xf32> to vector<16x128xbf16>
    %c0_44 = arith.constant 0 : index
    %c0_45 = arith.constant 0 : index
    %c0_46 = arith.constant 0 : index
    %104 = vector.load %arg4[%c0_44, %c0_45, %c0_46] : memref<1x128x512xbf16, #tpu.memory_space<vmem>>, vector<1x128x512xbf16>
    %105 = vector.shape_cast %104 : vector<1x128x512xbf16> to vector<128x512xbf16>
    %cst_47 = arith.constant dense<0.000000e+00> : vector<16x512xf32>
    %106 = tpu.matmul %103, %105, %cst_47 {dimension_numbers = #tpu.dot_dimension_numbers<[1], [0], [0], [1], [0, 0, 1, 1], [], []>} : vector<16x128xbf16>, vector<128x512xbf16>, vector<16x512xf32> -> vector<16x512xf32>
    %c0_48 = arith.constant 0 : index
    %107 = arith.index_cast %102 : i32 to index
    %c0_49 = arith.constant 0 : index
    %c0_50 = arith.constant 0 : index
    %108 = vector.load %arg3[%c0_48, %107, %c0_49, %c0_50] : memref<1x8x16x512xbf16, #tpu.memory_space<vmem>>, vector<1x1x16x512xbf16>
    %109 = vector.shape_cast %108 : vector<1x1x16x512xbf16> to vector<16x512xbf16>
    %110 = arith.extf %109 : vector<16x512xbf16> to vector<16x512xf32>
    %111 = arith.addf %110, %106 : vector<16x512xf32>
    %112 = vector.extract_strided_slice %111 {offsets = [0, 0], sizes = [16, 128], strides = [1, 1]} : vector<16x512xf32> to vector<16x128xf32>
    %cst_51 = arith.constant 5.000000e-01 : f32
    %113 = vector.broadcast %cst_51 : f32 to vector<16x128xf32>
    %114 = arith.mulf %113, %112 : vector<16x128xf32>
    %115 = math.tanh %114 : vector<16x128xf32>
    %cst_52 = arith.constant 5.000000e-01 : f32
    %116 = vector.broadcast %cst_52 : f32 to vector<16x128xf32>
    %117 = arith.mulf %116, %115 : vector<16x128xf32>
    %cst_53 = arith.constant 5.000000e-01 : f32
    %118 = vector.broadcast %cst_53 : f32 to vector<16x128xf32>
    %119 = arith.addf %117, %118 : vector<16x128xf32>
    %120 = vector.extract_strided_slice %111 {offsets = [0, 128], sizes = [16, 128], strides = [1, 1]} : vector<16x512xf32> to vector<16x128xf32>
    %cst_54 = arith.constant 5.000000e-01 : f32
    %121 = vector.broadcast %cst_54 : f32 to vector<16x128xf32>
    %122 = arith.mulf %121, %120 : vector<16x128xf32>
    %123 = math.tanh %122 : vector<16x128xf32>
    %cst_55 = arith.constant 5.000000e-01 : f32
    %124 = vector.broadcast %cst_55 : f32 to vector<16x128xf32>
    %125 = arith.mulf %124, %123 : vector<16x128xf32>
    %cst_56 = arith.constant 5.000000e-01 : f32
    %126 = vector.broadcast %cst_56 : f32 to vector<16x128xf32>
    %127 = arith.addf %125, %126 : vector<16x128xf32>
    %128 = vector.extract_strided_slice %111 {offsets = [0, 256], sizes = [16, 128], strides = [1, 1]} : vector<16x512xf32> to vector<16x128xf32>
    %129 = math.tanh %128 : vector<16x128xf32>
    %130 = vector.extract_strided_slice %111 {offsets = [0, 384], sizes = [16, 128], strides = [1, 1]} : vector<16x512xf32> to vector<16x128xf32>
    %cst_57 = arith.constant 5.000000e-01 : f32
    %131 = vector.broadcast %cst_57 : f32 to vector<16x128xf32>
    %132 = arith.mulf %131, %130 : vector<16x128xf32>
    %133 = math.tanh %132 : vector<16x128xf32>
    %cst_58 = arith.constant 5.000000e-01 : f32
    %134 = vector.broadcast %cst_58 : f32 to vector<16x128xf32>
    %135 = arith.mulf %134, %133 : vector<16x128xf32>
    %cst_59 = arith.constant 5.000000e-01 : f32
    %136 = vector.broadcast %cst_59 : f32 to vector<16x128xf32>
    %137 = arith.addf %135, %136 : vector<16x128xf32>
    %138 = arith.mulf %127, %94 : vector<16x128xf32>
    %139 = arith.mulf %119, %129 : vector<16x128xf32>
    %140 = arith.addf %138, %139 : vector<16x128xf32>
    %141 = math.tanh %140 : vector<16x128xf32>
    %142 = arith.mulf %137, %141 : vector<16x128xf32>
    %143 = arith.index_cast %102 : i32 to index
    %c0_60 = arith.constant 0 : index
    %c0_61 = arith.constant 0 : index
    %144 = vector.load %arg5[%143, %c0_60, %c0_61] : memref<8x16x128xf32, #tpu.memory_space<vmem>>, vector<1x16x128xf32>
    %145 = vector.shape_cast %144 : vector<1x16x128xf32> to vector<16x128xf32>
    %146 = vector.shape_cast %142 : vector<16x128xf32> to vector<1x16x128xf32>
    tpu.vector_store %arg5[%143, %c0_60, %c0_61], %146 {strides = array<i32>} : memref<8x16x128xf32, #tpu.memory_space<vmem>>, vector<1x16x128xf32>,
    %c3_i32 = arith.constant 3 : i32
    %147 = arith.muli %6, %c3_i32 : i32
    %148 = arith.addi %4, %147 : i32
    %149 = arith.truncf %142 : vector<16x128xf32> to vector<16x128xbf16>
    %c0_62 = arith.constant 0 : index
    %c0_63 = arith.constant 0 : index
    %c0_64 = arith.constant 0 : index
    %150 = vector.load %arg4[%c0_62, %c0_63, %c0_64] : memref<1x128x512xbf16, #tpu.memory_space<vmem>>, vector<1x128x512xbf16>
    %151 = vector.shape_cast %150 : vector<1x128x512xbf16> to vector<128x512xbf16>
    %cst_65 = arith.constant dense<0.000000e+00> : vector<16x512xf32>
    %152 = tpu.matmul %149, %151, %cst_65 {dimension_numbers = #tpu.dot_dimension_numbers<[1], [0], [0], [1], [0, 0, 1, 1], [], []>} : vector<16x128xbf16>, vector<128x512xbf16>, vector<16x512xf32> -> vector<16x512xf32>
    %c0_66 = arith.constant 0 : index
    %153 = arith.index_cast %148 : i32 to index
    %c0_67 = arith.constant 0 : index
    %c0_68 = arith.constant 0 : index
    %154 = vector.load %arg3[%c0_66, %153, %c0_67, %c0_68] : memref<1x8x16x512xbf16, #tpu.memory_space<vmem>>, vector<1x1x16x512xbf16>
    %155 = vector.shape_cast %154 : vector<1x1x16x512xbf16> to vector<16x512xbf16>
    %156 = arith.extf %155 : vector<16x512xbf16> to vector<16x512xf32>
    %157 = arith.addf %156, %152 : vector<16x512xf32>
    %158 = vector.extract_strided_slice %157 {offsets = [0, 0], sizes = [16, 128], strides = [1, 1]} : vector<16x512xf32> to vector<16x128xf32>
    %cst_69 = arith.constant 5.000000e-01 : f32
    %159 = vector.broadcast %cst_69 : f32 to vector<16x128xf32>
    %160 = arith.mulf %159, %158 : vector<16x128xf32>
    %161 = math.tanh %160 : vector<16x128xf32>
    %cst_70 = arith.constant 5.000000e-01 : f32
    %162 = vector.broadcast %cst_70 : f32 to vector<16x128xf32>
    %163 = arith.mulf %162, %161 : vector<16x128xf32>
    %cst_71 = arith.constant 5.000000e-01 : f32
    %164 = vector.broadcast %cst_71 : f32 to vector<16x128xf32>
    %165 = arith.addf %163, %164 : vector<16x128xf32>
    %166 = vector.extract_strided_slice %157 {offsets = [0, 128], sizes = [16, 128], strides = [1, 1]} : vector<16x512xf32> to vector<16x128xf32>
    %cst_72 = arith.constant 5.000000e-01 : f32
    %167 = vector.broadcast %cst_72 : f32 to vector<16x128xf32>
    %168 = arith.mulf %167, %166 : vector<16x128xf32>
    %169 = math.tanh %168 : vector<16x128xf32>
    %cst_73 = arith.constant 5.000000e-01 : f32
    %170 = vector.broadcast %cst_73 : f32 to vector<16x128xf32>
    %171 = arith.mulf %170, %169 : vector<16x128xf32>
    %cst_74 = arith.constant 5.000000e-01 : f32
    %172 = vector.broadcast %cst_74 : f32 to vector<16x128xf32>
    %173 = arith.addf %171, %172 : vector<16x128xf32>
    %174 = vector.extract_strided_slice %157 {offsets = [0, 256], sizes = [16, 128], strides = [1, 1]} : vector<16x512xf32> to vector<16x128xf32>
    %175 = math.tanh %174 : vector<16x128xf32>
    %176 = vector.extract_strided_slice %157 {offsets = [0, 384], sizes = [16, 128], strides = [1, 1]} : vector<16x512xf32> to vector<16x128xf32>
    %cst_75 = arith.constant 5.000000e-01 : f32
    %177 = vector.broadcast %cst_75 : f32 to vector<16x128xf32>
    %178 = arith.mulf %177, %176 : vector<16x128xf32>
    %179 = math.tanh %178 : vector<16x128xf32>
    %cst_76 = arith.constant 5.000000e-01 : f32
    %180 = vector.broadcast %cst_76 : f32 to vector<16x128xf32>
    %181 = arith.mulf %180, %179 : vector<16x128xf32>
    %cst_77 = arith.constant 5.000000e-01 : f32
    %182 = vector.broadcast %cst_77 : f32 to vector<16x128xf32>
    %183 = arith.addf %181, %182 : vector<16x128xf32>
    %184 = arith.mulf %173, %140 : vector<16x128xf32>
    %185 = arith.mulf %165, %175 : vector<16x128xf32>
    %186 = arith.addf %184, %185 : vector<16x128xf32>
    %187 = math.tanh %186 : vector<16x128xf32>
    %188 = arith.mulf %183, %187 : vector<16x128xf32>
    %189 = arith.index_cast %148 : i32 to index
    %c0_78 = arith.constant 0 : index
    %c0_79 = arith.constant 0 : index
    %190 = vector.load %arg5[%189, %c0_78, %c0_79] : memref<8x16x128xf32, #tpu.memory_space<vmem>>, vector<1x16x128xf32>
    %191 = vector.shape_cast %190 : vector<1x16x128xf32> to vector<16x128xf32>
    %192 = vector.shape_cast %188 : vector<16x128xf32> to vector<1x16x128xf32>
    tpu.vector_store %arg5[%189, %c0_78, %c0_79], %192 {strides = array<i32>} : memref<8x16x128xf32, #tpu.memory_space<vmem>>, vector<1x16x128xf32>,
    %c4_i32 = arith.constant 4 : i32
    %193 = arith.muli %6, %c4_i32 : i32
    %194 = arith.addi %4, %193 : i32
    %195 = arith.truncf %188 : vector<16x128xf32> to vector<16x128xbf16>
    %c0_80 = arith.constant 0 : index
    %c0_81 = arith.constant 0 : index
    %c0_82 = arith.constant 0 : index
    %196 = vector.load %arg4[%c0_80, %c0_81, %c0_82] : memref<1x128x512xbf16, #tpu.memory_space<vmem>>, vector<1x128x512xbf16>
    %197 = vector.shape_cast %196 : vector<1x128x512xbf16> to vector<128x512xbf16>
    %cst_83 = arith.constant dense<0.000000e+00> : vector<16x512xf32>
    %198 = tpu.matmul %195, %197, %cst_83 {dimension_numbers = #tpu.dot_dimension_numbers<[1], [0], [0], [1], [0, 0, 1, 1], [], []>} : vector<16x128xbf16>, vector<128x512xbf16>, vector<16x512xf32> -> vector<16x512xf32>
    %c0_84 = arith.constant 0 : index
    %199 = arith.index_cast %194 : i32 to index
    %c0_85 = arith.constant 0 : index
    %c0_86 = arith.constant 0 : index
    %200 = vector.load %arg3[%c0_84, %199, %c0_85, %c0_86] : memref<1x8x16x512xbf16, #tpu.memory_space<vmem>>, vector<1x1x16x512xbf16>
    %201 = vector.shape_cast %200 : vector<1x1x16x512xbf16> to vector<16x512xbf16>
    %202 = arith.extf %201 : vector<16x512xbf16> to vector<16x512xf32>
    %203 = arith.addf %202, %198 : vector<16x512xf32>
    %204 = vector.extract_strided_slice %203 {offsets = [0, 0], sizes = [16, 128], strides = [1, 1]} : vector<16x512xf32> to vector<16x128xf32>
    %cst_87 = arith.constant 5.000000e-01 : f32
    %205 = vector.broadcast %cst_87 : f32 to vector<16x128xf32>
    %206 = arith.mulf %205, %204 : vector<16x128xf32>
    %207 = math.tanh %206 : vector<16x128xf32>
    %cst_88 = arith.constant 5.000000e-01 : f32
    %208 = vector.broadcast %cst_88 : f32 to vector<16x128xf32>
    %209 = arith.mulf %208, %207 : vector<16x128xf32>
    %cst_89 = arith.constant 5.000000e-01 : f32
    %210 = vector.broadcast %cst_89 : f32 to vector<16x128xf32>
    %211 = arith.addf %209, %210 : vector<16x128xf32>
    %212 = vector.extract_strided_slice %203 {offsets = [0, 128], sizes = [16, 128], strides = [1, 1]} : vector<16x512xf32> to vector<16x128xf32>
    %cst_90 = arith.constant 5.000000e-01 : f32
    %213 = vector.broadcast %cst_90 : f32 to vector<16x128xf32>
    %214 = arith.mulf %213, %212 : vector<16x128xf32>
    %215 = math.tanh %214 : vector<16x128xf32>
    %cst_91 = arith.constant 5.000000e-01 : f32
    %216 = vector.broadcast %cst_91 : f32 to vector<16x128xf32>
    %217 = arith.mulf %216, %215 : vector<16x128xf32>
    %cst_92 = arith.constant 5.000000e-01 : f32
    %218 = vector.broadcast %cst_92 : f32 to vector<16x128xf32>
    %219 = arith.addf %217, %218 : vector<16x128xf32>
    %220 = vector.extract_strided_slice %203 {offsets = [0, 256], sizes = [16, 128], strides = [1, 1]} : vector<16x512xf32> to vector<16x128xf32>
    %221 = math.tanh %220 : vector<16x128xf32>
    %222 = vector.extract_strided_slice %203 {offsets = [0, 384], sizes = [16, 128], strides = [1, 1]} : vector<16x512xf32> to vector<16x128xf32>
    %cst_93 = arith.constant 5.000000e-01 : f32
    %223 = vector.broadcast %cst_93 : f32 to vector<16x128xf32>
    %224 = arith.mulf %223, %222 : vector<16x128xf32>
    %225 = math.tanh %224 : vector<16x128xf32>
    %cst_94 = arith.constant 5.000000e-01 : f32
    %226 = vector.broadcast %cst_94 : f32 to vector<16x128xf32>
    %227 = arith.mulf %226, %225 : vector<16x128xf32>
    %cst_95 = arith.constant 5.000000e-01 : f32
    %228 = vector.broadcast %cst_95 : f32 to vector<16x128xf32>
    %229 = arith.addf %227, %228 : vector<16x128xf32>
    %230 = arith.mulf %219, %186 : vector<16x128xf32>
    %231 = arith.mulf %211, %221 : vector<16x128xf32>
    %232 = arith.addf %230, %231 : vector<16x128xf32>
    %233 = math.tanh %232 : vector<16x128xf32>
    %234 = arith.mulf %229, %233 : vector<16x128xf32>
    %235 = arith.index_cast %194 : i32 to index
    %c0_96 = arith.constant 0 : index
    %c0_97 = arith.constant 0 : index
    %236 = vector.load %arg5[%235, %c0_96, %c0_97] : memref<8x16x128xf32, #tpu.memory_space<vmem>>, vector<1x16x128xf32>
    %237 = vector.shape_cast %236 : vector<1x16x128xf32> to vector<16x128xf32>
    %238 = vector.shape_cast %234 : vector<16x128xf32> to vector<1x16x128xf32>
    tpu.vector_store %arg5[%235, %c0_96, %c0_97], %238 {strides = array<i32>} : memref<8x16x128xf32, #tpu.memory_space<vmem>>, vector<1x16x128xf32>,
    %c5_i32 = arith.constant 5 : i32
    %239 = arith.muli %6, %c5_i32 : i32
    %240 = arith.addi %4, %239 : i32
    %241 = arith.truncf %234 : vector<16x128xf32> to vector<16x128xbf16>
    %c0_98 = arith.constant 0 : index
    %c0_99 = arith.constant 0 : index
    %c0_100 = arith.constant 0 : index
    %242 = vector.load %arg4[%c0_98, %c0_99, %c0_100] : memref<1x128x512xbf16, #tpu.memory_space<vmem>>, vector<1x128x512xbf16>
    %243 = vector.shape_cast %242 : vector<1x128x512xbf16> to vector<128x512xbf16>
    %cst_101 = arith.constant dense<0.000000e+00> : vector<16x512xf32>
    %244 = tpu.matmul %241, %243, %cst_101 {dimension_numbers = #tpu.dot_dimension_numbers<[1], [0], [0], [1], [0, 0, 1, 1], [], []>} : vector<16x128xbf16>, vector<128x512xbf16>, vector<16x512xf32> -> vector<16x512xf32>
    %c0_102 = arith.constant 0 : index
    %245 = arith.index_cast %240 : i32 to index
    %c0_103 = arith.constant 0 : index
    %c0_104 = arith.constant 0 : index
    %246 = vector.load %arg3[%c0_102, %245, %c0_103, %c0_104] : memref<1x8x16x512xbf16, #tpu.memory_space<vmem>>, vector<1x1x16x512xbf16>
    %247 = vector.shape_cast %246 : vector<1x1x16x512xbf16> to vector<16x512xbf16>
    %248 = arith.extf %247 : vector<16x512xbf16> to vector<16x512xf32>
    %249 = arith.addf %248, %244 : vector<16x512xf32>
    %250 = vector.extract_strided_slice %249 {offsets = [0, 0], sizes = [16, 128], strides = [1, 1]} : vector<16x512xf32> to vector<16x128xf32>
    %cst_105 = arith.constant 5.000000e-01 : f32
    %251 = vector.broadcast %cst_105 : f32 to vector<16x128xf32>
    %252 = arith.mulf %251, %250 : vector<16x128xf32>
    %253 = math.tanh %252 : vector<16x128xf32>
    %cst_106 = arith.constant 5.000000e-01 : f32
    %254 = vector.broadcast %cst_106 : f32 to vector<16x128xf32>
    %255 = arith.mulf %254, %253 : vector<16x128xf32>
    %cst_107 = arith.constant 5.000000e-01 : f32
    %256 = vector.broadcast %cst_107 : f32 to vector<16x128xf32>
    %257 = arith.addf %255, %256 : vector<16x128xf32>
    %258 = vector.extract_strided_slice %249 {offsets = [0, 128], sizes = [16, 128], strides = [1, 1]} : vector<16x512xf32> to vector<16x128xf32>
    %cst_108 = arith.constant 5.000000e-01 : f32
    %259 = vector.broadcast %cst_108 : f32 to vector<16x128xf32>
    %260 = arith.mulf %259, %258 : vector<16x128xf32>
    %261 = math.tanh %260 : vector<16x128xf32>
    %cst_109 = arith.constant 5.000000e-01 : f32
    %262 = vector.broadcast %cst_109 : f32 to vector<16x128xf32>
    %263 = arith.mulf %262, %261 : vector<16x128xf32>
    %cst_110 = arith.constant 5.000000e-01 : f32
    %264 = vector.broadcast %cst_110 : f32 to vector<16x128xf32>
    %265 = arith.addf %263, %264 : vector<16x128xf32>
    %266 = vector.extract_strided_slice %249 {offsets = [0, 256], sizes = [16, 128], strides = [1, 1]} : vector<16x512xf32> to vector<16x128xf32>
    %267 = math.tanh %266 : vector<16x128xf32>
    %268 = vector.extract_strided_slice %249 {offsets = [0, 384], sizes = [16, 128], strides = [1, 1]} : vector<16x512xf32> to vector<16x128xf32>
    %cst_111 = arith.constant 5.000000e-01 : f32
    %269 = vector.broadcast %cst_111 : f32 to vector<16x128xf32>
    %270 = arith.mulf %269, %268 : vector<16x128xf32>
    %271 = math.tanh %270 : vector<16x128xf32>
    %cst_112 = arith.constant 5.000000e-01 : f32
    %272 = vector.broadcast %cst_112 : f32 to vector<16x128xf32>
    %273 = arith.mulf %272, %271 : vector<16x128xf32>
    %cst_113 = arith.constant 5.000000e-01 : f32
    %274 = vector.broadcast %cst_113 : f32 to vector<16x128xf32>
    %275 = arith.addf %273, %274 : vector<16x128xf32>
    %276 = arith.mulf %265, %232 : vector<16x128xf32>
    %277 = arith.mulf %257, %267 : vector<16x128xf32>
    %278 = arith.addf %276, %277 : vector<16x128xf32>
    %279 = math.tanh %278 : vector<16x128xf32>
    %280 = arith.mulf %275, %279 : vector<16x128xf32>
    %281 = arith.index_cast %240 : i32 to index
    %c0_114 = arith.constant 0 : index
    %c0_115 = arith.constant 0 : index
    %282 = vector.load %arg5[%281, %c0_114, %c0_115] : memref<8x16x128xf32, #tpu.memory_space<vmem>>, vector<1x16x128xf32>
    %283 = vector.shape_cast %282 : vector<1x16x128xf32> to vector<16x128xf32>
    %284 = vector.shape_cast %280 : vector<16x128xf32> to vector<1x16x128xf32>
    tpu.vector_store %arg5[%281, %c0_114, %c0_115], %284 {strides = array<i32>} : memref<8x16x128xf32, #tpu.memory_space<vmem>>, vector<1x16x128xf32>,
    %c6_i32 = arith.constant 6 : i32
    %285 = arith.muli %6, %c6_i32 : i32
    %286 = arith.addi %4, %285 : i32
    %287 = arith.truncf %280 : vector<16x128xf32> to vector<16x128xbf16>
    %c0_116 = arith.constant 0 : index
    %c0_117 = arith.constant 0 : index
    %c0_118 = arith.constant 0 : index
    %288 = vector.load %arg4[%c0_116, %c0_117, %c0_118] : memref<1x128x512xbf16, #tpu.memory_space<vmem>>, vector<1x128x512xbf16>
    %289 = vector.shape_cast %288 : vector<1x128x512xbf16> to vector<128x512xbf16>
    %cst_119 = arith.constant dense<0.000000e+00> : vector<16x512xf32>
    %290 = tpu.matmul %287, %289, %cst_119 {dimension_numbers = #tpu.dot_dimension_numbers<[1], [0], [0], [1], [0, 0, 1, 1], [], []>} : vector<16x128xbf16>, vector<128x512xbf16>, vector<16x512xf32> -> vector<16x512xf32>
    %c0_120 = arith.constant 0 : index
    %291 = arith.index_cast %286 : i32 to index
    %c0_121 = arith.constant 0 : index
    %c0_122 = arith.constant 0 : index
    %292 = vector.load %arg3[%c0_120, %291, %c0_121, %c0_122] : memref<1x8x16x512xbf16, #tpu.memory_space<vmem>>, vector<1x1x16x512xbf16>
    %293 = vector.shape_cast %292 : vector<1x1x16x512xbf16> to vector<16x512xbf16>
    %294 = arith.extf %293 : vector<16x512xbf16> to vector<16x512xf32>
    %295 = arith.addf %294, %290 : vector<16x512xf32>
    %296 = vector.extract_strided_slice %295 {offsets = [0, 0], sizes = [16, 128], strides = [1, 1]} : vector<16x512xf32> to vector<16x128xf32>
    %cst_123 = arith.constant 5.000000e-01 : f32
    %297 = vector.broadcast %cst_123 : f32 to vector<16x128xf32>
    %298 = arith.mulf %297, %296 : vector<16x128xf32>
    %299 = math.tanh %298 : vector<16x128xf32>
    %cst_124 = arith.constant 5.000000e-01 : f32
    %300 = vector.broadcast %cst_124 : f32 to vector<16x128xf32>
    %301 = arith.mulf %300, %299 : vector<16x128xf32>
    %cst_125 = arith.constant 5.000000e-01 : f32
    %302 = vector.broadcast %cst_125 : f32 to vector<16x128xf32>
    %303 = arith.addf %301, %302 : vector<16x128xf32>
    %304 = vector.extract_strided_slice %295 {offsets = [0, 128], sizes = [16, 128], strides = [1, 1]} : vector<16x512xf32> to vector<16x128xf32>
    %cst_126 = arith.constant 5.000000e-01 : f32
    %305 = vector.broadcast %cst_126 : f32 to vector<16x128xf32>
    %306 = arith.mulf %305, %304 : vector<16x128xf32>
    %307 = math.tanh %306 : vector<16x128xf32>
    %cst_127 = arith.constant 5.000000e-01 : f32
    %308 = vector.broadcast %cst_127 : f32 to vector<16x128xf32>
    %309 = arith.mulf %308, %307 : vector<16x128xf32>
    %cst_128 = arith.constant 5.000000e-01 : f32
    %310 = vector.broadcast %cst_128 : f32 to vector<16x128xf32>
    %311 = arith.addf %309, %310 : vector<16x128xf32>
    %312 = vector.extract_strided_slice %295 {offsets = [0, 256], sizes = [16, 128], strides = [1, 1]} : vector<16x512xf32> to vector<16x128xf32>
    %313 = math.tanh %312 : vector<16x128xf32>
    %314 = vector.extract_strided_slice %295 {offsets = [0, 384], sizes = [16, 128], strides = [1, 1]} : vector<16x512xf32> to vector<16x128xf32>
    %cst_129 = arith.constant 5.000000e-01 : f32
    %315 = vector.broadcast %cst_129 : f32 to vector<16x128xf32>
    %316 = arith.mulf %315, %314 : vector<16x128xf32>
    %317 = math.tanh %316 : vector<16x128xf32>
    %cst_130 = arith.constant 5.000000e-01 : f32
    %318 = vector.broadcast %cst_130 : f32 to vector<16x128xf32>
    %319 = arith.mulf %318, %317 : vector<16x128xf32>
    %cst_131 = arith.constant 5.000000e-01 : f32
    %320 = vector.broadcast %cst_131 : f32 to vector<16x128xf32>
    %321 = arith.addf %319, %320 : vector<16x128xf32>
    %322 = arith.mulf %311, %278 : vector<16x128xf32>
    %323 = arith.mulf %303, %313 : vector<16x128xf32>
    %324 = arith.addf %322, %323 : vector<16x128xf32>
    %325 = math.tanh %324 : vector<16x128xf32>
    %326 = arith.mulf %321, %325 : vector<16x128xf32>
    %327 = arith.index_cast %286 : i32 to index
    %c0_132 = arith.constant 0 : index
    %c0_133 = arith.constant 0 : index
    %328 = vector.load %arg5[%327, %c0_132, %c0_133] : memref<8x16x128xf32, #tpu.memory_space<vmem>>, vector<1x16x128xf32>
    %329 = vector.shape_cast %328 : vector<1x16x128xf32> to vector<16x128xf32>
    %330 = vector.shape_cast %326 : vector<16x128xf32> to vector<1x16x128xf32>
    tpu.vector_store %arg5[%327, %c0_132, %c0_133], %330 {strides = array<i32>} : memref<8x16x128xf32, #tpu.memory_space<vmem>>, vector<1x16x128xf32>,
    %c7_i32_134 = arith.constant 7 : i32
    %331 = arith.muli %6, %c7_i32_134 : i32
    %332 = arith.addi %4, %331 : i32
    %333 = arith.truncf %326 : vector<16x128xf32> to vector<16x128xbf16>
    %c0_135 = arith.constant 0 : index
    %c0_136 = arith.constant 0 : index
    %c0_137 = arith.constant 0 : index
    %334 = vector.load %arg4[%c0_135, %c0_136, %c0_137] : memref<1x128x512xbf16, #tpu.memory_space<vmem>>, vector<1x128x512xbf16>
    %335 = vector.shape_cast %334 : vector<1x128x512xbf16> to vector<128x512xbf16>
    %cst_138 = arith.constant dense<0.000000e+00> : vector<16x512xf32>
    %336 = tpu.matmul %333, %335, %cst_138 {dimension_numbers = #tpu.dot_dimension_numbers<[1], [0], [0], [1], [0, 0, 1, 1], [], []>} : vector<16x128xbf16>, vector<128x512xbf16>, vector<16x512xf32> -> vector<16x512xf32>
    %c0_139 = arith.constant 0 : index
    %337 = arith.index_cast %332 : i32 to index
    %c0_140 = arith.constant 0 : index
    %c0_141 = arith.constant 0 : index
    %338 = vector.load %arg3[%c0_139, %337, %c0_140, %c0_141] : memref<1x8x16x512xbf16, #tpu.memory_space<vmem>>, vector<1x1x16x512xbf16>
    %339 = vector.shape_cast %338 : vector<1x1x16x512xbf16> to vector<16x512xbf16>
    %340 = arith.extf %339 : vector<16x512xbf16> to vector<16x512xf32>
    %341 = arith.addf %340, %336 : vector<16x512xf32>
    %342 = vector.extract_strided_slice %341 {offsets = [0, 0], sizes = [16, 128], strides = [1, 1]} : vector<16x512xf32> to vector<16x128xf32>
    %cst_142 = arith.constant 5.000000e-01 : f32
    %343 = vector.broadcast %cst_142 : f32 to vector<16x128xf32>
    %344 = arith.mulf %343, %342 : vector<16x128xf32>
    %345 = math.tanh %344 : vector<16x128xf32>
    %cst_143 = arith.constant 5.000000e-01 : f32
    %346 = vector.broadcast %cst_143 : f32 to vector<16x128xf32>
    %347 = arith.mulf %346, %345 : vector<16x128xf32>
    %cst_144 = arith.constant 5.000000e-01 : f32
    %348 = vector.broadcast %cst_144 : f32 to vector<16x128xf32>
    %349 = arith.addf %347, %348 : vector<16x128xf32>
    %350 = vector.extract_strided_slice %341 {offsets = [0, 128], sizes = [16, 128], strides = [1, 1]} : vector<16x512xf32> to vector<16x128xf32>
    %cst_145 = arith.constant 5.000000e-01 : f32
    %351 = vector.broadcast %cst_145 : f32 to vector<16x128xf32>
    %352 = arith.mulf %351, %350 : vector<16x128xf32>
    %353 = math.tanh %352 : vector<16x128xf32>
    %cst_146 = arith.constant 5.000000e-01 : f32
    %354 = vector.broadcast %cst_146 : f32 to vector<16x128xf32>
    %355 = arith.mulf %354, %353 : vector<16x128xf32>
    %cst_147 = arith.constant 5.000000e-01 : f32
    %356 = vector.broadcast %cst_147 : f32 to vector<16x128xf32>
    %357 = arith.addf %355, %356 : vector<16x128xf32>
    %358 = vector.extract_strided_slice %341 {offsets = [0, 256], sizes = [16, 128], strides = [1, 1]} : vector<16x512xf32> to vector<16x128xf32>
    %359 = math.tanh %358 : vector<16x128xf32>
    %360 = vector.extract_strided_slice %341 {offsets = [0, 384], sizes = [16, 128], strides = [1, 1]} : vector<16x512xf32> to vector<16x128xf32>
    %cst_148 = arith.constant 5.000000e-01 : f32
    %361 = vector.broadcast %cst_148 : f32 to vector<16x128xf32>
    %362 = arith.mulf %361, %360 : vector<16x128xf32>
    %363 = math.tanh %362 : vector<16x128xf32>
    %cst_149 = arith.constant 5.000000e-01 : f32
    %364 = vector.broadcast %cst_149 : f32 to vector<16x128xf32>
    %365 = arith.mulf %364, %363 : vector<16x128xf32>
    %cst_150 = arith.constant 5.000000e-01 : f32
    %366 = vector.broadcast %cst_150 : f32 to vector<16x128xf32>
    %367 = arith.addf %365, %366 : vector<16x128xf32>
    %368 = arith.mulf %357, %324 : vector<16x128xf32>
    %369 = arith.mulf %349, %359 : vector<16x128xf32>
    %370 = arith.addf %368, %369 : vector<16x128xf32>
    %371 = math.tanh %370 : vector<16x128xf32>
    %372 = arith.mulf %367, %371 : vector<16x128xf32>
    %373 = arith.index_cast %332 : i32 to index
    %c0_151 = arith.constant 0 : index
    %c0_152 = arith.constant 0 : index
    %374 = vector.load %arg5[%373, %c0_151, %c0_152] : memref<8x16x128xf32, #tpu.memory_space<vmem>>, vector<1x16x128xf32>
    %375 = vector.shape_cast %374 : vector<1x16x128xf32> to vector<16x128xf32>
    %376 = vector.shape_cast %372 : vector<16x128xf32> to vector<1x16x128xf32>
    tpu.vector_store %arg5[%373, %c0_151, %c0_152], %376 {strides = array<i32>} : memref<8x16x128xf32, #tpu.memory_space<vmem>>, vector<1x16x128xf32>,
    %c8_i32 = arith.constant 8 : i32
    %c0_153 = arith.constant 0 : index
    %c0_154 = arith.constant 0 : index
    %377 = vector.load %arg6[%c0_153, %c0_154] : memref<16x128xf32, #tpu.memory_space<vmem>>, vector<16x128xf32>
    tpu.vector_store %arg6[%c0_153, %c0_154], %372 {strides = array<i32>} : memref<16x128xf32, #tpu.memory_space<vmem>>, vector<16x128xf32>,
    %c0_155 = arith.constant 0 : index
    %c0_156 = arith.constant 0 : index
    %378 = vector.load %arg7[%c0_155, %c0_156] : memref<16x128xf32, #tpu.memory_space<vmem>>, vector<16x128xf32>
    tpu.vector_store %arg7[%c0_155, %c0_156], %370 {strides = array<i32>} : memref<16x128xf32, #tpu.memory_space<vmem>>, vector<16x128xf32>,
    return
  }
  func.func @transform_0(%arg0: i32, %arg1: i32, %arg2: i32) -> (i32, i32, i32, i32) {
    %c1_i32 = arith.constant 1 : i32
    %0 = arith.subi %c1_i32, %arg0 : i32
    %1 = arith.muli %0, %arg2 : i32
    %c0_i32 = arith.constant 0 : i32
    %2 = arith.subi %c0_i32, %arg2 : i32
    %3 = arith.muli %arg0, %2 : i32
    %4 = arith.addi %1, %3 : i32
    %c0_i32_0 = arith.constant 0 : i32
    %c0_i32_1 = arith.constant 0 : i32
    return %arg0, %4, %arg1, %c0_i32_0 : i32, i32, i32, i32
  }
  func.func @transform_1(%arg0: i32, %arg1: i32, %arg2: i32) -> (i32, i32, i32) {
    %c0_i32 = arith.constant 0 : i32
    %c0_i32_0 = arith.constant 0 : i32
    %c0_i32_1 = arith.constant 0 : i32
    return %arg0, %c0_i32, %c0_i32_0 : i32, i32, i32
  }
  func.func @transform_2(%arg0: i32, %arg1: i32, %arg2: i32) -> (i32, i32, i32) {
    %c1_i32 = arith.constant 1 : i32
    %0 = arith.subi %c1_i32, %arg0 : i32
    %1 = arith.muli %0, %arg2 : i32
    %c0_i32 = arith.constant 0 : i32
    %2 = arith.subi %c0_i32, %arg2 : i32
    %3 = arith.muli %arg0, %2 : i32
    %4 = arith.addi %1, %3 : i32
    %c0_i32_0 = arith.constant 0 : i32
    return %4, %arg1, %arg0 : i32, i32, i32
  }
}

</mosaic_0001>

<llo_original>
// kernel: encoder_forward.3
$region0: #{encoder_forward.3}
  #allocation0 [shape = 'u32[]', space=smem, size = 0x4, offset = 0x4, fixed_abs, tag = 'smem constant byte address 0x4 - core index']
  #allocation1 [shape = 'u32[72,128]{1,0:T(1,128)}', space=vmem, size = 0x9000, scoped, tag = 'internal scratch']
  #allocation2 [shape = 'f32[16,128]{1,0:T(8,128)}', space=vmem, size = 0x2000, scoped, tag = 'scratch operand']
  #allocation3 [shape = 'f32[16,128]{1,0:T(8,128)}', space=vmem, size = 0x2000, scoped, tag = 'scratch operand']
  %s0 = inlined_call_operand.vmem [shape: bf16[2,8,16,512], index: 0, kind: input, shape index: {}]
  %s1 = inlined_call_operand.vmem [shape: bf16[2,128,512], index: 1, kind: input, shape index: {}]
  %s2 = inlined_call_operand.vmem [shape: f32[8,16,256], index: 2, kind: output, shape index: {}]
  %s3 = sld [smem:[#allocation0]]
  $region79: #{encoder_forward.3} parent=0
    _
  %s5 = ssub.s32 1, %s3
  %s6 = scalar_select 0, %s5, %s3
  $region1: #{encoder_forward.3} parent=0
    #allocation4 [shape = 'u8[131072]{0}', space=vmem, size = 0x20000, scoped, tag = 'output window, operand 0']
    loop: start=0, step=1, limit=4
    $region2: #{encoder_forward.3} parent=1 // loop_pre_header
      _
    $region3: #{encoder_forward.3} parent=1 // loop_header
      %s8 = sphi 0, %s12
      %p9 = scmp.ge.s32.totalorder %s8, 4
      %s15 = sphi 0, %s34
      %s16 = sphi 0, %s30
      %s17 = sphi 0, %s26
      %s18 = sphi 0, %s15
      %s19 = sphi 0, %s16
      %s20 = sphi 0, %s17
      %s21 = sphi 0, %s18
      %s22 = sphi 0, %s19
      %s23 = sphi 0, %s20
      %s51 = sphi 0, %s53
      %s54 = sphi 0, %s51
      %s55 = sphi 0, %s54
      %s71 = sphi 0, %s55
      %s77 = sphi 0, %s79
      %s80 = sphi 0, %s77
      %s81 = sphi 0, %s80
      %s97 = sphi 0, %s81
      %s117 = sphi 0, %s119
      %s120 = sphi 0, %s117
      %s121 = sphi 0, %s120
      %s137 = sphi 0, %s121
    $region4: #{encoder_forward.3} parent=1 // loop_header_branch
      %11 = sbr.rel (%p9) target = $region8
    $region5: #{encoder_forward.3} parent=1 // loop_body
      %s13 = ssub.s32 %s8, 1
      %s14 = ssub.s32 %s8, 2
      %s24 = sadd.s32 1, %s17
      %p25 = scmp.ge.s32.totalorder %s24, 1
      %s26 = scalar_select %p25, 0, %s24
      %s27 = sadd.s32 1, %s16
      %s28 = scalar_select %p25, %s27, %s16
      %p29 = scmp.ge.s32.totalorder %s28, 1
      %s30 = scalar_select %p29, 0, %s28
      %s31 = sadd.s32 1, %s15
      %s32 = scalar_select %p29, %s31, %s15
      %p33 = scmp.ge.s32.totalorder %s32, 2
      %s34 = scalar_select %p33, 0, %s32
      %s35 = ssub.s32 1, %s15
      %s36 = smul.u32 %s35, %s17
      %s37 = ssub.s32 0, %s17
      %s38 = smul.u32 %s15, %s37
      %s39 = sadd.s32 %s36, %s38
      %s40 = ssub.s32 1, %s34
      %s41 = smul.u32 %s40, %s26
      %s42 = ssub.s32 0, %s26
      %s43 = smul.u32 %s34, %s42
      %s44 = sadd.s32 %s41, %s43
      %s45 = ssub.s32 %s15, %s34
      %s46 = ssub.s32 %s39, %s44
      %s47 = sor.u32 %s45, %s46
      %s48 = ssub.s32 %s16, %s30
      %s49 = sor.u32 %s47, %s48
      %p50 = scmp.eq.s32.totalorder %s49, 0
      %s52 = sadd.s32 %s51, 1
      %s53 = scalar_select %p50, %s51, %s52
      %p56 = pneg %p50
      %p57 = scmp.eq.s32.totalorder %s8, 1
      %p58 = por %p56, %p57
      %p59 = scmp.ne.s32.totalorder %s51, %s54
      %p60 = scmp.eq.s32.totalorder %s8, 0
      %p61 = por %p59, %p60
      %p62 = scmp.ne.s32.totalorder %s51, %s54
      %p63 = scmp.eq.s32.totalorder %s13, 1
      %p64 = por %p62, %p63
      %p65 = scmp.ne.s32.totalorder %s54, %s55
      %p66 = scmp.eq.s32.totalorder %s13, 0
      %p67 = por %p65, %p66
      %p68 = scmp.ne.s32.totalorder %s54, %s55
      %p69 = scmp.eq.s32.totalorder %s14, 1
      %p70 = por %p68, %p69
      %p72 = scmp.ne.s32.totalorder %s55, %s71
      %p73 = scmp.eq.s32.totalorder %s14, 0
      %p74 = por %p72, %p73
      %s75 = ssub.s32 %s15, %s34
      %p76 = scmp.eq.s32.totalorder %s75, 0
      %s78 = sadd.s32 %s77, 1
      %s79 = scalar_select %p76, %s77, %s78
      %p82 = pneg %p76
      %p83 = scmp.eq.s32.totalorder %s8, 1
      %p84 = por %p82, %p83
      %p85 = scmp.ne.s32.totalorder %s77, %s80
      %p86 = scmp.eq.s32.totalorder %s8, 0
      %p87 = por %p85, %p86
      %p88 = scmp.ne.s32.totalorder %s77, %s80
      %p89 = scmp.eq.s32.totalorder %s13, 1
      %p90 = por %p88, %p89
      %p91 = scmp.ne.s32.totalorder %s80, %s81
      %p92 = scmp.eq.s32.totalorder %s13, 0
      %p93 = por %p91, %p92
      %p94 = scmp.ne.s32.totalorder %s80, %s81
      %p95 = scmp.eq.s32.totalorder %s14, 1
      %p96 = por %p94, %p95
      %p98 = scmp.ne.s32.totalorder %s81, %s97
      %p99 = scmp.eq.s32.totalorder %s14, 0
      %p100 = por %p98, %p99
      %s101 = ssub.s32 1, %s15
      %s102 = smul.u32 %s101, %s17
      %s103 = ssub.s32 0, %s17
      %s104 = smul.u32 %s15, %s103
      %s105 = sadd.s32 %s102, %s104
      %s106 = ssub.s32 1, %s34
      %s107 = smul.u32 %s106, %s26
      %s108 = ssub.s32 0, %s26
      %s109 = smul.u32 %s34, %s108
      %s110 = sadd.s32 %s107, %s109
      %s111 = ssub.s32 %s105, %s110
      %s112 = ssub.s32 %s16, %s30
      %s113 = sor.u32 %s111, %s112
      %s114 = ssub.s32 %s15, %s34
      %s115 = sor.u32 %s113, %s114
      %p116 = scmp.eq.s32.totalorder %s115, 0
      %s118 = sadd.s32 %s117, 1
      %s119 = scalar_select %p116, %s117, %s118
      %p122 = pneg %p116
      %p123 = scmp.eq.s32.totalorder %s8, 1
      %p124 = por %p122, %p123
      %p125 = scmp.ne.s32.totalorder %s117, %s120
      %p126 = scmp.eq.s32.totalorder %s8, 0
      %p127 = por %p125, %p126
      %p128 = scmp.ne.s32.totalorder %s117, %s120
      %p129 = scmp.eq.s32.totalorder %s13, 1
      %p130 = por %p128, %p129
      %p131 = scmp.ne.s32.totalorder %s120, %s121
      %p132 = scmp.eq.s32.totalorder %s13, 0
      %p133 = por %p131, %p132
      %p134 = scmp.ne.s32.totalorder %s120, %s121
      %p135 = scmp.eq.s32.totalorder %s14, 1
      %p136 = por %p134, %p135
      %p138 = scmp.ne.s32.totalorder %s121, %s137
      %p139 = scmp.eq.s32.totalorder %s14, 0
      %p140 = por %p138, %p139
      %p141 = scmp.le.s32.totalorder 1, %s8
      %p142 = scmp.lt.s32.totalorder %s8, 3
      %p143 = pnand %p141, %p142
      %p144 = pneg %p143
      // Predicated region
      $region9: #{encoder_forward.3} parent=5 // pred_check
        _
      $region10: #{encoder_forward.3} parent=5 // pred_check_branch
        %146 = sbr.rel (%p143) target = $region12
      $region11: #{encoder_forward.3} parent=5 // pred_region
        %s147 = ssub.s32 %s8, 1
      $region12: #{encoder_forward.3} parent=5 // pred_fallthru
        _
      %p148 = scmp.lt.s32.totalorder %s8, 2
      // Predicated region
      $region13: #{encoder_forward.3} parent=5 // pred_check
        %p149 = pneg %p148
      $region14: #{encoder_forward.3} parent=5 // pred_check_branch
        %151 = sbr.rel (%p149) target = $region16
      $region15: #{encoder_forward.3} parent=5 // pred_region
        // Predicated region
        $region17: #{encoder_forward.3} parent=15 // pred_check
          %p152 = pneg %p61
        $region18: #{encoder_forward.3} parent=15 // pred_check_branch
          %154 = sbr.rel (%p152) target = $region20
        $region19: #{encoder_forward.3} parent=15 // pred_region
          %s155 = ssub.s32 1, %s15
          %s156 = smul.u32 %s155, %s17
          %s157 = ssub.s32 0, %s17
          %s158 = smul.u32 %s15, %s157
          %s159 = sadd.s32 %s156, %s158
          %s160 = smul.u32 8, %s159
          %s161 = smul.u32 2, %s16
          %p162 = scmp.lt.s32.totalorder %s15, 1
          %s163 = scalar_select %p162, %s15, 1
          %p164 = scmp.lt.s32.totalorder %s160, 7
          %s165 = scalar_select %p164, %s160, 7
          %p166 = scmp.lt.s32.totalorder %s161, 1
          %s167 = scalar_select %p166, %s161, 1
          %s168 = smul.addr %s167, 4
          %s169 = smul.addr %s165, 8
          %s170 = sadd.s32 %s168, %s169
          %s171 = smul.addr %s163, 64
          %s172 = sadd.s32 %s170, %s171
          %s173 = smul.addr %s172, 4
          %s174 = scalar_lea.vmem %s0, %s173
          %s175 = ssub.s32 1, %s15
          %s176 = smul.u32 %s175, %s17
          %s177 = ssub.s32 0, %s17
          %s178 = smul.u32 %s15, %s177
          %s179 = sadd.s32 %s176, %s178
          %s180 = smul.u32 8, %s179
          %s181 = smul.u32 2, %s16
        $region20: #{encoder_forward.3} parent=15 // pred_fallthru
          _
        // Predicated region
        $region21: #{encoder_forward.3} parent=15 // pred_check
          %p182 = pneg %p87
        $region22: #{encoder_forward.3} parent=15 // pred_check_branch
          %184 = sbr.rel (%p182) target = $region24
        $region23: #{encoder_forward.3} parent=15 // pred_region
          %p185 = scmp.lt.s32.totalorder %s15, 1
          %s186 = scalar_select %p185, %s15, 1
          %s187 = smul.addr %s186, 64
          %s188 = smul.addr %s187, 4
          %s189 = scalar_lea.vmem %s1, %s188
        $region24: #{encoder_forward.3} parent=15 // pred_fallthru
          _
      $region16: #{encoder_forward.3} parent=5 // pred_fallthru
        _
      %p190 = scmp.le.s32.totalorder 1, %s8
      %p191 = scmp.lt.s32.totalorder %s8, 3
      %p192 = pnand %p190, %p191
      %p193 = pneg %p192
      // Predicated region
      $region25: #{encoder_forward.3} parent=5 // pred_check
        _
      $region26: #{encoder_forward.3} parent=5 // pred_check_branch
        %195 = sbr.rel (%p192) target = $region28
      $region27: #{encoder_forward.3} parent=5 // pred_region
        %s196 = ssub.s32 %s8, 1
        %s197 = ssub.s32 1, %s18
        %s198 = smul.u32 %s197, %s20
        %s199 = ssub.s32 0, %s20
        %s200 = smul.u32 %s18, %s199
        %s201 = sadd.s32 %s198, %s200
        %s202 = smul.u32 8, %s201
        %s203 = smul.u32 2, %s19
        %p204 = scmp.lt.s32.totalorder %s18, 1
        %s205 = scalar_select %p204, %s18, 1
        %p206 = scmp.lt.s32.totalorder %s202, 7
        %s207 = scalar_select %p206, %s202, 7
        %p208 = scmp.lt.s32.totalorder %s203, 1
        %s209 = scalar_select %p208, %s203, 1
        %s210 = smul.addr %s209, 4
        %s211 = smul.addr %s207, 8
        %s212 = sadd.s32 %s210, %s211
        %s213 = smul.addr %s205, 64
        %s214 = sadd.s32 %s212, %s213
        %s215 = smul.addr %s214, 4
        %s216 = scalar_lea.vmem %s0, %s215
        %p217 = pneg %p67
        %p218 = pneg %p64
        %p219 = scmp.lt.s32.totalorder %s18, 1
        %s220 = scalar_select %p219, %s18, 1
        %s221 = smul.addr %s220, 64
        %s222 = smul.addr %s221, 4
        %s223 = scalar_lea.vmem %s1, %s222
        %p224 = pneg %p93
        %p225 = pneg %p90
        %p226 = pneg %p133
        %p227 = pneg %p130
        %s228 = sand.u32 %s120, 1
        %s229 = sand.u32 %s120, 1
        %s230 = smul.addr %s229, 128
        %s231 = scalar_lea.vmem [#allocation4], %s230
        %s232 = ssub.s32 1, %s18
        %s233 = smul.u32 %s232, %s20
        %s234 = ssub.s32 0, %s20
        %s235 = smul.u32 %s18, %s234
        %s236 = sadd.s32 %s233, %s235
        %s237 = smul.u32 8, %s236
        %s238 = smul.u32 2, %s19
        %p239 = scmp.lt.s32.totalorder %s18, 1
        %s240 = scalar_select %p239, %s18, 1
        %p241 = scmp.lt.s32.totalorder %s237, 7
        %s242 = scalar_select %p241, %s237, 7
        %p243 = scmp.lt.s32.totalorder %s238, 1
        %s244 = scalar_select %p243, %s238, 1
        %s245 = smul.addr %s244, 4
        %s246 = smul.addr %s242, 8
        %s247 = sadd.s32 %s245, %s246
        %s248 = smul.addr %s240, 64
        %s249 = sadd.s32 %s247, %s248
        %s250 = smul.addr %s249, 4
        %s251 = scalar_lea.vmem %s0, %s250
        %s252 = ssub.s32 1, %s18
        %s253 = smul.u32 %s252, %s20
        %s254 = ssub.s32 0, %s20
        %s255 = smul.u32 %s18, %s254
        %s256 = sadd.s32 %s253, %s255
        %s257 = smul.u32 8, %s256
        %s258 = smul.u32 2, %s19
        %p259 = scmp.lt.s32.totalorder %s18, 1
        %s260 = scalar_select %p259, %s18, 1
        %s261 = smul.addr %s260, 64
        %s262 = smul.addr %s261, 4
        %s263 = scalar_lea.vmem %s1, %s262
        %s264 = ssub.s32 1, %s18
        %s265 = smul.u32 %s264, %s20
        %s266 = ssub.s32 0, %s20
        %s267 = smul.u32 %s18, %s266
        %s268 = sadd.s32 %s265, %s267
        %s269 = smul.u32 8, %s268
        %s270 = smul.u32 2, %s19
        %p271 = scmp.eq.s32.totalorder %s20, 0
        // Predicated region
        $region29: #{encoder_forward.3} parent=27 // pred_check
          %p272 = pneg %p271
        $region30: #{encoder_forward.3} parent=27 // pred_check_branch
          %274 = sbr.rel (%p272) target = $region32
        $region31: #{encoder_forward.3} parent=27 // pred_region
          %275 = vst [vmem:[#allocation2] sm:$0xff] 0.0
          %276 = vst [vmem:[#allocation2 + $0x8] sm:$0xff] 0.0
          %277 = vst [vmem:[#allocation3] sm:$0xff] 0.0
          %278 = vst [vmem:[#allocation3 + $0x8] sm:$0xff] 0.0
        $region32: #{encoder_forward.3} parent=27 // pred_fallthru
          _
        %p279 = scmp.eq.s32.totalorder %s18, 0
        %s280 = scalar_select %p279, 0, 7
        %s281 = scalar_select %p279, 1, 4294967295
        %v282 = vld [vmem:[#allocation2] sm:$0xff]
        %v283 = vld [vmem:[#allocation2 + $0x8] sm:$0xff]
        %v284 = vld [vmem:[#allocation3] sm:$0xff]
        %v285 = vld [vmem:[#allocation3 + $0x8] sm:$0xff]
        %v286 = vpack.c.bf16 %v283, %v282
        %v287 = vld [vmem:[%s263] sm:$0xff]
        %v288 = vld [vmem:[%s263 + $0x8] sm:$0xff]
        %v289 = vld [vmem:[%s263 + $0x10] sm:$0xff]
        %v290 = vld [vmem:[%s263 + $0x18] sm:$0xff]
        %v291 = vld [vmem:[%s263 + $0x20] sm:$0xff]
        %v292 = vld [vmem:[%s263 + $0x28] sm:$0xff]
        %v293 = vld [vmem:[%s263 + $0x30] sm:$0xff]
        %v294 = vld [vmem:[%s263 + $0x38] sm:$0xff]
        %v295 = vld [vmem:[%s263 + $0x40] sm:$0xff]
        %v296 = vld [vmem:[%s263 + $0x48] sm:$0xff]
        %v297 = vld [vmem:[%s263 + $0x50] sm:$0xff]
        %v298 = vld [vmem:[%s263 + $0x58] sm:$0xff]
        %v299 = vld [vmem:[%s263 + $0x60] sm:$0xff]
        %v300 = vld [vmem:[%s263 + $0x68] sm:$0xff]
        %v301 = vld [vmem:[%s263 + $0x70] sm:$0xff]
        %v302 = vld [vmem:[%s263 + $0x78] sm:$0xff]
        %v303 = vld [vmem:[%s263 + $0x80] sm:$0xff]
        %v304 = vld [vmem:[%s263 + $0x88] sm:$0xff]
        %v305 = vld [vmem:[%s263 + $0x90] sm:$0xff]
        %v306 = vld [vmem:[%s263 + $0x98] sm:$0xff]
        %v307 = vld [vmem:[%s263 + $0xa0] sm:$0xff]
        %v308 = vld [vmem:[%s263 + $0xa8] sm:$0xff]
        %v309 = vld [vmem:[%s263 + $0xb0] sm:$0xff]
        %v310 = vld [vmem:[%s263 + $0xb8] sm:$0xff]
        %v311 = vld [vmem:[%s263 + $0xc0] sm:$0xff]
        %v312 = vld [vmem:[%s263 + $0xc8] sm:$0xff]
        %v313 = vld [vmem:[%s263 + $0xd0] sm:$0xff]
        %v314 = vld [vmem:[%s263 + $0xd8] sm:$0xff]
        %v315 = vld [vmem:[%s263 + $0xe0] sm:$0xff]
        %v316 = vld [vmem:[%s263 + $0xe8] sm:$0xff]
        %v317 = vld [vmem:[%s263 + $0xf0] sm:$0xff]
        %v318 = vld [vmem:[%s263 + $0xf8] sm:$0xff]
        %v351 = vunpack.c.l.b16 %v287
        %v352 = vunpack.c.h.b16 %v287
        %v353 = vunpack.c.l.b16 %v288
        %v354 = vunpack.c.h.b16 %v288
        %v355 = vunpack.c.l.b16 %v289
        %v356 = vunpack.c.h.b16 %v289
        %v357 = vunpack.c.l.b16 %v290
        %v358 = vunpack.c.h.b16 %v290
        %v359 = vunpack.c.l.b16 %v291
        %v360 = vunpack.c.h.b16 %v291
        %v361 = vunpack.c.l.b16 %v292
        %v362 = vunpack.c.h.b16 %v292
        %v363 = vunpack.c.l.b16 %v293
        %v364 = vunpack.c.h.b16 %v293
        %v365 = vunpack.c.l.b16 %v294
        %v366 = vunpack.c.h.b16 %v294
        %v367 = vunpack.c.l.b16 %v295
        %v368 = vunpack.c.h.b16 %v295
        %v369 = vunpack.c.l.b16 %v296
        %v370 = vunpack.c.h.b16 %v296
        %v371 = vunpack.c.l.b16 %v297
        %v372 = vunpack.c.h.b16 %v297
        %v373 = vunpack.c.l.b16 %v298
        %v374 = vunpack.c.h.b16 %v298
        %v375 = vunpack.c.l.b16 %v299
        %v376 = vunpack.c.h.b16 %v299
        %v377 = vunpack.c.l.b16 %v300
        %v378 = vunpack.c.h.b16 %v300
        %v379 = vunpack.c.l.b16 %v301
        %v380 = vunpack.c.h.b16 %v301
        %v381 = vunpack.c.l.b16 %v302
        %v382 = vunpack.c.h.b16 %v302
        %v383 = vunpack.c.l.b16 %v303
        %v384 = vunpack.c.h.b16 %v303
        %v385 = vunpack.c.l.b16 %v304
        %v386 = vunpack.c.h.b16 %v304
        %v387 = vunpack.c.l.b16 %v305
        %v388 = vunpack.c.h.b16 %v305
        %v389 = vunpack.c.l.b16 %v306
        %v390 = vunpack.c.h.b16 %v306
        %v391 = vunpack.c.l.b16 %v307
        %v392 = vunpack.c.h.b16 %v307
        %v393 = vunpack.c.l.b16 %v308
        %v394 = vunpack.c.h.b16 %v308
        %v395 = vunpack.c.l.b16 %v309
        %v396 = vunpack.c.h.b16 %v309
        %v397 = vunpack.c.l.b16 %v310
        %v398 = vunpack.c.h.b16 %v310
        %v399 = vunpack.c.l.b16 %v311
        %v400 = vunpack.c.h.b16 %v311
        %v401 = vunpack.c.l.b16 %v312
        %v402 = vunpack.c.h.b16 %v312
        %v403 = vunpack.c.l.b16 %v313
        %v404 = vunpack.c.h.b16 %v313
        %v405 = vunpack.c.l.b16 %v314
        %v406 = vunpack.c.h.b16 %v314
        %v407 = vunpack.c.l.b16 %v315
        %v408 = vunpack.c.h.b16 %v315
        %v409 = vunpack.c.l.b16 %v316
        %v410 = vunpack.c.h.b16 %v316
        %v411 = vunpack.c.l.b16 %v317
        %v412 = vunpack.c.h.b16 %v317
        %v413 = vunpack.c.l.b16 %v318
        %v414 = vunpack.c.h.b16 %v318
        %v415 = vpack.c.b16 %v355, %v351
        %v416 = vpack.c.b16 %v356, %v352
        %v417 = vpack.c.b16 %v357, %v353
        %v418 = vpack.c.b16 %v358, %v354
        %v419 = vpack.c.b16 %v363, %v359
        %v420 = vpack.c.b16 %v364, %v360
        %v421 = vpack.c.b16 %v365, %v361
        %v422 = vpack.c.b16 %v366, %v362
        %v423 = vpack.c.b16 %v371, %v367
        %v424 = vpack.c.b16 %v372, %v368
        %v425 = vpack.c.b16 %v373, %v369
        %v426 = vpack.c.b16 %v374, %v370
        %v427 = vpack.c.b16 %v379, %v375
        %v428 = vpack.c.b16 %v380, %v376
        %v429 = vpack.c.b16 %v381, %v377
        %v430 = vpack.c.b16 %v382, %v378
        %v431 = vpack.c.b16 %v387, %v383
        %v432 = vpack.c.b16 %v388, %v384
        %v433 = vpack.c.b16 %v389, %v385
        %v434 = vpack.c.b16 %v390, %v386
        %v435 = vpack.c.b16 %v395, %v391
        %v436 = vpack.c.b16 %v396, %v392
        %v437 = vpack.c.b16 %v397, %v393
        %v438 = vpack.c.b16 %v398, %v394
        %v439 = vpack.c.b16 %v403, %v399
        %v440 = vpack.c.b16 %v404, %v400
        %v441 = vpack.c.b16 %v405, %v401
        %v442 = vpack.c.b16 %v406, %v402
        %v443 = vpack.c.b16 %v411, %v407
        %v444 = vpack.c.b16 %v412, %v408
        %v445 = vpack.c.b16 %v413, %v409
        %v446 = vpack.c.b16 %v414, %v410
        %479 = vmatpush.bf16.msra.mxu0 %v443
        %480 = vmatpush.bf16.msra.mxu0 %v439
        %481 = vmatpush.bf16.msra.mxu0 %v435
        %482 = vmatpush.bf16.msra.mxu0 %v431
        %483 = vmatpush.bf16.msra.mxu0 %v427
        %484 = vmatpush.bf16.msra.mxu0 %v423
        %485 = vmatpush.bf16.msra.mxu0 %v419
        %486 = vmatpush.bf16.msra.mxu0 %v415
        %487 = vmatmul.bf16.gmra.mxu0 %v286
        %v488 = vpop.f32.mrf.mxu0
        %v489 = vadd.f32 0.0, %v488
        %v490 = vpop.f32.mrf.mxu0
        %v491 = vadd.f32 0.0, %v490
        %492 = vdwg.mxu0
        %493 = vmatpush.bf16.msra.mxu0 %v444
        %494 = vmatpush.bf16.msra.mxu0 %v440
        %495 = vmatpush.bf16.msra.mxu0 %v436
        %496 = vmatpush.bf16.msra.mxu0 %v432
        %497 = vmatpush.bf16.msra.mxu0 %v428
        %498 = vmatpush.bf16.msra.mxu0 %v424
        %499 = vmatpush.bf16.msra.mxu0 %v420
        %500 = vmatpush.bf16.msra.mxu0 %v416
        %501 = vmatmul.bf16.gmra.mxu0 %v286
        %v502 = vpop.f32.mrf.mxu0
        %v503 = vadd.f32 0.0, %v502
        %v504 = vpop.f32.mrf.mxu0
        %v505 = vadd.f32 0.0, %v504
        %506 = vdwg.mxu0
        %507 = vmatpush.bf16.msra.mxu0 %v445
        %508 = vmatpush.bf16.msra.mxu0 %v441
        %509 = vmatpush.bf16.msra.mxu0 %v437
        %510 = vmatpush.bf16.msra.mxu0 %v433
        %511 = vmatpush.bf16.msra.mxu0 %v429
        %512 = vmatpush.bf16.msra.mxu0 %v425
        %513 = vmatpush.bf16.msra.mxu0 %v421
        %514 = vmatpush.bf16.msra.mxu0 %v417
        %515 = vmatmul.bf16.gmra.mxu0 %v286
        %v516 = vpop.f32.mrf.mxu0
        %v517 = vadd.f32 0.0, %v516
        %v518 = vpop.f32.mrf.mxu0
        %v519 = vadd.f32 0.0, %v518
        %520 = vdwg.mxu0
        %521 = vmatpush.bf16.msra.mxu0 %v446
        %522 = vmatpush.bf16.msra.mxu0 %v442
        %523 = vmatpush.bf16.msra.mxu0 %v438
        %524 = vmatpush.bf16.msra.mxu0 %v434
        %525 = vmatpush.bf16.msra.mxu0 %v430
        %526 = vmatpush.bf16.msra.mxu0 %v426
        %527 = vmatpush.bf16.msra.mxu0 %v422
        %528 = vmatpush.bf16.msra.mxu0 %v418
        %529 = vmatmul.bf16.gmra.mxu0 %v286
        %v530 = vpop.f32.mrf.mxu0
        %v531 = vadd.f32 0.0, %v530
        %v532 = vpop.f32.mrf.mxu0
        %v533 = vadd.f32 0.0, %v532
        %534 = vdwg.mxu0
        %s535 = smul.u32 %s280, 8
        %s536 = smul.addr %s535, 4
        %s537 = scalar_lea.vmem %s251, %s536
        %v538 = vld [vmem:[%s537] sm:$0xff]
        %v539 = vld [vmem:[%s537 + $0x8] sm:$0xff]
        %v540 = vld [vmem:[%s537 + $0x10] sm:$0xff]
        %v541 = vld [vmem:[%s537 + $0x18] sm:$0xff]
        %v542 = vunpack.c.l.bf16 %v538
        %v543 = vunpack.c.h.bf16 %v538
        %v544 = vunpack.c.l.bf16 %v539
        %v545 = vunpack.c.h.bf16 %v539
        %v546 = vunpack.c.l.bf16 %v540
        %v547 = vunpack.c.h.bf16 %v540
        %v548 = vunpack.c.l.bf16 %v541
        %v549 = vunpack.c.h.bf16 %v541
        %v550 = vadd.f32 %v542, %v489
        %v551 = vadd.f32 %v543, %v503
        %v552 = vadd.f32 %v544, %v517
        %v553 = vadd.f32 %v545, %v531
        %v554 = vadd.f32 %v546, %v491
        %v555 = vadd.f32 %v547, %v505
        %v556 = vadd.f32 %v548, %v519
        %v557 = vadd.f32 %v549, %v533
        %v558 = vmul.f32 %v550, 0.5
        %v559 = vmul.f32 %v554, 0.5
        %v560 = vtanh.pop %v558
        %v561 = vtanh.pop %v559
        %v562 = vmul.f32 %v560, 0.5
        %v563 = vmul.f32 %v561, 0.5
        %v564 = vadd.f32 %v562, 0.5
        %v565 = vadd.f32 %v563, 0.5
        %v566 = vmul.f32 %v551, 0.5
        %v567 = vmul.f32 %v555, 0.5
        %v568 = vtanh.pop %v566
        %v569 = vtanh.pop %v567
        %v570 = vmul.f32 %v568, 0.5
        %v571 = vmul.f32 %v569, 0.5
        %v572 = vadd.f32 %v570, 0.5
        %v573 = vadd.f32 %v571, 0.5
        %v574 = vtanh.pop %v552
        %v575 = vtanh.pop %v556
        %v576 = vmul.f32 %v553, 0.5
        %v577 = vmul.f32 %v557, 0.5
        %v578 = vtanh.pop %v576
        %v579 = vtanh.pop %v577
        %v580 = vmul.f32 %v578, 0.5
        %v581 = vmul.f32 %v579, 0.5
        %v582 = vadd.f32 %v580, 0.5
        %v583 = vadd.f32 %v581, 0.5
        %v584 = vmul.f32 %v572, %v284
        %v585 = vmul.f32 %v573, %v285
        %v586 = vmul.f32 %v564, %v574
        %v587 = vmul.f32 %v565, %v575
        %v588 = vadd.f32 %v584, %v586
        %v589 = vadd.f32 %v585, %v587
        %v590 = vtanh.pop %v588
        %v591 = vtanh.pop %v589
        %v592 = vmul.f32 %v582, %v590
        %v593 = vmul.f32 %v583, %v591
        %s594 = smul.u32 %s280, 16
        %s595 = scalar_lea.vmem %s231, %s594 [#allocation4]
        %596 = vst [vmem:[%s595] sm:$0xff] %v592
        %597 = vst [vmem:[%s595 + $0x8] sm:$0xff] %v593
        %s598 = sadd.s32 %s280, %s281
        %v599 = vpack.c.bf16 %v593, %v592
        %v600 = vld [vmem:[%s263] sm:$0xff]
        %v601 = vld [vmem:[%s263 + $0x8] sm:$0xff]
        %v602 = vld [vmem:[%s263 + $0x10] sm:$0xff]
        %v603 = vld [vmem:[%s263 + $0x18] sm:$0xff]
        %v604 = vld [vmem:[%s263 + $0x20] sm:$0xff]
        %v605 = vld [vmem:[%s263 + $0x28] sm:$0xff]
        %v606 = vld [vmem:[%s263 + $0x30] sm:$0xff]
        %v607 = vld [vmem:[%s263 + $0x38] sm:$0xff]
        %v608 = vld [vmem:[%s263 + $0x40] sm:$0xff]
        %v609 = vld [vmem:[%s263 + $0x48] sm:$0xff]
        %v610 = vld [vmem:[%s263 + $0x50] sm:$0xff]
        %v611 = vld [vmem:[%s263 + $0x58] sm:$0xff]
        %v612 = vld [vmem:[%s263 + $0x60] sm:$0xff]
        %v613 = vld [vmem:[%s263 + $0x68] sm:$0xff]
        %v614 = vld [vmem:[%s263 + $0x70] sm:$0xff]
        %v615 = vld [vmem:[%s263 + $0x78] sm:$0xff]
        %v616 = vld [vmem:[%s263 + $0x80] sm:$0xff]
        %v617 = vld [vmem:[%s263 + $0x88] sm:$0xff]
        %v618 = vld [vmem:[%s263 + $0x90] sm:$0xff]
        %v619 = vld [vmem:[%s263 + $0x98] sm:$0xff]
        %v620 = vld [vmem:[%s263 + $0xa0] sm:$0xff]
        %v621 = vld [vmem:[%s263 + $0xa8] sm:$0xff]
        %v622 = vld [vmem:[%s263 + $0xb0] sm:$0xff]
        %v623 = vld [vmem:[%s263 + $0xb8] sm:$0xff]
        %v624 = vld [vmem:[%s263 + $0xc0] sm:$0xff]
        %v625 = vld [vmem:[%s263 + $0xc8] sm:$0xff]
        %v626 = vld [vmem:[%s263 + $0xd0] sm:$0xff]
        %v627 = vld [vmem:[%s263 + $0xd8] sm:$0xff]
        %v628 = vld [vmem:[%s263 + $0xe0] sm:$0xff]
        %v629 = vld [vmem:[%s263 + $0xe8] sm:$0xff]
        %v630 = vld [vmem:[%s263 + $0xf0] sm:$0xff]
        %v631 = vld [vmem:[%s263 + $0xf8] sm:$0xff]
        %v664 = vunpack.c.l.b16 %v600
        %v665 = vunpack.c.h.b16 %v600
        %v666 = vunpack.c.l.b16 %v601
        %v667 = vunpack.c.h.b16 %v601
        %v668 = vunpack.c.l.b16 %v602
        %v669 = vunpack.c.h.b16 %v602
        %v670 = vunpack.c.l.b16 %v603
        %v671 = vunpack.c.h.b16 %v603
        %v672 = vunpack.c.l.b16 %v604
        %v673 = vunpack.c.h.b16 %v604
        %v674 = vunpack.c.l.b16 %v605
        %v675 = vunpack.c.h.b16 %v605
        %v676 = vunpack.c.l.b16 %v606
        %v677 = vunpack.c.h.b16 %v606
        %v678 = vunpack.c.l.b16 %v607
        %v679 = vunpack.c.h.b16 %v607
        %v680 = vunpack.c.l.b16 %v608
        %v681 = vunpack.c.h.b16 %v608
        %v682 = vunpack.c.l.b16 %v609
        %v683 = vunpack.c.h.b16 %v609
        %v684 = vunpack.c.l.b16 %v610
        %v685 = vunpack.c.h.b16 %v610
        %v686 = vunpack.c.l.b16 %v611
        %v687 = vunpack.c.h.b16 %v611
        %v688 = vunpack.c.l.b16 %v612
        %v689 = vunpack.c.h.b16 %v612
        %v690 = vunpack.c.l.b16 %v613
        %v691 = vunpack.c.h.b16 %v613
        %v692 = vunpack.c.l.b16 %v614
        %v693 = vunpack.c.h.b16 %v614
        %v694 = vunpack.c.l.b16 %v615
        %v695 = vunpack.c.h.b16 %v615
        %v696 = vunpack.c.l.b16 %v616
        %v697 = vunpack.c.h.b16 %v616
        %v698 = vunpack.c.l.b16 %v617
        %v699 = vunpack.c.h.b16 %v617
        %v700 = vunpack.c.l.b16 %v618
        %v701 = vunpack.c.h.b16 %v618
        %v702 = vunpack.c.l.b16 %v619
        %v703 = vunpack.c.h.b16 %v619
        %v704 = vunpack.c.l.b16 %v620
        %v705 = vunpack.c.h.b16 %v620
        %v706 = vunpack.c.l.b16 %v621
        %v707 = vunpack.c.h.b16 %v621
        %v708 = vunpack.c.l.b16 %v622
        %v709 = vunpack.c.h.b16 %v622
        %v710 = vunpack.c.l.b16 %v623
        %v711 = vunpack.c.h.b16 %v623
        %v712 = vunpack.c.l.b16 %v624
        %v713 = vunpack.c.h.b16 %v624
        %v714 = vunpack.c.l.b16 %v625
        %v715 = vunpack.c.h.b16 %v625
        %v716 = vunpack.c.l.b16 %v626
        %v717 = vunpack.c.h.b16 %v626
        %v718 = vunpack.c.l.b16 %v627
        %v719 = vunpack.c.h.b16 %v627
        %v720 = vunpack.c.l.b16 %v628
        %v721 = vunpack.c.h.b16 %v628
        %v722 = vunpack.c.l.b16 %v629
        %v723 = vunpack.c.h.b16 %v629
        %v724 = vunpack.c.l.b16 %v630
        %v725 = vunpack.c.h.b16 %v630
        %v726 = vunpack.c.l.b16 %v631
        %v727 = vunpack.c.h.b16 %v631
        %v728 = vpack.c.b16 %v668, %v664
        %v729 = vpack.c.b16 %v669, %v665
        %v730 = vpack.c.b16 %v670, %v666
        %v731 = vpack.c.b16 %v671, %v667
        %v732 = vpack.c.b16 %v676, %v672
        %v733 = vpack.c.b16 %v677, %v673
        %v734 = vpack.c.b16 %v678, %v674
        %v735 = vpack.c.b16 %v679, %v675
        %v736 = vpack.c.b16 %v684, %v680
        %v737 = vpack.c.b16 %v685, %v681
        %v738 = vpack.c.b16 %v686, %v682
        %v739 = vpack.c.b16 %v687, %v683
        %v740 = vpack.c.b16 %v692, %v688
        %v741 = vpack.c.b16 %v693, %v689
        %v742 = vpack.c.b16 %v694, %v690
        %v743 = vpack.c.b16 %v695, %v691
        %v744 = vpack.c.b16 %v700, %v696
        %v745 = vpack.c.b16 %v701, %v697
        %v746 = vpack.c.b16 %v702, %v698
        %v747 = vpack.c.b16 %v703, %v699
        %v748 = vpack.c.b16 %v708, %v704
        %v749 = vpack.c.b16 %v709, %v705
        %v750 = vpack.c.b16 %v710, %v706
        %v751 = vpack.c.b16 %v711, %v707
        %v752 = vpack.c.b16 %v716, %v712
        %v753 = vpack.c.b16 %v717, %v713
        %v754 = vpack.c.b16 %v718, %v714
        %v755 = vpack.c.b16 %v719, %v715
        %v756 = vpack.c.b16 %v724, %v720
        %v757 = vpack.c.b16 %v725, %v721
        %v758 = vpack.c.b16 %v726, %v722
        %v759 = vpack.c.b16 %v727, %v723
        %792 = vmatpush.bf16.msra.mxu0 %v756
        %793 = vmatpush.bf16.msra.mxu0 %v752
        %794 = vmatpush.bf16.msra.mxu0 %v748
        %795 = vmatpush.bf16.msra.mxu0 %v744
        %796 = vmatpush.bf16.msra.mxu0 %v740
        %797 = vmatpush.bf16.msra.mxu0 %v736
        %798 = vmatpush.bf16.msra.mxu0 %v732
        %799 = vmatpush.bf16.msra.mxu0 %v728
        %800 = vmatmul.bf16.gmra.mxu0 %v599
        %v801 = vpop.f32.mrf.mxu0
        %v802 = vadd.f32 0.0, %v801
        %v803 = vpop.f32.mrf.mxu0
        %v804 = vadd.f32 0.0, %v803
        %805 = vdwg.mxu0
        %806 = vmatpush.bf16.msra.mxu0 %v757
        %807 = vmatpush.bf16.msra.mxu0 %v753
        %808 = vmatpush.bf16.msra.mxu0 %v749
        %809 = vmatpush.bf16.msra.mxu0 %v745
        %810 = vmatpush.bf16.msra.mxu0 %v741
        %811 = vmatpush.bf16.msra.mxu0 %v737
        %812 = vmatpush.bf16.msra.mxu0 %v733
        %813 = vmatpush.bf16.msra.mxu0 %v729
        %814 = vmatmul.bf16.gmra.mxu0 %v599
        %v815 = vpop.f32.mrf.mxu0
        %v816 = vadd.f32 0.0, %v815
        %v817 = vpop.f32.mrf.mxu0
        %v818 = vadd.f32 0.0, %v817
        %819 = vdwg.mxu0
        %820 = vmatpush.bf16.msra.mxu0 %v758
        %821 = vmatpush.bf16.msra.mxu0 %v754
        %822 = vmatpush.bf16.msra.mxu0 %v750
        %823 = vmatpush.bf16.msra.mxu0 %v746
        %824 = vmatpush.bf16.msra.mxu0 %v742
        %825 = vmatpush.bf16.msra.mxu0 %v738
        %826 = vmatpush.bf16.msra.mxu0 %v734
        %827 = vmatpush.bf16.msra.mxu0 %v730
        %828 = vmatmul.bf16.gmra.mxu0 %v599
        %v829 = vpop.f32.mrf.mxu0
        %v830 = vadd.f32 0.0, %v829
        %v831 = vpop.f32.mrf.mxu0
        %v832 = vadd.f32 0.0, %v831
        %833 = vdwg.mxu0
        %834 = vmatpush.bf16.msra.mxu0 %v759
        %835 = vmatpush.bf16.msra.mxu0 %v755
        %836 = vmatpush.bf16.msra.mxu0 %v751
        %837 = vmatpush.bf16.msra.mxu0 %v747
        %838 = vmatpush.bf16.msra.mxu0 %v743
        %839 = vmatpush.bf16.msra.mxu0 %v739
        %840 = vmatpush.bf16.msra.mxu0 %v735
        %841 = vmatpush.bf16.msra.mxu0 %v731
        %842 = vmatmul.bf16.gmra.mxu0 %v599
        %v843 = vpop.f32.mrf.mxu0
        %v844 = vadd.f32 0.0, %v843
        %v845 = vpop.f32.mrf.mxu0
        %v846 = vadd.f32 0.0, %v845
        %847 = vdwg.mxu0
        %s848 = smul.u32 %s598, 8
        %s849 = smul.addr %s848, 4
        %s850 = scalar_lea.vmem %s251, %s849
        %v851 = vld [vmem:[%s850] sm:$0xff]
        %v852 = vld [vmem:[%s850 + $0x8] sm:$0xff]
        %v853 = vld [vmem:[%s850 + $0x10] sm:$0xff]
        %v854 = vld [vmem:[%s850 + $0x18] sm:$0xff]
        %v855 = vunpack.c.l.bf16 %v851
        %v856 = vunpack.c.h.bf16 %v851
        %v857 = vunpack.c.l.bf16 %v852
        %v858 = vunpack.c.h.bf16 %v852
        %v859 = vunpack.c.l.bf16 %v853
        %v860 = vunpack.c.h.bf16 %v853
        %v861 = vunpack.c.l.bf16 %v854
        %v862 = vunpack.c.h.bf16 %v854
        %v863 = vadd.f32 %v855, %v802
        %v864 = vadd.f32 %v856, %v816
        %v865 = vadd.f32 %v857, %v830
        %v866 = vadd.f32 %v858, %v844
        %v867 = vadd.f32 %v859, %v804
        %v868 = vadd.f32 %v860, %v818
        %v869 = vadd.f32 %v861, %v832
        %v870 = vadd.f32 %v862, %v846
        %v871 = vmul.f32 %v863, 0.5
        %v872 = vmul.f32 %v867, 0.5
        %v873 = vtanh.pop %v871
        %v874 = vtanh.pop %v872
        %v875 = vmul.f32 %v873, 0.5
        %v876 = vmul.f32 %v874, 0.5
        %v877 = vadd.f32 %v875, 0.5
        %v878 = vadd.f32 %v876, 0.5
        %v879 = vmul.f32 %v864, 0.5
        %v880 = vmul.f32 %v868, 0.5
        %v881 = vtanh.pop %v879
        %v882 = vtanh.pop %v880
        %v883 = vmul.f32 %v881, 0.5
        %v884 = vmul.f32 %v882, 0.5
        %v885 = vadd.f32 %v883, 0.5
        %v886 = vadd.f32 %v884, 0.5
        %v887 = vtanh.pop %v865
        %v888 = vtanh.pop %v869
        %v889 = vmul.f32 %v866, 0.5
        %v890 = vmul.f32 %v870, 0.5
        %v891 = vtanh.pop %v889
        %v892 = vtanh.pop %v890
        %v893 = vmul.f32 %v891, 0.5
        %v894 = vmul.f32 %v892, 0.5
        %v895 = vadd.f32 %v893, 0.5
        %v896 = vadd.f32 %v894, 0.5
        %v897 = vmul.f32 %v885, %v588
        %v898 = vmul.f32 %v886, %v589
        %v899 = vmul.f32 %v877, %v887
        %v900 = vmul.f32 %v878, %v888
        %v901 = vadd.f32 %v897, %v899
        %v902 = vadd.f32 %v898, %v900
        %v903 = vtanh.pop %v901
        %v904 = vtanh.pop %v902
        %v905 = vmul.f32 %v895, %v903
        %v906 = vmul.f32 %v896, %v904
        %s907 = smul.u32 %s598, 16
        %s908 = scalar_lea.vmem %s231, %s907 [#allocation4]
        %909 = vst [vmem:[%s908] sm:$0xff] %v905
        %910 = vst [vmem:[%s908 + $0x8] sm:$0xff] %v906
        %s911 = smul.u32 %s281, 2
        %s912 = sadd.s32 %s280, %s911
        %v913 = vpack.c.bf16 %v906, %v905
        %v914 = vld [vmem:[%s263] sm:$0xff]
        %v915 = vld [vmem:[%s263 + $0x8] sm:$0xff]
        %v916 = vld [vmem:[%s263 + $0x10] sm:$0xff]
        %v917 = vld [vmem:[%s263 + $0x18] sm:$0xff]
        %v918 = vld [vmem:[%s263 + $0x20] sm:$0xff]
        %v919 = vld [vmem:[%s263 + $0x28] sm:$0xff]
        %v920 = vld [vmem:[%s263 + $0x30] sm:$0xff]
        %v921 = vld [vmem:[%s263 + $0x38] sm:$0xff]
        %v922 = vld [vmem:[%s263 + $0x40] sm:$0xff]
        %v923 = vld [vmem:[%s263 + $0x48] sm:$0xff]
        %v924 = vld [vmem:[%s263 + $0x50] sm:$0xff]
        %v925 = vld [vmem:[%s263 + $0x58] sm:$0xff]
        %v926 = vld [vmem:[%s263 + $0x60] sm:$0xff]
        %v927 = vld [vmem:[%s263 + $0x68] sm:$0xff]
        %v928 = vld [vmem:[%s263 + $0x70] sm:$0xff]
        %v929 = vld [vmem:[%s263 + $0x78] sm:$0xff]
        %v930 = vld [vmem:[%s263 + $0x80] sm:$0xff]
        %v931 = vld [vmem:[%s263 + $0x88] sm:$0xff]
        %v932 = vld [vmem:[%s263 + $0x90] sm:$0xff]
        %v933 = vld [vmem:[%s263 + $0x98] sm:$0xff]
        %v934 = vld [vmem:[%s263 + $0xa0] sm:$0xff]
        %v935 = vld [vmem:[%s263 + $0xa8] sm:$0xff]
        %v936 = vld [vmem:[%s263 + $0xb0] sm:$0xff]
        %v937 = vld [vmem:[%s263 + $0xb8] sm:$0xff]
        %v938 = vld [vmem:[%s263 + $0xc0] sm:$0xff]
        %v939 = vld [vmem:[%s263 + $0xc8] sm:$0xff]
        %v940 = vld [vmem:[%s263 + $0xd0] sm:$0xff]
        %v941 = vld [vmem:[%s263 + $0xd8] sm:$0xff]
        %v942 = vld [vmem:[%s263 + $0xe0] sm:$0xff]
        %v943 = vld [vmem:[%s263 + $0xe8] sm:$0xff]
        %v944 = vld [vmem:[%s263 + $0xf0] sm:$0xff]
        %v945 = vld [vmem:[%s263 + $0xf8] sm:$0xff]
        %v978 = vunpack.c.l.b16 %v914
        %v979 = vunpack.c.h.b16 %v914
        %v980 = vunpack.c.l.b16 %v915
        %v981 = vunpack.c.h.b16 %v915
        %v982 = vunpack.c.l.b16 %v916
        %v983 = vunpack.c.h.b16 %v916
        %v984 = vunpack.c.l.b16 %v917
        %v985 = vunpack.c.h.b16 %v917
        %v986 = vunpack.c.l.b16 %v918
        %v987 = vunpack.c.h.b16 %v918
        %v988 = vunpack.c.l.b16 %v919
        %v989 = vunpack.c.h.b16 %v919
        %v990 = vunpack.c.l.b16 %v920
        %v991 = vunpack.c.h.b16 %v920
        %v992 = vunpack.c.l.b16 %v921
        %v993 = vunpack.c.h.b16 %v921
        %v994 = vunpack.c.l.b16 %v922
        %v995 = vunpack.c.h.b16 %v922
        %v996 = vunpack.c.l.b16 %v923
        %v997 = vunpack.c.h.b16 %v923
        %v998 = vunpack.c.l.b16 %v924
        %v999 = vunpack.c.h.b16 %v924
        %v1000 = vunpack.c.l.b16 %v925
        %v1001 = vunpack.c.h.b16 %v925
        %v1002 = vunpack.c.l.b16 %v926
        %v1003 = vunpack.c.h.b16 %v926
        %v1004 = vunpack.c.l.b16 %v927
        %v1005 = vunpack.c.h.b16 %v927
        %v1006 = vunpack.c.l.b16 %v928
        %v1007 = vunpack.c.h.b16 %v928
        %v1008 = vunpack.c.l.b16 %v929
        %v1009 = vunpack.c.h.b16 %v929
        %v1010 = vunpack.c.l.b16 %v930
        %v1011 = vunpack.c.h.b16 %v930
        %v1012 = vunpack.c.l.b16 %v931
        %v1013 = vunpack.c.h.b16 %v931
        %v1014 = vunpack.c.l.b16 %v932
        %v1015 = vunpack.c.h.b16 %v932
        %v1016 = vunpack.c.l.b16 %v933
        %v1017 = vunpack.c.h.b16 %v933
        %v1018 = vunpack.c.l.b16 %v934
        %v1019 = vunpack.c.h.b16 %v934
        %v1020 = vunpack.c.l.b16 %v935
        %v1021 = vunpack.c.h.b16 %v935
        %v1022 = vunpack.c.l.b16 %v936
        %v1023 = vunpack.c.h.b16 %v936
        %v1024 = vunpack.c.l.b16 %v937
        %v1025 = vunpack.c.h.b16 %v937
        %v1026 = vunpack.c.l.b16 %v938
        %v1027 = vunpack.c.h.b16 %v938
        %v1028 = vunpack.c.l.b16 %v939
        %v1029 = vunpack.c.h.b16 %v939
        %v1030 = vunpack.c.l.b16 %v940
        %v1031 = vunpack.c.h.b16 %v940
        %v1032 = vunpack.c.l.b16 %v941
        %v1033 = vunpack.c.h.b16 %v941
        %v1034 = vunpack.c.l.b16 %v942
        %v1035 = vunpack.c.h.b16 %v942
        %v1036 = vunpack.c.l.b16 %v943
        %v1037 = vunpack.c.h.b16 %v943
        %v1038 = vunpack.c.l.b16 %v944
        %v1039 = vunpack.c.h.b16 %v944
        %v1040 = vunpack.c.l.b16 %v945
        %v1041 = vunpack.c.h.b16 %v945
        %v1042 = vpack.c.b16 %v982, %v978
        %v1043 = vpack.c.b16 %v983, %v979
        %v1044 = vpack.c.b16 %v984, %v980
        %v1045 = vpack.c.b16 %v985, %v981
        %v1046 = vpack.c.b16 %v990, %v986
        %v1047 = vpack.c.b16 %v991, %v987
        %v1048 = vpack.c.b16 %v992, %v988
        %v1049 = vpack.c.b16 %v993, %v989
        %v1050 = vpack.c.b16 %v998, %v994
        %v1051 = vpack.c.b16 %v999, %v995
        %v1052 = vpack.c.b16 %v1000, %v996
        %v1053 = vpack.c.b16 %v1001, %v997
        %v1054 = vpack.c.b16 %v1006, %v1002
        %v1055 = vpack.c.b16 %v1007, %v1003
        %v1056 = vpack.c.b16 %v1008, %v1004
        %v1057 = vpack.c.b16 %v1009, %v1005
        %v1058 = vpack.c.b16 %v1014, %v1010
        %v1059 = vpack.c.b16 %v1015, %v1011
        %v1060 = vpack.c.b16 %v1016, %v1012
        %v1061 = vpack.c.b16 %v1017, %v1013
        %v1062 = vpack.c.b16 %v1022, %v1018
        %v1063 = vpack.c.b16 %v1023, %v1019
        %v1064 = vpack.c.b16 %v1024, %v1020
        %v1065 = vpack.c.b16 %v1025, %v1021
        %v1066 = vpack.c.b16 %v1030, %v1026
        %v1067 = vpack.c.b16 %v1031, %v1027
        %v1068 = vpack.c.b16 %v1032, %v1028
        %v1069 = vpack.c.b16 %v1033, %v1029
        %v1070 = vpack.c.b16 %v1038, %v1034
        %v1071 = vpack.c.b16 %v1039, %v1035
        %v1072 = vpack.c.b16 %v1040, %v1036
        %v1073 = vpack.c.b16 %v1041, %v1037
        %1106 = vmatpush.bf16.msra.mxu0 %v1070
        %1107 = vmatpush.bf16.msra.mxu0 %v1066
        %1108 = vmatpush.bf16.msra.mxu0 %v1062
        %1109 = vmatpush.bf16.msra.mxu0 %v1058
        %1110 = vmatpush.bf16.msra.mxu0 %v1054
        %1111 = vmatpush.bf16.msra.mxu0 %v1050
        %1112 = vmatpush.bf16.msra.mxu0 %v1046
        %1113 = vmatpush.bf16.msra.mxu0 %v1042
        %1114 = vmatmul.bf16.gmra.mxu0 %v913
        %v1115 = vpop.f32.mrf.mxu0
        %v1116 = vadd.f32 0.0, %v1115
        %v1117 = vpop.f32.mrf.mxu0
        %v1118 = vadd.f32 0.0, %v1117
        %1119 = vdwg.mxu0
        %1120 = vmatpush.bf16.msra.mxu0 %v1071
        %1121 = vmatpush.bf16.msra.mxu0 %v1067
        %1122 = vmatpush.bf16.msra.mxu0 %v1063
        %1123 = vmatpush.bf16.msra.mxu0 %v1059
        %1124 = vmatpush.bf16.msra.mxu0 %v1055
        %1125 = vmatpush.bf16.msra.mxu0 %v1051
        %1126 = vmatpush.bf16.msra.mxu0 %v1047
        %1127 = vmatpush.bf16.msra.mxu0 %v1043
        %1128 = vmatmul.bf16.gmra.mxu0 %v913
        %v1129 = vpop.f32.mrf.mxu0
        %v1130 = vadd.f32 0.0, %v1129
        %v1131 = vpop.f32.mrf.mxu0
        %v1132 = vadd.f32 0.0, %v1131
        %1133 = vdwg.mxu0
        %1134 = vmatpush.bf16.msra.mxu0 %v1072
        %1135 = vmatpush.bf16.msra.mxu0 %v1068
        %1136 = vmatpush.bf16.msra.mxu0 %v1064
        %1137 = vmatpush.bf16.msra.mxu0 %v1060
        %1138 = vmatpush.bf16.msra.mxu0 %v1056
        %1139 = vmatpush.bf16.msra.mxu0 %v1052
        %1140 = vmatpush.bf16.msra.mxu0 %v1048
        %1141 = vmatpush.bf16.msra.mxu0 %v1044
        %1142 = vmatmul.bf16.gmra.mxu0 %v913
        %v1143 = vpop.f32.mrf.mxu0
        %v1144 = vadd.f32 0.0, %v1143
        %v1145 = vpop.f32.mrf.mxu0
        %v1146 = vadd.f32 0.0, %v1145
        %1147 = vdwg.mxu0
        %1148 = vmatpush.bf16.msra.mxu0 %v1073
        %1149 = vmatpush.bf16.msra.mxu0 %v1069
        %1150 = vmatpush.bf16.msra.mxu0 %v1065
        %1151 = vmatpush.bf16.msra.mxu0 %v1061
        %1152 = vmatpush.bf16.msra.mxu0 %v1057
        %1153 = vmatpush.bf16.msra.mxu0 %v1053
        %1154 = vmatpush.bf16.msra.mxu0 %v1049
        %1155 = vmatpush.bf16.msra.mxu0 %v1045
        %1156 = vmatmul.bf16.gmra.mxu0 %v913
        %v1157 = vpop.f32.mrf.mxu0
        %v1158 = vadd.f32 0.0, %v1157
        %v1159 = vpop.f32.mrf.mxu0
        %v1160 = vadd.f32 0.0, %v1159
        %1161 = vdwg.mxu0
        %s1162 = smul.u32 %s912, 8
        %s1163 = smul.addr %s1162, 4
        %s1164 = scalar_lea.vmem %s251, %s1163
        %v1165 = vld [vmem:[%s1164] sm:$0xff]
        %v1166 = vld [vmem:[%s1164 + $0x8] sm:$0xff]
        %v1167 = vld [vmem:[%s1164 + $0x10] sm:$0xff]
        %v1168 = vld [vmem:[%s1164 + $0x18] sm:$0xff]
        %v1169 = vunpack.c.l.bf16 %v1165
        %v1170 = vunpack.c.h.bf16 %v1165
        %v1171 = vunpack.c.l.bf16 %v1166
        %v1172 = vunpack.c.h.bf16 %v1166
        %v1173 = vunpack.c.l.bf16 %v1167
        %v1174 = vunpack.c.h.bf16 %v1167
        %v1175 = vunpack.c.l.bf16 %v1168
        %v1176 = vunpack.c.h.bf16 %v1168
        %v1177 = vadd.f32 %v1169, %v1116
        %v1178 = vadd.f32 %v1170, %v1130
        %v1179 = vadd.f32 %v1171, %v1144
        %v1180 = vadd.f32 %v1172, %v1158
        %v1181 = vadd.f32 %v1173, %v1118
        %v1182 = vadd.f32 %v1174, %v1132
        %v1183 = vadd.f32 %v1175, %v1146
        %v1184 = vadd.f32 %v1176, %v1160
        %v1185 = vmul.f32 %v1177, 0.5
        %v1186 = vmul.f32 %v1181, 0.5
        %v1187 = vtanh.pop %v1185
        %v1188 = vtanh.pop %v1186
        %v1189 = vmul.f32 %v1187, 0.5
        %v1190 = vmul.f32 %v1188, 0.5
        %v1191 = vadd.f32 %v1189, 0.5
        %v1192 = vadd.f32 %v1190, 0.5
        %v1193 = vmul.f32 %v1178, 0.5
        %v1194 = vmul.f32 %v1182, 0.5
        %v1195 = vtanh.pop %v1193
        %v1196 = vtanh.pop %v1194
        %v1197 = vmul.f32 %v1195, 0.5
        %v1198 = vmul.f32 %v1196, 0.5
        %v1199 = vadd.f32 %v1197, 0.5
        %v1200 = vadd.f32 %v1198, 0.5
        %v1201 = vtanh.pop %v1179
        %v1202 = vtanh.pop %v1183
        %v1203 = vmul.f32 %v1180, 0.5
        %v1204 = vmul.f32 %v1184, 0.5
        %v1205 = vtanh.pop %v1203
        %v1206 = vtanh.pop %v1204
        %v1207 = vmul.f32 %v1205, 0.5
        %v1208 = vmul.f32 %v1206, 0.5
        %v1209 = vadd.f32 %v1207, 0.5
        %v1210 = vadd.f32 %v1208, 0.5
        %v1211 = vmul.f32 %v1199, %v901
        %v1212 = vmul.f32 %v1200, %v902
        %v1213 = vmul.f32 %v1191, %v1201
        %v1214 = vmul.f32 %v1192, %v1202
        %v1215 = vadd.f32 %v1211, %v1213
        %v1216 = vadd.f32 %v1212, %v1214
        %v1217 = vtanh.pop %v1215
        %v1218 = vtanh.pop %v1216
        %v1219 = vmul.f32 %v1209, %v1217
        %v1220 = vmul.f32 %v1210, %v1218
        %s1221 = smul.u32 %s912, 16
        %s1222 = scalar_lea.vmem %s231, %s1221 [#allocation4]
        %1223 = vst [vmem:[%s1222] sm:$0xff] %v1219
        %1224 = vst [vmem:[%s1222 + $0x8] sm:$0xff] %v1220
        %s1225 = smul.u32 %s281, 3
        %s1226 = sadd.s32 %s280, %s1225
        %v1227 = vpack.c.bf16 %v1220, %v1219
        %v1228 = vld [vmem:[%s263] sm:$0xff]
        %v1229 = vld [vmem:[%s263 + $0x8] sm:$0xff]
        %v1230 = vld [vmem:[%s263 + $0x10] sm:$0xff]
        %v1231 = vld [vmem:[%s263 + $0x18] sm:$0xff]
        %v1232 = vld [vmem:[%s263 + $0x20] sm:$0xff]
        %v1233 = vld [vmem:[%s263 + $0x28] sm:$0xff]
        %v1234 = vld [vmem:[%s263 + $0x30] sm:$0xff]
        %v1235 = vld [vmem:[%s263 + $0x38] sm:$0xff]
        %v1236 = vld [vmem:[%s263 + $0x40] sm:$0xff]
        %v1237 = vld [vmem:[%s263 + $0x48] sm:$0xff]
        %v1238 = vld [vmem:[%s263 + $0x50] sm:$0xff]
        %v1239 = vld [vmem:[%s263 + $0x58] sm:$0xff]
        %v1240 = vld [vmem:[%s263 + $0x60] sm:$0xff]
        %v1241 = vld [vmem:[%s263 + $0x68] sm:$0xff]
        %v1242 = vld [vmem:[%s263 + $0x70] sm:$0xff]
        %v1243 = vld [vmem:[%s263 + $0x78] sm:$0xff]
        %v1244 = vld [vmem:[%s263 + $0x80] sm:$0xff]
        %v1245 = vld [vmem:[%s263 + $0x88] sm:$0xff]
        %v1246 = vld [vmem:[%s263 + $0x90] sm:$0xff]
        %v1247 = vld [vmem:[%s263 + $0x98] sm:$0xff]
        %v1248 = vld [vmem:[%s263 + $0xa0] sm:$0xff]
        %v1249 = vld [vmem:[%s263 + $0xa8] sm:$0xff]
        %v1250 = vld [vmem:[%s263 + $0xb0] sm:$0xff]
        %v1251 = vld [vmem:[%s263 + $0xb8] sm:$0xff]
        %v1252 = vld [vmem:[%s263 + $0xc0] sm:$0xff]
        %v1253 = vld [vmem:[%s263 + $0xc8] sm:$0xff]
        %v1254 = vld [vmem:[%s263 + $0xd0] sm:$0xff]
        %v1255 = vld [vmem:[%s263 + $0xd8] sm:$0xff]
        %v1256 = vld [vmem:[%s263 + $0xe0] sm:$0xff]
        %v1257 = vld [vmem:[%s263 + $0xe8] sm:$0xff]
        %v1258 = vld [vmem:[%s263 + $0xf0] sm:$0xff]
        %v1259 = vld [vmem:[%s263 + $0xf8] sm:$0xff]
        %v1292 = vunpack.c.l.b16 %v1228
        %v1293 = vunpack.c.h.b16 %v1228
        %v1294 = vunpack.c.l.b16 %v1229
        %v1295 = vunpack.c.h.b16 %v1229
        %v1296 = vunpack.c.l.b16 %v1230
        %v1297 = vunpack.c.h.b16 %v1230
        %v1298 = vunpack.c.l.b16 %v1231
        %v1299 = vunpack.c.h.b16 %v1231
        %v1300 = vunpack.c.l.b16 %v1232
        %v1301 = vunpack.c.h.b16 %v1232
        %v1302 = vunpack.c.l.b16 %v1233
        %v1303 = vunpack.c.h.b16 %v1233
        %v1304 = vunpack.c.l.b16 %v1234
        %v1305 = vunpack.c.h.b16 %v1234
        %v1306 = vunpack.c.l.b16 %v1235
        %v1307 = vunpack.c.h.b16 %v1235
        %v1308 = vunpack.c.l.b16 %v1236
        %v1309 = vunpack.c.h.b16 %v1236
        %v1310 = vunpack.c.l.b16 %v1237
        %v1311 = vunpack.c.h.b16 %v1237
        %v1312 = vunpack.c.l.b16 %v1238
        %v1313 = vunpack.c.h.b16 %v1238
        %v1314 = vunpack.c.l.b16 %v1239
        %v1315 = vunpack.c.h.b16 %v1239
        %v1316 = vunpack.c.l.b16 %v1240
        %v1317 = vunpack.c.h.b16 %v1240
        %v1318 = vunpack.c.l.b16 %v1241
        %v1319 = vunpack.c.h.b16 %v1241
        %v1320 = vunpack.c.l.b16 %v1242
        %v1321 = vunpack.c.h.b16 %v1242
        %v1322 = vunpack.c.l.b16 %v1243
        %v1323 = vunpack.c.h.b16 %v1243
        %v1324 = vunpack.c.l.b16 %v1244
        %v1325 = vunpack.c.h.b16 %v1244
        %v1326 = vunpack.c.l.b16 %v1245
        %v1327 = vunpack.c.h.b16 %v1245
        %v1328 = vunpack.c.l.b16 %v1246
        %v1329 = vunpack.c.h.b16 %v1246
        %v1330 = vunpack.c.l.b16 %v1247
        %v1331 = vunpack.c.h.b16 %v1247
        %v1332 = vunpack.c.l.b16 %v1248
        %v1333 = vunpack.c.h.b16 %v1248
        %v1334 = vunpack.c.l.b16 %v1249
        %v1335 = vunpack.c.h.b16 %v1249
        %v1336 = vunpack.c.l.b16 %v1250
        %v1337 = vunpack.c.h.b16 %v1250
        %v1338 = vunpack.c.l.b16 %v1251
        %v1339 = vunpack.c.h.b16 %v1251
        %v1340 = vunpack.c.l.b16 %v1252
        %v1341 = vunpack.c.h.b16 %v1252
        %v1342 = vunpack.c.l.b16 %v1253
        %v1343 = vunpack.c.h.b16 %v1253
        %v1344 = vunpack.c.l.b16 %v1254
        %v1345 = vunpack.c.h.b16 %v1254
        %v1346 = vunpack.c.l.b16 %v1255
        %v1347 = vunpack.c.h.b16 %v1255
        %v1348 = vunpack.c.l.b16 %v1256
        %v1349 = vunpack.c.h.b16 %v1256
        %v1350 = vunpack.c.l.b16 %v1257
        %v1351 = vunpack.c.h.b16 %v1257
        %v1352 = vunpack.c.l.b16 %v1258
        %v1353 = vunpack.c.h.b16 %v1258
        %v1354 = vunpack.c.l.b16 %v1259
        %v1355 = vunpack.c.h.b16 %v1259
        %v1356 = vpack.c.b16 %v1296, %v1292
        %v1357 = vpack.c.b16 %v1297, %v1293
        %v1358 = vpack.c.b16 %v1298, %v1294
        %v1359 = vpack.c.b16 %v1299, %v1295
        %v1360 = vpack.c.b16 %v1304, %v1300
        %v1361 = vpack.c.b16 %v1305, %v1301
        %v1362 = vpack.c.b16 %v1306, %v1302
        %v1363 = vpack.c.b16 %v1307, %v1303
        %v1364 = vpack.c.b16 %v1312, %v1308
        %v1365 = vpack.c.b16 %v1313, %v1309
        %v1366 = vpack.c.b16 %v1314, %v1310
        %v1367 = vpack.c.b16 %v1315, %v1311
        %v1368 = vpack.c.b16 %v1320, %v1316
        %v1369 = vpack.c.b16 %v1321, %v1317
        %v1370 = vpack.c.b16 %v1322, %v1318
        %v1371 = vpack.c.b16 %v1323, %v1319
        %v1372 = vpack.c.b16 %v1328, %v1324
        %v1373 = vpack.c.b16 %v1329, %v1325
        %v1374 = vpack.c.b16 %v1330, %v1326
        %v1375 = vpack.c.b16 %v1331, %v1327
        %v1376 = vpack.c.b16 %v1336, %v1332
        %v1377 = vpack.c.b16 %v1337, %v1333
        %v1378 = vpack.c.b16 %v1338, %v1334
        %v1379 = vpack.c.b16 %v1339, %v1335
        %v1380 = vpack.c.b16 %v1344, %v1340
        %v1381 = vpack.c.b16 %v1345, %v1341
        %v1382 = vpack.c.b16 %v1346, %v1342
        %v1383 = vpack.c.b16 %v1347, %v1343
        %v1384 = vpack.c.b16 %v1352, %v1348
        %v1385 = vpack.c.b16 %v1353, %v1349
        %v1386 = vpack.c.b16 %v1354, %v1350
        %v1387 = vpack.c.b16 %v1355, %v1351
        %1420 = vmatpush.bf16.msra.mxu0 %v1384
        %1421 = vmatpush.bf16.msra.mxu0 %v1380
        %1422 = vmatpush.bf16.msra.mxu0 %v1376
        %1423 = vmatpush.bf16.msra.mxu0 %v1372
        %1424 = vmatpush.bf16.msra.mxu0 %v1368
        %1425 = vmatpush.bf16.msra.mxu0 %v1364
        %1426 = vmatpush.bf16.msra.mxu0 %v1360
        %1427 = vmatpush.bf16.msra.mxu0 %v1356
        %1428 = vmatmul.bf16.gmra.mxu0 %v1227
        %v1429 = vpop.f32.mrf.mxu0
        %v1430 = vadd.f32 0.0, %v1429
        %v1431 = vpop.f32.mrf.mxu0
        %v1432 = vadd.f32 0.0, %v1431
        %1433 = vdwg.mxu0
        %1434 = vmatpush.bf16.msra.mxu0 %v1385
        %1435 = vmatpush.bf16.msra.mxu0 %v1381
        %1436 = vmatpush.bf16.msra.mxu0 %v1377
        %1437 = vmatpush.bf16.msra.mxu0 %v1373
        %1438 = vmatpush.bf16.msra.mxu0 %v1369
        %1439 = vmatpush.bf16.msra.mxu0 %v1365
        %1440 = vmatpush.bf16.msra.mxu0 %v1361
        %1441 = vmatpush.bf16.msra.mxu0 %v1357
        %1442 = vmatmul.bf16.gmra.mxu0 %v1227
        %v1443 = vpop.f32.mrf.mxu0
        %v1444 = vadd.f32 0.0, %v1443
        %v1445 = vpop.f32.mrf.mxu0
        %v1446 = vadd.f32 0.0, %v1445
        %1447 = vdwg.mxu0
        %1448 = vmatpush.bf16.msra.mxu0 %v1386
        %1449 = vmatpush.bf16.msra.mxu0 %v1382
        %1450 = vmatpush.bf16.msra.mxu0 %v1378
        %1451 = vmatpush.bf16.msra.mxu0 %v1374
        %1452 = vmatpush.bf16.msra.mxu0 %v1370
        %1453 = vmatpush.bf16.msra.mxu0 %v1366
        %1454 = vmatpush.bf16.msra.mxu0 %v1362
        %1455 = vmatpush.bf16.msra.mxu0 %v1358
        %1456 = vmatmul.bf16.gmra.mxu0 %v1227
        %v1457 = vpop.f32.mrf.mxu0
        %v1458 = vadd.f32 0.0, %v1457
        %v1459 = vpop.f32.mrf.mxu0
        %v1460 = vadd.f32 0.0, %v1459
        %1461 = vdwg.mxu0
        %1462 = vmatpush.bf16.msra.mxu0 %v1387
        %1463 = vmatpush.bf16.msra.mxu0 %v1383
        %1464 = vmatpush.bf16.msra.mxu0 %v1379
        %1465 = vmatpush.bf16.msra.mxu0 %v1375
        %1466 = vmatpush.bf16.msra.mxu0 %v1371
        %1467 = vmatpush.bf16.msra.mxu0 %v1367
        %1468 = vmatpush.bf16.msra.mxu0 %v1363
        %1469 = vmatpush.bf16.msra.mxu0 %v1359
        %1470 = vmatmul.bf16.gmra.mxu0 %v1227
        %v1471 = vpop.f32.mrf.mxu0
        %v1472 = vadd.f32 0.0, %v1471
        %v1473 = vpop.f32.mrf.mxu0
        %v1474 = vadd.f32 0.0, %v1473
        %1475 = vdwg.mxu0
        %s1476 = smul.u32 %s1226, 8
        %s1477 = smul.addr %s1476, 4
        %s1478 = scalar_lea.vmem %s251, %s1477
        %v1479 = vld [vmem:[%s1478] sm:$0xff]
        %v1480 = vld [vmem:[%s1478 + $0x8] sm:$0xff]
        %v1481 = vld [vmem:[%s1478 + $0x10] sm:$0xff]
        %v1482 = vld [vmem:[%s1478 + $0x18] sm:$0xff]
        %v1483 = vunpack.c.l.bf16 %v1479
        %v1484 = vunpack.c.h.bf16 %v1479
        %v1485 = vunpack.c.l.bf16 %v1480
        %v1486 = vunpack.c.h.bf16 %v1480
        %v1487 = vunpack.c.l.bf16 %v1481
        %v1488 = vunpack.c.h.bf16 %v1481
        %v1489 = vunpack.c.l.bf16 %v1482
        %v1490 = vunpack.c.h.bf16 %v1482
        %v1491 = vadd.f32 %v1483, %v1430
        %v1492 = vadd.f32 %v1484, %v1444
        %v1493 = vadd.f32 %v1485, %v1458
        %v1494 = vadd.f32 %v1486, %v1472
        %v1495 = vadd.f32 %v1487, %v1432
        %v1496 = vadd.f32 %v1488, %v1446
        %v1497 = vadd.f32 %v1489, %v1460
        %v1498 = vadd.f32 %v1490, %v1474
        %v1499 = vmul.f32 %v1491, 0.5
        %v1500 = vmul.f32 %v1495, 0.5
        %v1501 = vtanh.pop %v1499
        %v1502 = vtanh.pop %v1500
        %v1503 = vmul.f32 %v1501, 0.5
        %v1504 = vmul.f32 %v1502, 0.5
        %v1505 = vadd.f32 %v1503, 0.5
        %v1506 = vadd.f32 %v1504, 0.5
        %v1507 = vmul.f32 %v1492, 0.5
        %v1508 = vmul.f32 %v1496, 0.5
        %v1509 = vtanh.pop %v1507
        %v1510 = vtanh.pop %v1508
        %v1511 = vmul.f32 %v1509, 0.5
        %v1512 = vmul.f32 %v1510, 0.5
        %v1513 = vadd.f32 %v1511, 0.5
        %v1514 = vadd.f32 %v1512, 0.5
        %v1515 = vtanh.pop %v1493
        %v1516 = vtanh.pop %v1497
        %v1517 = vmul.f32 %v1494, 0.5
        %v1518 = vmul.f32 %v1498, 0.5
        %v1519 = vtanh.pop %v1517
        %v1520 = vtanh.pop %v1518
        %v1521 = vmul.f32 %v1519, 0.5
        %v1522 = vmul.f32 %v1520, 0.5
        %v1523 = vadd.f32 %v1521, 0.5
        %v1524 = vadd.f32 %v1522, 0.5
        %v1525 = vmul.f32 %v1513, %v1215
        %v1526 = vmul.f32 %v1514, %v1216
        %v1527 = vmul.f32 %v1505, %v1515
        %v1528 = vmul.f32 %v1506, %v1516
        %v1529 = vadd.f32 %v1525, %v1527
        %v1530 = vadd.f32 %v1526, %v1528
        %v1531 = vtanh.pop %v1529
        %v1532 = vtanh.pop %v1530
        %v1533 = vmul.f32 %v1523, %v1531
        %v1534 = vmul.f32 %v1524, %v1532
        %s1535 = smul.u32 %s1226, 16
        %s1536 = scalar_lea.vmem %s231, %s1535 [#allocation4]
        %1537 = vst [vmem:[%s1536] sm:$0xff] %v1533
        %1538 = vst [vmem:[%s1536 + $0x8] sm:$0xff] %v1534
        %s1539 = smul.u32 %s281, 4
        %s1540 = sadd.s32 %s280, %s1539
        %v1541 = vpack.c.bf16 %v1534, %v1533
        %v1542 = vld [vmem:[%s263] sm:$0xff]
        %v1543 = vld [vmem:[%s263 + $0x8] sm:$0xff]
        %v1544 = vld [vmem:[%s263 + $0x10] sm:$0xff]
        %v1545 = vld [vmem:[%s263 + $0x18] sm:$0xff]
        %v1546 = vld [vmem:[%s263 + $0x20] sm:$0xff]
        %v1547 = vld [vmem:[%s263 + $0x28] sm:$0xff]
        %v1548 = vld [vmem:[%s263 + $0x30] sm:$0xff]
        %v1549 = vld [vmem:[%s263 + $0x38] sm:$0xff]
        %v1550 = vld [vmem:[%s263 + $0x40] sm:$0xff]
        %v1551 = vld [vmem:[%s263 + $0x48] sm:$0xff]
        %v1552 = vld [vmem:[%s263 + $0x50] sm:$0xff]
        %v1553 = vld [vmem:[%s263 + $0x58] sm:$0xff]
        %v1554 = vld [vmem:[%s263 + $0x60] sm:$0xff]
        %v1555 = vld [vmem:[%s263 + $0x68] sm:$0xff]
        %v1556 = vld [vmem:[%s263 + $0x70] sm:$0xff]
        %v1557 = vld [vmem:[%s263 + $0x78] sm:$0xff]
        %v1558 = vld [vmem:[%s263 + $0x80] sm:$0xff]
        %v1559 = vld [vmem:[%s263 + $0x88] sm:$0xff]
        %v1560 = vld [vmem:[%s263 + $0x90] sm:$0xff]
        %v1561 = vld [vmem:[%s263 + $0x98] sm:$0xff]
        %v1562 = vld [vmem:[%s263 + $0xa0] sm:$0xff]
        %v1563 = vld [vmem:[%s263 + $0xa8] sm:$0xff]
        %v1564 = vld [vmem:[%s263 + $0xb0] sm:$0xff]
        %v1565 = vld [vmem:[%s263 + $0xb8] sm:$0xff]
        %v1566 = vld [vmem:[%s263 + $0xc0] sm:$0xff]
        %v1567 = vld [vmem:[%s263 + $0xc8] sm:$0xff]
        %v1568 = vld [vmem:[%s263 + $0xd0] sm:$0xff]
        %v1569 = vld [vmem:[%s263 + $0xd8] sm:$0xff]
        %v1570 = vld [vmem:[%s263 + $0xe0] sm:$0xff]
        %v1571 = vld [vmem:[%s263 + $0xe8] sm:$0xff]
        %v1572 = vld [vmem:[%s263 + $0xf0] sm:$0xff]
        %v1573 = vld [vmem:[%s263 + $0xf8] sm:$0xff]
        %v1606 = vunpack.c.l.b16 %v1542
        %v1607 = vunpack.c.h.b16 %v1542
        %v1608 = vunpack.c.l.b16 %v1543
        %v1609 = vunpack.c.h.b16 %v1543
        %v1610 = vunpack.c.l.b16 %v1544
        %v1611 = vunpack.c.h.b16 %v1544
        %v1612 = vunpack.c.l.b16 %v1545
        %v1613 = vunpack.c.h.b16 %v1545
        %v1614 = vunpack.c.l.b16 %v1546
        %v1615 = vunpack.c.h.b16 %v1546
        %v1616 = vunpack.c.l.b16 %v1547
        %v1617 = vunpack.c.h.b16 %v1547
        %v1618 = vunpack.c.l.b16 %v1548
        %v1619 = vunpack.c.h.b16 %v1548
        %v1620 = vunpack.c.l.b16 %v1549
        %v1621 = vunpack.c.h.b16 %v1549
        %v1622 = vunpack.c.l.b16 %v1550
        %v1623 = vunpack.c.h.b16 %v1550
        %v1624 = vunpack.c.l.b16 %v1551
        %v1625 = vunpack.c.h.b16 %v1551
        %v1626 = vunpack.c.l.b16 %v1552
        %v1627 = vunpack.c.h.b16 %v1552
        %v1628 = vunpack.c.l.b16 %v1553
        %v1629 = vunpack.c.h.b16 %v1553
        %v1630 = vunpack.c.l.b16 %v1554
        %v1631 = vunpack.c.h.b16 %v1554
        %v1632 = vunpack.c.l.b16 %v1555
        %v1633 = vunpack.c.h.b16 %v1555
        %v1634 = vunpack.c.l.b16 %v1556
        %v1635 = vunpack.c.h.b16 %v1556
        %v1636 = vunpack.c.l.b16 %v1557
        %v1637 = vunpack.c.h.b16 %v1557
        %v1638 = vunpack.c.l.b16 %v1558
        %v1639 = vunpack.c.h.b16 %v1558
        %v1640 = vunpack.c.l.b16 %v1559
        %v1641 = vunpack.c.h.b16 %v1559
        %v1642 = vunpack.c.l.b16 %v1560
        %v1643 = vunpack.c.h.b16 %v1560
        %v1644 = vunpack.c.l.b16 %v1561
        %v1645 = vunpack.c.h.b16 %v1561
        %v1646 = vunpack.c.l.b16 %v1562
        %v1647 = vunpack.c.h.b16 %v1562
        %v1648 = vunpack.c.l.b16 %v1563
        %v1649 = vunpack.c.h.b16 %v1563
        %v1650 = vunpack.c.l.b16 %v1564
        %v1651 = vunpack.c.h.b16 %v1564
        %v1652 = vunpack.c.l.b16 %v1565
        %v1653 = vunpack.c.h.b16 %v1565
        %v1654 = vunpack.c.l.b16 %v1566
        %v1655 = vunpack.c.h.b16 %v1566
        %v1656 = vunpack.c.l.b16 %v1567
        %v1657 = vunpack.c.h.b16 %v1567
        %v1658 = vunpack.c.l.b16 %v1568
        %v1659 = vunpack.c.h.b16 %v1568
        %v1660 = vunpack.c.l.b16 %v1569
        %v1661 = vunpack.c.h.b16 %v1569
        %v1662 = vunpack.c.l.b16 %v1570
        %v1663 = vunpack.c.h.b16 %v1570
        %v1664 = vunpack.c.l.b16 %v1571
        %v1665 = vunpack.c.h.b16 %v1571
        %v1666 = vunpack.c.l.b16 %v1572
        %v1667 = vunpack.c.h.b16 %v1572
        %v1668 = vunpack.c.l.b16 %v1573
        %v1669 = vunpack.c.h.b16 %v1573
        %v1670 = vpack.c.b16 %v1610, %v1606
        %v1671 = vpack.c.b16 %v1611, %v1607
        %v1672 = vpack.c.b16 %v1612, %v1608
        %v1673 = vpack.c.b16 %v1613, %v1609
        %v1674 = vpack.c.b16 %v1618, %v1614
        %v1675 = vpack.c.b16 %v1619, %v1615
        %v1676 = vpack.c.b16 %v1620, %v1616
        %v1677 = vpack.c.b16 %v1621, %v1617
        %v1678 = vpack.c.b16 %v1626, %v1622
        %v1679 = vpack.c.b16 %v1627, %v1623
        %v1680 = vpack.c.b16 %v1628, %v1624
        %v1681 = vpack.c.b16 %v1629, %v1625
        %v1682 = vpack.c.b16 %v1634, %v1630
        %v1683 = vpack.c.b16 %v1635, %v1631
        %v1684 = vpack.c.b16 %v1636, %v1632
        %v1685 = vpack.c.b16 %v1637, %v1633
        %v1686 = vpack.c.b16 %v1642, %v1638
        %v1687 = vpack.c.b16 %v1643, %v1639
        %v1688 = vpack.c.b16 %v1644, %v1640
        %v1689 = vpack.c.b16 %v1645, %v1641
        %v1690 = vpack.c.b16 %v1650, %v1646
        %v1691 = vpack.c.b16 %v1651, %v1647
        %v1692 = vpack.c.b16 %v1652, %v1648
        %v1693 = vpack.c.b16 %v1653, %v1649
        %v1694 = vpack.c.b16 %v1658, %v1654
        %v1695 = vpack.c.b16 %v1659, %v1655
        %v1696 = vpack.c.b16 %v1660, %v1656
        %v1697 = vpack.c.b16 %v1661, %v1657
        %v1698 = vpack.c.b16 %v1666, %v1662
        %v1699 = vpack.c.b16 %v1667, %v1663
        %v1700 = vpack.c.b16 %v1668, %v1664
        %v1701 = vpack.c.b16 %v1669, %v1665
        %1734 = vmatpush.bf16.msra.mxu0 %v1698
        %1735 = vmatpush.bf16.msra.mxu0 %v1694
        %1736 = vmatpush.bf16.msra.mxu0 %v1690
        %1737 = vmatpush.bf16.msra.mxu0 %v1686
        %1738 = vmatpush.bf16.msra.mxu0 %v1682
        %1739 = vmatpush.bf16.msra.mxu0 %v1678
        %1740 = vmatpush.bf16.msra.mxu0 %v1674
        %1741 = vmatpush.bf16.msra.mxu0 %v1670
        %1742 = vmatmul.bf16.gmra.mxu0 %v1541
        %v1743 = vpop.f32.mrf.mxu0
        %v1744 = vadd.f32 0.0, %v1743
        %v1745 = vpop.f32.mrf.mxu0
        %v1746 = vadd.f32 0.0, %v1745
        %1747 = vdwg.mxu0
        %1748 = vmatpush.bf16.msra.mxu0 %v1699
        %1749 = vmatpush.bf16.msra.mxu0 %v1695
        %1750 = vmatpush.bf16.msra.mxu0 %v1691
        %1751 = vmatpush.bf16.msra.mxu0 %v1687
        %1752 = vmatpush.bf16.msra.mxu0 %v1683
        %1753 = vmatpush.bf16.msra.mxu0 %v1679
        %1754 = vmatpush.bf16.msra.mxu0 %v1675
        %1755 = vmatpush.bf16.msra.mxu0 %v1671
        %1756 = vmatmul.bf16.gmra.mxu0 %v1541
        %v1757 = vpop.f32.mrf.mxu0
        %v1758 = vadd.f32 0.0, %v1757
        %v1759 = vpop.f32.mrf.mxu0
        %v1760 = vadd.f32 0.0, %v1759
        %1761 = vdwg.mxu0
        %1762 = vmatpush.bf16.msra.mxu0 %v1700
        %1763 = vmatpush.bf16.msra.mxu0 %v1696
        %1764 = vmatpush.bf16.msra.mxu0 %v1692
        %1765 = vmatpush.bf16.msra.mxu0 %v1688
        %1766 = vmatpush.bf16.msra.mxu0 %v1684
        %1767 = vmatpush.bf16.msra.mxu0 %v1680
        %1768 = vmatpush.bf16.msra.mxu0 %v1676
        %1769 = vmatpush.bf16.msra.mxu0 %v1672
        %1770 = vmatmul.bf16.gmra.mxu0 %v1541
        %v1771 = vpop.f32.mrf.mxu0
        %v1772 = vadd.f32 0.0, %v1771
        %v1773 = vpop.f32.mrf.mxu0
        %v1774 = vadd.f32 0.0, %v1773
        %1775 = vdwg.mxu0
        %1776 = vmatpush.bf16.msra.mxu0 %v1701
        %1777 = vmatpush.bf16.msra.mxu0 %v1697
        %1778 = vmatpush.bf16.msra.mxu0 %v1693
        %1779 = vmatpush.bf16.msra.mxu0 %v1689
        %1780 = vmatpush.bf16.msra.mxu0 %v1685
        %1781 = vmatpush.bf16.msra.mxu0 %v1681
        %1782 = vmatpush.bf16.msra.mxu0 %v1677
        %1783 = vmatpush.bf16.msra.mxu0 %v1673
        %1784 = vmatmul.bf16.gmra.mxu0 %v1541
        %v1785 = vpop.f32.mrf.mxu0
        %v1786 = vadd.f32 0.0, %v1785
        %v1787 = vpop.f32.mrf.mxu0
        %v1788 = vadd.f32 0.0, %v1787
        %1789 = vdwg.mxu0
        %s1790 = smul.u32 %s1540, 8
        %s1791 = smul.addr %s1790, 4
        %s1792 = scalar_lea.vmem %s251, %s1791
        %v1793 = vld [vmem:[%s1792] sm:$0xff]
        %v1794 = vld [vmem:[%s1792 + $0x8] sm:$0xff]
        %v1795 = vld [vmem:[%s1792 + $0x10] sm:$0xff]
        %v1796 = vld [vmem:[%s1792 + $0x18] sm:$0xff]
        %v1797 = vunpack.c.l.bf16 %v1793
        %v1798 = vunpack.c.h.bf16 %v1793
        %v1799 = vunpack.c.l.bf16 %v1794
        %v1800 = vunpack.c.h.bf16 %v1794
        %v1801 = vunpack.c.l.bf16 %v1795
        %v1802 = vunpack.c.h.bf16 %v1795
        %v1803 = vunpack.c.l.bf16 %v1796
        %v1804 = vunpack.c.h.bf16 %v1796
        %v1805 = vadd.f32 %v1797, %v1744
        %v1806 = vadd.f32 %v1798, %v1758
        %v1807 = vadd.f32 %v1799, %v1772
        %v1808 = vadd.f32 %v1800, %v1786
        %v1809 = vadd.f32 %v1801, %v1746
        %v1810 = vadd.f32 %v1802, %v1760
        %v1811 = vadd.f32 %v1803, %v1774
        %v1812 = vadd.f32 %v1804, %v1788
        %v1813 = vmul.f32 %v1805, 0.5
        %v1814 = vmul.f32 %v1809, 0.5
        %v1815 = vtanh.pop %v1813
        %v1816 = vtanh.pop %v1814
        %v1817 = vmul.f32 %v1815, 0.5
        %v1818 = vmul.f32 %v1816, 0.5
        %v1819 = vadd.f32 %v1817, 0.5
        %v1820 = vadd.f32 %v1818, 0.5
        %v1821 = vmul.f32 %v1806, 0.5
        %v1822 = vmul.f32 %v1810, 0.5
        %v1823 = vtanh.pop %v1821
        %v1824 = vtanh.pop %v1822
        %v1825 = vmul.f32 %v1823, 0.5
        %v1826 = vmul.f32 %v1824, 0.5
        %v1827 = vadd.f32 %v1825, 0.5
        %v1828 = vadd.f32 %v1826, 0.5
        %v1829 = vtanh.pop %v1807
        %v1830 = vtanh.pop %v1811
        %v1831 = vmul.f32 %v1808, 0.5
        %v1832 = vmul.f32 %v1812, 0.5
        %v1833 = vtanh.pop %v1831
        %v1834 = vtanh.pop %v1832
        %v1835 = vmul.f32 %v1833, 0.5
        %v1836 = vmul.f32 %v1834, 0.5
        %v1837 = vadd.f32 %v1835, 0.5
        %v1838 = vadd.f32 %v1836, 0.5
        %v1839 = vmul.f32 %v1827, %v1529
        %v1840 = vmul.f32 %v1828, %v1530
        %v1841 = vmul.f32 %v1819, %v1829
        %v1842 = vmul.f32 %v1820, %v1830
        %v1843 = vadd.f32 %v1839, %v1841
        %v1844 = vadd.f32 %v1840, %v1842
        %v1845 = vtanh.pop %v1843
        %v1846 = vtanh.pop %v1844
        %v1847 = vmul.f32 %v1837, %v1845
        %v1848 = vmul.f32 %v1838, %v1846
        %s1849 = smul.u32 %s1540, 16
        %s1850 = scalar_lea.vmem %s231, %s1849 [#allocation4]
        %1851 = vst [vmem:[%s1850] sm:$0xff] %v1847
        %1852 = vst [vmem:[%s1850 + $0x8] sm:$0xff] %v1848
        %s1853 = smul.u32 %s281, 5
        %s1854 = sadd.s32 %s280, %s1853
        %v1855 = vpack.c.bf16 %v1848, %v1847
        %v1856 = vld [vmem:[%s263] sm:$0xff]
        %v1857 = vld [vmem:[%s263 + $0x8] sm:$0xff]
        %v1858 = vld [vmem:[%s263 + $0x10] sm:$0xff]
        %v1859 = vld [vmem:[%s263 + $0x18] sm:$0xff]
        %v1860 = vld [vmem:[%s263 + $0x20] sm:$0xff]
        %v1861 = vld [vmem:[%s263 + $0x28] sm:$0xff]
        %v1862 = vld [vmem:[%s263 + $0x30] sm:$0xff]
        %v1863 = vld [vmem:[%s263 + $0x38] sm:$0xff]
        %v1864 = vld [vmem:[%s263 + $0x40] sm:$0xff]
        %v1865 = vld [vmem:[%s263 + $0x48] sm:$0xff]
        %v1866 = vld [vmem:[%s263 + $0x50] sm:$0xff]
        %v1867 = vld [vmem:[%s263 + $0x58] sm:$0xff]
        %v1868 = vld [vmem:[%s263 + $0x60] sm:$0xff]
        %v1869 = vld [vmem:[%s263 + $0x68] sm:$0xff]
        %v1870 = vld [vmem:[%s263 + $0x70] sm:$0xff]
        %v1871 = vld [vmem:[%s263 + $0x78] sm:$0xff]
        %v1872 = vld [vmem:[%s263 + $0x80] sm:$0xff]
        %v1873 = vld [vmem:[%s263 + $0x88] sm:$0xff]
        %v1874 = vld [vmem:[%s263 + $0x90] sm:$0xff]
        %v1875 = vld [vmem:[%s263 + $0x98] sm:$0xff]
        %v1876 = vld [vmem:[%s263 + $0xa0] sm:$0xff]
        %v1877 = vld [vmem:[%s263 + $0xa8] sm:$0xff]
        %v1878 = vld [vmem:[%s263 + $0xb0] sm:$0xff]
        %v1879 = vld [vmem:[%s263 + $0xb8] sm:$0xff]
        %v1880 = vld [vmem:[%s263 + $0xc0] sm:$0xff]
        %v1881 = vld [vmem:[%s263 + $0xc8] sm:$0xff]
        %v1882 = vld [vmem:[%s263 + $0xd0] sm:$0xff]
        %v1883 = vld [vmem:[%s263 + $0xd8] sm:$0xff]
        %v1884 = vld [vmem:[%s263 + $0xe0] sm:$0xff]
        %v1885 = vld [vmem:[%s263 + $0xe8] sm:$0xff]
        %v1886 = vld [vmem:[%s263 + $0xf0] sm:$0xff]
        %v1887 = vld [vmem:[%s263 + $0xf8] sm:$0xff]
        %v1920 = vunpack.c.l.b16 %v1856
        %v1921 = vunpack.c.h.b16 %v1856
        %v1922 = vunpack.c.l.b16 %v1857
        %v1923 = vunpack.c.h.b16 %v1857
        %v1924 = vunpack.c.l.b16 %v1858
        %v1925 = vunpack.c.h.b16 %v1858
        %v1926 = vunpack.c.l.b16 %v1859
        %v1927 = vunpack.c.h.b16 %v1859
        %v1928 = vunpack.c.l.b16 %v1860
        %v1929 = vunpack.c.h.b16 %v1860
        %v1930 = vunpack.c.l.b16 %v1861
        %v1931 = vunpack.c.h.b16 %v1861
        %v1932 = vunpack.c.l.b16 %v1862
        %v1933 = vunpack.c.h.b16 %v1862
        %v1934 = vunpack.c.l.b16 %v1863
        %v1935 = vunpack.c.h.b16 %v1863
        %v1936 = vunpack.c.l.b16 %v1864
        %v1937 = vunpack.c.h.b16 %v1864
        %v1938 = vunpack.c.l.b16 %v1865
        %v1939 = vunpack.c.h.b16 %v1865
        %v1940 = vunpack.c.l.b16 %v1866
        %v1941 = vunpack.c.h.b16 %v1866
        %v1942 = vunpack.c.l.b16 %v1867
        %v1943 = vunpack.c.h.b16 %v1867
        %v1944 = vunpack.c.l.b16 %v1868
        %v1945 = vunpack.c.h.b16 %v1868
        %v1946 = vunpack.c.l.b16 %v1869
        %v1947 = vunpack.c.h.b16 %v1869
        %v1948 = vunpack.c.l.b16 %v1870
        %v1949 = vunpack.c.h.b16 %v1870
        %v1950 = vunpack.c.l.b16 %v1871
        %v1951 = vunpack.c.h.b16 %v1871
        %v1952 = vunpack.c.l.b16 %v1872
        %v1953 = vunpack.c.h.b16 %v1872
        %v1954 = vunpack.c.l.b16 %v1873
        %v1955 = vunpack.c.h.b16 %v1873
        %v1956 = vunpack.c.l.b16 %v1874
        %v1957 = vunpack.c.h.b16 %v1874
        %v1958 = vunpack.c.l.b16 %v1875
        %v1959 = vunpack.c.h.b16 %v1875
        %v1960 = vunpack.c.l.b16 %v1876
        %v1961 = vunpack.c.h.b16 %v1876
        %v1962 = vunpack.c.l.b16 %v1877
        %v1963 = vunpack.c.h.b16 %v1877
        %v1964 = vunpack.c.l.b16 %v1878
        %v1965 = vunpack.c.h.b16 %v1878
        %v1966 = vunpack.c.l.b16 %v1879
        %v1967 = vunpack.c.h.b16 %v1879
        %v1968 = vunpack.c.l.b16 %v1880
        %v1969 = vunpack.c.h.b16 %v1880
        %v1970 = vunpack.c.l.b16 %v1881
        %v1971 = vunpack.c.h.b16 %v1881
        %v1972 = vunpack.c.l.b16 %v1882
        %v1973 = vunpack.c.h.b16 %v1882
        %v1974 = vunpack.c.l.b16 %v1883
        %v1975 = vunpack.c.h.b16 %v1883
        %v1976 = vunpack.c.l.b16 %v1884
        %v1977 = vunpack.c.h.b16 %v1884
        %v1978 = vunpack.c.l.b16 %v1885
        %v1979 = vunpack.c.h.b16 %v1885
        %v1980 = vunpack.c.l.b16 %v1886
        %v1981 = vunpack.c.h.b16 %v1886
        %v1982 = vunpack.c.l.b16 %v1887
        %v1983 = vunpack.c.h.b16 %v1887
        %v1984 = vpack.c.b16 %v1924, %v1920
        %v1985 = vpack.c.b16 %v1925, %v1921
        %v1986 = vpack.c.b16 %v1926, %v1922
        %v1987 = vpack.c.b16 %v1927, %v1923
        %v1988 = vpack.c.b16 %v1932, %v1928
        %v1989 = vpack.c.b16 %v1933, %v1929
        %v1990 = vpack.c.b16 %v1934, %v1930
        %v1991 = vpack.c.b16 %v1935, %v1931
        %v1992 = vpack.c.b16 %v1940, %v1936
        %v1993 = vpack.c.b16 %v1941, %v1937
        %v1994 = vpack.c.b16 %v1942, %v1938
        %v1995 = vpack.c.b16 %v1943, %v1939
        %v1996 = vpack.c.b16 %v1948, %v1944
        %v1997 = vpack.c.b16 %v1949, %v1945
        %v1998 = vpack.c.b16 %v1950, %v1946
        %v1999 = vpack.c.b16 %v1951, %v1947
        %v2000 = vpack.c.b16 %v1956, %v1952
        %v2001 = vpack.c.b16 %v1957, %v1953
        %v2002 = vpack.c.b16 %v1958, %v1954
        %v2003 = vpack.c.b16 %v1959, %v1955
        %v2004 = vpack.c.b16 %v1964, %v1960
        %v2005 = vpack.c.b16 %v1965, %v1961
        %v2006 = vpack.c.b16 %v1966, %v1962
        %v2007 = vpack.c.b16 %v1967, %v1963
        %v2008 = vpack.c.b16 %v1972, %v1968
        %v2009 = vpack.c.b16 %v1973, %v1969
        %v2010 = vpack.c.b16 %v1974, %v1970
        %v2011 = vpack.c.b16 %v1975, %v1971
        %v2012 = vpack.c.b16 %v1980, %v1976
        %v2013 = vpack.c.b16 %v1981, %v1977
        %v2014 = vpack.c.b16 %v1982, %v1978
        %v2015 = vpack.c.b16 %v1983, %v1979
        %2048 = vmatpush.bf16.msra.mxu0 %v2012
        %2049 = vmatpush.bf16.msra.mxu0 %v2008
        %2050 = vmatpush.bf16.msra.mxu0 %v2004
        %2051 = vmatpush.bf16.msra.mxu0 %v2000
        %2052 = vmatpush.bf16.msra.mxu0 %v1996
        %2053 = vmatpush.bf16.msra.mxu0 %v1992
        %2054 = vmatpush.bf16.msra.mxu0 %v1988
        %2055 = vmatpush.bf16.msra.mxu0 %v1984
        %2056 = vmatmul.bf16.gmra.mxu0 %v1855
        %v2057 = vpop.f32.mrf.mxu0
        %v2058 = vadd.f32 0.0, %v2057
        %v2059 = vpop.f32.mrf.mxu0
        %v2060 = vadd.f32 0.0, %v2059
        %2061 = vdwg.mxu0
        %2062 = vmatpush.bf16.msra.mxu0 %v2013
        %2063 = vmatpush.bf16.msra.mxu0 %v2009
        %2064 = vmatpush.bf16.msra.mxu0 %v2005
        %2065 = vmatpush.bf16.msra.mxu0 %v2001
        %2066 = vmatpush.bf16.msra.mxu0 %v1997
        %2067 = vmatpush.bf16.msra.mxu0 %v1993
        %2068 = vmatpush.bf16.msra.mxu0 %v1989
        %2069 = vmatpush.bf16.msra.mxu0 %v1985
        %2070 = vmatmul.bf16.gmra.mxu0 %v1855
        %v2071 = vpop.f32.mrf.mxu0
        %v2072 = vadd.f32 0.0, %v2071
        %v2073 = vpop.f32.mrf.mxu0
        %v2074 = vadd.f32 0.0, %v2073
        %2075 = vdwg.mxu0
        %2076 = vmatpush.bf16.msra.mxu0 %v2014
        %2077 = vmatpush.bf16.msra.mxu0 %v2010
        %2078 = vmatpush.bf16.msra.mxu0 %v2006
        %2079 = vmatpush.bf16.msra.mxu0 %v2002
        %2080 = vmatpush.bf16.msra.mxu0 %v1998
        %2081 = vmatpush.bf16.msra.mxu0 %v1994
        %2082 = vmatpush.bf16.msra.mxu0 %v1990
        %2083 = vmatpush.bf16.msra.mxu0 %v1986
        %2084 = vmatmul.bf16.gmra.mxu0 %v1855
        %v2085 = vpop.f32.mrf.mxu0
        %v2086 = vadd.f32 0.0, %v2085
        %v2087 = vpop.f32.mrf.mxu0
        %v2088 = vadd.f32 0.0, %v2087
        %2089 = vdwg.mxu0
        %2090 = vmatpush.bf16.msra.mxu0 %v2015
        %2091 = vmatpush.bf16.msra.mxu0 %v2011
        %2092 = vmatpush.bf16.msra.mxu0 %v2007
        %2093 = vmatpush.bf16.msra.mxu0 %v2003
        %2094 = vmatpush.bf16.msra.mxu0 %v1999
        %2095 = vmatpush.bf16.msra.mxu0 %v1995
        %2096 = vmatpush.bf16.msra.mxu0 %v1991
        %2097 = vmatpush.bf16.msra.mxu0 %v1987
        %2098 = vmatmul.bf16.gmra.mxu0 %v1855
        %v2099 = vpop.f32.mrf.mxu0
        %v2100 = vadd.f32 0.0, %v2099
        %v2101 = vpop.f32.mrf.mxu0
        %v2102 = vadd.f32 0.0, %v2101
        %2103 = vdwg.mxu0
        %s2104 = smul.u32 %s1854, 8
        %s2105 = smul.addr %s2104, 4
        %s2106 = scalar_lea.vmem %s251, %s2105
        %v2107 = vld [vmem:[%s2106] sm:$0xff]
        %v2108 = vld [vmem:[%s2106 + $0x8] sm:$0xff]
        %v2109 = vld [vmem:[%s2106 + $0x10] sm:$0xff]
        %v2110 = vld [vmem:[%s2106 + $0x18] sm:$0xff]
        %v2111 = vunpack.c.l.bf16 %v2107
        %v2112 = vunpack.c.h.bf16 %v2107
        %v2113 = vunpack.c.l.bf16 %v2108
        %v2114 = vunpack.c.h.bf16 %v2108
        %v2115 = vunpack.c.l.bf16 %v2109
        %v2116 = vunpack.c.h.bf16 %v2109
        %v2117 = vunpack.c.l.bf16 %v2110
        %v2118 = vunpack.c.h.bf16 %v2110
        %v2119 = vadd.f32 %v2111, %v2058
        %v2120 = vadd.f32 %v2112, %v2072
        %v2121 = vadd.f32 %v2113, %v2086
        %v2122 = vadd.f32 %v2114, %v2100
        %v2123 = vadd.f32 %v2115, %v2060
        %v2124 = vadd.f32 %v2116, %v2074
        %v2125 = vadd.f32 %v2117, %v2088
        %v2126 = vadd.f32 %v2118, %v2102
        %v2127 = vmul.f32 %v2119, 0.5
        %v2128 = vmul.f32 %v2123, 0.5
        %v2129 = vtanh.pop %v2127
        %v2130 = vtanh.pop %v2128
        %v2131 = vmul.f32 %v2129, 0.5
        %v2132 = vmul.f32 %v2130, 0.5
        %v2133 = vadd.f32 %v2131, 0.5
        %v2134 = vadd.f32 %v2132, 0.5
        %v2135 = vmul.f32 %v2120, 0.5
        %v2136 = vmul.f32 %v2124, 0.5
        %v2137 = vtanh.pop %v2135
        %v2138 = vtanh.pop %v2136
        %v2139 = vmul.f32 %v2137, 0.5
        %v2140 = vmul.f32 %v2138, 0.5
        %v2141 = vadd.f32 %v2139, 0.5
        %v2142 = vadd.f32 %v2140, 0.5
        %v2143 = vtanh.pop %v2121
        %v2144 = vtanh.pop %v2125
        %v2145 = vmul.f32 %v2122, 0.5
        %v2146 = vmul.f32 %v2126, 0.5
        %v2147 = vtanh.pop %v2145
        %v2148 = vtanh.pop %v2146
        %v2149 = vmul.f32 %v2147, 0.5
        %v2150 = vmul.f32 %v2148, 0.5
        %v2151 = vadd.f32 %v2149, 0.5
        %v2152 = vadd.f32 %v2150, 0.5
        %v2153 = vmul.f32 %v2141, %v1843
        %v2154 = vmul.f32 %v2142, %v1844
        %v2155 = vmul.f32 %v2133, %v2143
        %v2156 = vmul.f32 %v2134, %v2144
        %v2157 = vadd.f32 %v2153, %v2155
        %v2158 = vadd.f32 %v2154, %v2156
        %v2159 = vtanh.pop %v2157
        %v2160 = vtanh.pop %v2158
        %v2161 = vmul.f32 %v2151, %v2159
        %v2162 = vmul.f32 %v2152, %v2160
        %s2163 = smul.u32 %s1854, 16
        %s2164 = scalar_lea.vmem %s231, %s2163 [#allocation4]
        %2165 = vst [vmem:[%s2164] sm:$0xff] %v2161
        %2166 = vst [vmem:[%s2164 + $0x8] sm:$0xff] %v2162
        %s2167 = smul.u32 %s281, 6
        %s2168 = sadd.s32 %s280, %s2167
        %v2169 = vpack.c.bf16 %v2162, %v2161
        %v2170 = vld [vmem:[%s263] sm:$0xff]
        %v2171 = vld [vmem:[%s263 + $0x8] sm:$0xff]
        %v2172 = vld [vmem:[%s263 + $0x10] sm:$0xff]
        %v2173 = vld [vmem:[%s263 + $0x18] sm:$0xff]
        %v2174 = vld [vmem:[%s263 + $0x20] sm:$0xff]
        %v2175 = vld [vmem:[%s263 + $0x28] sm:$0xff]
        %v2176 = vld [vmem:[%s263 + $0x30] sm:$0xff]
        %v2177 = vld [vmem:[%s263 + $0x38] sm:$0xff]
        %v2178 = vld [vmem:[%s263 + $0x40] sm:$0xff]
        %v2179 = vld [vmem:[%s263 + $0x48] sm:$0xff]
        %v2180 = vld [vmem:[%s263 + $0x50] sm:$0xff]
        %v2181 = vld [vmem:[%s263 + $0x58] sm:$0xff]
        %v2182 = vld [vmem:[%s263 + $0x60] sm:$0xff]
        %v2183 = vld [vmem:[%s263 + $0x68] sm:$0xff]
        %v2184 = vld [vmem:[%s263 + $0x70] sm:$0xff]
        %v2185 = vld [vmem:[%s263 + $0x78] sm:$0xff]
        %v2186 = vld [vmem:[%s263 + $0x80] sm:$0xff]
        %v2187 = vld [vmem:[%s263 + $0x88] sm:$0xff]
        %v2188 = vld [vmem:[%s263 + $0x90] sm:$0xff]
        %v2189 = vld [vmem:[%s263 + $0x98] sm:$0xff]
        %v2190 = vld [vmem:[%s263 + $0xa0] sm:$0xff]
        %v2191 = vld [vmem:[%s263 + $0xa8] sm:$0xff]
        %v2192 = vld [vmem:[%s263 + $0xb0] sm:$0xff]
        %v2193 = vld [vmem:[%s263 + $0xb8] sm:$0xff]
        %v2194 = vld [vmem:[%s263 + $0xc0] sm:$0xff]
        %v2195 = vld [vmem:[%s263 + $0xc8] sm:$0xff]
        %v2196 = vld [vmem:[%s263 + $0xd0] sm:$0xff]
        %v2197 = vld [vmem:[%s263 + $0xd8] sm:$0xff]
        %v2198 = vld [vmem:[%s263 + $0xe0] sm:$0xff]
        %v2199 = vld [vmem:[%s263 + $0xe8] sm:$0xff]
        %v2200 = vld [vmem:[%s263 + $0xf0] sm:$0xff]
        %v2201 = vld [vmem:[%s263 + $0xf8] sm:$0xff]
        %v2234 = vunpack.c.l.b16 %v2170
        %v2235 = vunpack.c.h.b16 %v2170
        %v2236 = vunpack.c.l.b16 %v2171
        %v2237 = vunpack.c.h.b16 %v2171
        %v2238 = vunpack.c.l.b16 %v2172
        %v2239 = vunpack.c.h.b16 %v2172
        %v2240 = vunpack.c.l.b16 %v2173
        %v2241 = vunpack.c.h.b16 %v2173
        %v2242 = vunpack.c.l.b16 %v2174
        %v2243 = vunpack.c.h.b16 %v2174
        %v2244 = vunpack.c.l.b16 %v2175
        %v2245 = vunpack.c.h.b16 %v2175
        %v2246 = vunpack.c.l.b16 %v2176
        %v2247 = vunpack.c.h.b16 %v2176
        %v2248 = vunpack.c.l.b16 %v2177
        %v2249 = vunpack.c.h.b16 %v2177
        %v2250 = vunpack.c.l.b16 %v2178
        %v2251 = vunpack.c.h.b16 %v2178
        %v2252 = vunpack.c.l.b16 %v2179
        %v2253 = vunpack.c.h.b16 %v2179
        %v2254 = vunpack.c.l.b16 %v2180
        %v2255 = vunpack.c.h.b16 %v2180
        %v2256 = vunpack.c.l.b16 %v2181
        %v2257 = vunpack.c.h.b16 %v2181
        %v2258 = vunpack.c.l.b16 %v2182
        %v2259 = vunpack.c.h.b16 %v2182
        %v2260 = vunpack.c.l.b16 %v2183
        %v2261 = vunpack.c.h.b16 %v2183
        %v2262 = vunpack.c.l.b16 %v2184
        %v2263 = vunpack.c.h.b16 %v2184
        %v2264 = vunpack.c.l.b16 %v2185
        %v2265 = vunpack.c.h.b16 %v2185
        %v2266 = vunpack.c.l.b16 %v2186
        %v2267 = vunpack.c.h.b16 %v2186
        %v2268 = vunpack.c.l.b16 %v2187
        %v2269 = vunpack.c.h.b16 %v2187
        %v2270 = vunpack.c.l.b16 %v2188
        %v2271 = vunpack.c.h.b16 %v2188
        %v2272 = vunpack.c.l.b16 %v2189
        %v2273 = vunpack.c.h.b16 %v2189
        %v2274 = vunpack.c.l.b16 %v2190
        %v2275 = vunpack.c.h.b16 %v2190
        %v2276 = vunpack.c.l.b16 %v2191
        %v2277 = vunpack.c.h.b16 %v2191
        %v2278 = vunpack.c.l.b16 %v2192
        %v2279 = vunpack.c.h.b16 %v2192
        %v2280 = vunpack.c.l.b16 %v2193
        %v2281 = vunpack.c.h.b16 %v2193
        %v2282 = vunpack.c.l.b16 %v2194
        %v2283 = vunpack.c.h.b16 %v2194
        %v2284 = vunpack.c.l.b16 %v2195
        %v2285 = vunpack.c.h.b16 %v2195
        %v2286 = vunpack.c.l.b16 %v2196
        %v2287 = vunpack.c.h.b16 %v2196
        %v2288 = vunpack.c.l.b16 %v2197
        %v2289 = vunpack.c.h.b16 %v2197
        %v2290 = vunpack.c.l.b16 %v2198
        %v2291 = vunpack.c.h.b16 %v2198
        %v2292 = vunpack.c.l.b16 %v2199
        %v2293 = vunpack.c.h.b16 %v2199
        %v2294 = vunpack.c.l.b16 %v2200
        %v2295 = vunpack.c.h.b16 %v2200
        %v2296 = vunpack.c.l.b16 %v2201
        %v2297 = vunpack.c.h.b16 %v2201
        %v2298 = vpack.c.b16 %v2238, %v2234
        %v2299 = vpack.c.b16 %v2239, %v2235
        %v2300 = vpack.c.b16 %v2240, %v2236
        %v2301 = vpack.c.b16 %v2241, %v2237
        %v2302 = vpack.c.b16 %v2246, %v2242
        %v2303 = vpack.c.b16 %v2247, %v2243
        %v2304 = vpack.c.b16 %v2248, %v2244
        %v2305 = vpack.c.b16 %v2249, %v2245
        %v2306 = vpack.c.b16 %v2254, %v2250
        %v2307 = vpack.c.b16 %v2255, %v2251
        %v2308 = vpack.c.b16 %v2256, %v2252
        %v2309 = vpack.c.b16 %v2257, %v2253
        %v2310 = vpack.c.b16 %v2262, %v2258
        %v2311 = vpack.c.b16 %v2263, %v2259
        %v2312 = vpack.c.b16 %v2264, %v2260
        %v2313 = vpack.c.b16 %v2265, %v2261
        %v2314 = vpack.c.b16 %v2270, %v2266
        %v2315 = vpack.c.b16 %v2271, %v2267
        %v2316 = vpack.c.b16 %v2272, %v2268
        %v2317 = vpack.c.b16 %v2273, %v2269
        %v2318 = vpack.c.b16 %v2278, %v2274
        %v2319 = vpack.c.b16 %v2279, %v2275
        %v2320 = vpack.c.b16 %v2280, %v2276
        %v2321 = vpack.c.b16 %v2281, %v2277
        %v2322 = vpack.c.b16 %v2286, %v2282
        %v2323 = vpack.c.b16 %v2287, %v2283
        %v2324 = vpack.c.b16 %v2288, %v2284
        %v2325 = vpack.c.b16 %v2289, %v2285
        %v2326 = vpack.c.b16 %v2294, %v2290
        %v2327 = vpack.c.b16 %v2295, %v2291
        %v2328 = vpack.c.b16 %v2296, %v2292
        %v2329 = vpack.c.b16 %v2297, %v2293
        %2362 = vmatpush.bf16.msra.mxu0 %v2326
        %2363 = vmatpush.bf16.msra.mxu0 %v2322
        %2364 = vmatpush.bf16.msra.mxu0 %v2318
        %2365 = vmatpush.bf16.msra.mxu0 %v2314
        %2366 = vmatpush.bf16.msra.mxu0 %v2310
        %2367 = vmatpush.bf16.msra.mxu0 %v2306
        %2368 = vmatpush.bf16.msra.mxu0 %v2302
        %2369 = vmatpush.bf16.msra.mxu0 %v2298
        %2370 = vmatmul.bf16.gmra.mxu0 %v2169
        %v2371 = vpop.f32.mrf.mxu0
        %v2372 = vadd.f32 0.0, %v2371
        %v2373 = vpop.f32.mrf.mxu0
        %v2374 = vadd.f32 0.0, %v2373
        %2375 = vdwg.mxu0
        %2376 = vmatpush.bf16.msra.mxu0 %v2327
        %2377 = vmatpush.bf16.msra.mxu0 %v2323
        %2378 = vmatpush.bf16.msra.mxu0 %v2319
        %2379 = vmatpush.bf16.msra.mxu0 %v2315
        %2380 = vmatpush.bf16.msra.mxu0 %v2311
        %2381 = vmatpush.bf16.msra.mxu0 %v2307
        %2382 = vmatpush.bf16.msra.mxu0 %v2303
        %2383 = vmatpush.bf16.msra.mxu0 %v2299
        %2384 = vmatmul.bf16.gmra.mxu0 %v2169
        %v2385 = vpop.f32.mrf.mxu0
        %v2386 = vadd.f32 0.0, %v2385
        %v2387 = vpop.f32.mrf.mxu0
        %v2388 = vadd.f32 0.0, %v2387
        %2389 = vdwg.mxu0
        %2390 = vmatpush.bf16.msra.mxu0 %v2328
        %2391 = vmatpush.bf16.msra.mxu0 %v2324
        %2392 = vmatpush.bf16.msra.mxu0 %v2320
        %2393 = vmatpush.bf16.msra.mxu0 %v2316
        %2394 = vmatpush.bf16.msra.mxu0 %v2312
        %2395 = vmatpush.bf16.msra.mxu0 %v2308
        %2396 = vmatpush.bf16.msra.mxu0 %v2304
        %2397 = vmatpush.bf16.msra.mxu0 %v2300
        %2398 = vmatmul.bf16.gmra.mxu0 %v2169
        %v2399 = vpop.f32.mrf.mxu0
        %v2400 = vadd.f32 0.0, %v2399
        %v2401 = vpop.f32.mrf.mxu0
        %v2402 = vadd.f32 0.0, %v2401
        %2403 = vdwg.mxu0
        %2404 = vmatpush.bf16.msra.mxu0 %v2329
        %2405 = vmatpush.bf16.msra.mxu0 %v2325
        %2406 = vmatpush.bf16.msra.mxu0 %v2321
        %2407 = vmatpush.bf16.msra.mxu0 %v2317
        %2408 = vmatpush.bf16.msra.mxu0 %v2313
        %2409 = vmatpush.bf16.msra.mxu0 %v2309
        %2410 = vmatpush.bf16.msra.mxu0 %v2305
        %2411 = vmatpush.bf16.msra.mxu0 %v2301
        %2412 = vmatmul.bf16.gmra.mxu0 %v2169
        %v2413 = vpop.f32.mrf.mxu0
        %v2414 = vadd.f32 0.0, %v2413
        %v2415 = vpop.f32.mrf.mxu0
        %v2416 = vadd.f32 0.0, %v2415
        %2417 = vdwg.mxu0
        %s2418 = smul.u32 %s2168, 8
        %s2419 = smul.addr %s2418, 4
        %s2420 = scalar_lea.vmem %s251, %s2419
        %v2421 = vld [vmem:[%s2420] sm:$0xff]
        %v2422 = vld [vmem:[%s2420 + $0x8] sm:$0xff]
        %v2423 = vld [vmem:[%s2420 + $0x10] sm:$0xff]
        %v2424 = vld [vmem:[%s2420 + $0x18] sm:$0xff]
        %v2425 = vunpack.c.l.bf16 %v2421
        %v2426 = vunpack.c.h.bf16 %v2421
        %v2427 = vunpack.c.l.bf16 %v2422
        %v2428 = vunpack.c.h.bf16 %v2422
        %v2429 = vunpack.c.l.bf16 %v2423
        %v2430 = vunpack.c.h.bf16 %v2423
        %v2431 = vunpack.c.l.bf16 %v2424
        %v2432 = vunpack.c.h.bf16 %v2424
        %v2433 = vadd.f32 %v2425, %v2372
        %v2434 = vadd.f32 %v2426, %v2386
        %v2435 = vadd.f32 %v2427, %v2400
        %v2436 = vadd.f32 %v2428, %v2414
        %v2437 = vadd.f32 %v2429, %v2374
        %v2438 = vadd.f32 %v2430, %v2388
        %v2439 = vadd.f32 %v2431, %v2402
        %v2440 = vadd.f32 %v2432, %v2416
        %v2441 = vmul.f32 %v2433, 0.5
        %v2442 = vmul.f32 %v2437, 0.5
        %v2443 = vtanh.pop %v2441
        %v2444 = vtanh.pop %v2442
        %v2445 = vmul.f32 %v2443, 0.5
        %v2446 = vmul.f32 %v2444, 0.5
        %v2447 = vadd.f32 %v2445, 0.5
        %v2448 = vadd.f32 %v2446, 0.5
        %v2449 = vmul.f32 %v2434, 0.5
        %v2450 = vmul.f32 %v2438, 0.5
        %v2451 = vtanh.pop %v2449
        %v2452 = vtanh.pop %v2450
        %v2453 = vmul.f32 %v2451, 0.5
        %v2454 = vmul.f32 %v2452, 0.5
        %v2455 = vadd.f32 %v2453, 0.5
        %v2456 = vadd.f32 %v2454, 0.5
        %v2457 = vtanh.pop %v2435
        %v2458 = vtanh.pop %v2439
        %v2459 = vmul.f32 %v2436, 0.5
        %v2460 = vmul.f32 %v2440, 0.5
        %v2461 = vtanh.pop %v2459
        %v2462 = vtanh.pop %v2460
        %v2463 = vmul.f32 %v2461, 0.5
        %v2464 = vmul.f32 %v2462, 0.5
        %v2465 = vadd.f32 %v2463, 0.5
        %v2466 = vadd.f32 %v2464, 0.5
        %v2467 = vmul.f32 %v2455, %v2157
        %v2468 = vmul.f32 %v2456, %v2158
        %v2469 = vmul.f32 %v2447, %v2457
        %v2470 = vmul.f32 %v2448, %v2458
        %v2471 = vadd.f32 %v2467, %v2469
        %v2472 = vadd.f32 %v2468, %v2470
        %v2473 = vtanh.pop %v2471
        %v2474 = vtanh.pop %v2472
        %v2475 = vmul.f32 %v2465, %v2473
        %v2476 = vmul.f32 %v2466, %v2474
        %s2477 = smul.u32 %s2168, 16
        %s2478 = scalar_lea.vmem %s231, %s2477 [#allocation4]
        %2479 = vst [vmem:[%s2478] sm:$0xff] %v2475
        %2480 = vst [vmem:[%s2478 + $0x8] sm:$0xff] %v2476
        %s2481 = smul.u32 %s281, 7
        %s2482 = sadd.s32 %s280, %s2481
        %v2483 = vpack.c.bf16 %v2476, %v2475
        %v2484 = vld [vmem:[%s263] sm:$0xff]
        %v2485 = vld [vmem:[%s263 + $0x8] sm:$0xff]
        %v2486 = vld [vmem:[%s263 + $0x10] sm:$0xff]
        %v2487 = vld [vmem:[%s263 + $0x18] sm:$0xff]
        %v2488 = vld [vmem:[%s263 + $0x20] sm:$0xff]
        %v2489 = vld [vmem:[%s263 + $0x28] sm:$0xff]
        %v2490 = vld [vmem:[%s263 + $0x30] sm:$0xff]
        %v2491 = vld [vmem:[%s263 + $0x38] sm:$0xff]
        %v2492 = vld [vmem:[%s263 + $0x40] sm:$0xff]
        %v2493 = vld [vmem:[%s263 + $0x48] sm:$0xff]
        %v2494 = vld [vmem:[%s263 + $0x50] sm:$0xff]
        %v2495 = vld [vmem:[%s263 + $0x58] sm:$0xff]
        %v2496 = vld [vmem:[%s263 + $0x60] sm:$0xff]
        %v2497 = vld [vmem:[%s263 + $0x68] sm:$0xff]
        %v2498 = vld [vmem:[%s263 + $0x70] sm:$0xff]
        %v2499 = vld [vmem:[%s263 + $0x78] sm:$0xff]
        %v2500 = vld [vmem:[%s263 + $0x80] sm:$0xff]
        %v2501 = vld [vmem:[%s263 + $0x88] sm:$0xff]
        %v2502 = vld [vmem:[%s263 + $0x90] sm:$0xff]
        %v2503 = vld [vmem:[%s263 + $0x98] sm:$0xff]
        %v2504 = vld [vmem:[%s263 + $0xa0] sm:$0xff]
        %v2505 = vld [vmem:[%s263 + $0xa8] sm:$0xff]
        %v2506 = vld [vmem:[%s263 + $0xb0] sm:$0xff]
        %v2507 = vld [vmem:[%s263 + $0xb8] sm:$0xff]
        %v2508 = vld [vmem:[%s263 + $0xc0] sm:$0xff]
        %v2509 = vld [vmem:[%s263 + $0xc8] sm:$0xff]
        %v2510 = vld [vmem:[%s263 + $0xd0] sm:$0xff]
        %v2511 = vld [vmem:[%s263 + $0xd8] sm:$0xff]
        %v2512 = vld [vmem:[%s263 + $0xe0] sm:$0xff]
        %v2513 = vld [vmem:[%s263 + $0xe8] sm:$0xff]
        %v2514 = vld [vmem:[%s263 + $0xf0] sm:$0xff]
        %v2515 = vld [vmem:[%s263 + $0xf8] sm:$0xff]
        %v2548 = vunpack.c.l.b16 %v2484
        %v2549 = vunpack.c.h.b16 %v2484
        %v2550 = vunpack.c.l.b16 %v2485
        %v2551 = vunpack.c.h.b16 %v2485
        %v2552 = vunpack.c.l.b16 %v2486
        %v2553 = vunpack.c.h.b16 %v2486
        %v2554 = vunpack.c.l.b16 %v2487
        %v2555 = vunpack.c.h.b16 %v2487
        %v2556 = vunpack.c.l.b16 %v2488
        %v2557 = vunpack.c.h.b16 %v2488
        %v2558 = vunpack.c.l.b16 %v2489
        %v2559 = vunpack.c.h.b16 %v2489
        %v2560 = vunpack.c.l.b16 %v2490
        %v2561 = vunpack.c.h.b16 %v2490
        %v2562 = vunpack.c.l.b16 %v2491
        %v2563 = vunpack.c.h.b16 %v2491
        %v2564 = vunpack.c.l.b16 %v2492
        %v2565 = vunpack.c.h.b16 %v2492
        %v2566 = vunpack.c.l.b16 %v2493
        %v2567 = vunpack.c.h.b16 %v2493
        %v2568 = vunpack.c.l.b16 %v2494
        %v2569 = vunpack.c.h.b16 %v2494
        %v2570 = vunpack.c.l.b16 %v2495
        %v2571 = vunpack.c.h.b16 %v2495
        %v2572 = vunpack.c.l.b16 %v2496
        %v2573 = vunpack.c.h.b16 %v2496
        %v2574 = vunpack.c.l.b16 %v2497
        %v2575 = vunpack.c.h.b16 %v2497
        %v2576 = vunpack.c.l.b16 %v2498
        %v2577 = vunpack.c.h.b16 %v2498
        %v2578 = vunpack.c.l.b16 %v2499
        %v2579 = vunpack.c.h.b16 %v2499
        %v2580 = vunpack.c.l.b16 %v2500
        %v2581 = vunpack.c.h.b16 %v2500
        %v2582 = vunpack.c.l.b16 %v2501
        %v2583 = vunpack.c.h.b16 %v2501
        %v2584 = vunpack.c.l.b16 %v2502
        %v2585 = vunpack.c.h.b16 %v2502
        %v2586 = vunpack.c.l.b16 %v2503
        %v2587 = vunpack.c.h.b16 %v2503
        %v2588 = vunpack.c.l.b16 %v2504
        %v2589 = vunpack.c.h.b16 %v2504
        %v2590 = vunpack.c.l.b16 %v2505
        %v2591 = vunpack.c.h.b16 %v2505
        %v2592 = vunpack.c.l.b16 %v2506
        %v2593 = vunpack.c.h.b16 %v2506
        %v2594 = vunpack.c.l.b16 %v2507
        %v2595 = vunpack.c.h.b16 %v2507
        %v2596 = vunpack.c.l.b16 %v2508
        %v2597 = vunpack.c.h.b16 %v2508
        %v2598 = vunpack.c.l.b16 %v2509
        %v2599 = vunpack.c.h.b16 %v2509
        %v2600 = vunpack.c.l.b16 %v2510
        %v2601 = vunpack.c.h.b16 %v2510
        %v2602 = vunpack.c.l.b16 %v2511
        %v2603 = vunpack.c.h.b16 %v2511
        %v2604 = vunpack.c.l.b16 %v2512
        %v2605 = vunpack.c.h.b16 %v2512
        %v2606 = vunpack.c.l.b16 %v2513
        %v2607 = vunpack.c.h.b16 %v2513
        %v2608 = vunpack.c.l.b16 %v2514
        %v2609 = vunpack.c.h.b16 %v2514
        %v2610 = vunpack.c.l.b16 %v2515
        %v2611 = vunpack.c.h.b16 %v2515
        %v2612 = vpack.c.b16 %v2552, %v2548
        %v2613 = vpack.c.b16 %v2553, %v2549
        %v2614 = vpack.c.b16 %v2554, %v2550
        %v2615 = vpack.c.b16 %v2555, %v2551
        %v2616 = vpack.c.b16 %v2560, %v2556
        %v2617 = vpack.c.b16 %v2561, %v2557
        %v2618 = vpack.c.b16 %v2562, %v2558
        %v2619 = vpack.c.b16 %v2563, %v2559
        %v2620 = vpack.c.b16 %v2568, %v2564
        %v2621 = vpack.c.b16 %v2569, %v2565
        %v2622 = vpack.c.b16 %v2570, %v2566
        %v2623 = vpack.c.b16 %v2571, %v2567
        %v2624 = vpack.c.b16 %v2576, %v2572
        %v2625 = vpack.c.b16 %v2577, %v2573
        %v2626 = vpack.c.b16 %v2578, %v2574
        %v2627 = vpack.c.b16 %v2579, %v2575
        %v2628 = vpack.c.b16 %v2584, %v2580
        %v2629 = vpack.c.b16 %v2585, %v2581
        %v2630 = vpack.c.b16 %v2586, %v2582
        %v2631 = vpack.c.b16 %v2587, %v2583
        %v2632 = vpack.c.b16 %v2592, %v2588
        %v2633 = vpack.c.b16 %v2593, %v2589
        %v2634 = vpack.c.b16 %v2594, %v2590
        %v2635 = vpack.c.b16 %v2595, %v2591
        %v2636 = vpack.c.b16 %v2600, %v2596
        %v2637 = vpack.c.b16 %v2601, %v2597
        %v2638 = vpack.c.b16 %v2602, %v2598
        %v2639 = vpack.c.b16 %v2603, %v2599
        %v2640 = vpack.c.b16 %v2608, %v2604
        %v2641 = vpack.c.b16 %v2609, %v2605
        %v2642 = vpack.c.b16 %v2610, %v2606
        %v2643 = vpack.c.b16 %v2611, %v2607
        %2676 = vmatpush.bf16.msra.mxu0 %v2640
        %2677 = vmatpush.bf16.msra.mxu0 %v2636
        %2678 = vmatpush.bf16.msra.mxu0 %v2632
        %2679 = vmatpush.bf16.msra.mxu0 %v2628
        %2680 = vmatpush.bf16.msra.mxu0 %v2624
        %2681 = vmatpush.bf16.msra.mxu0 %v2620
        %2682 = vmatpush.bf16.msra.mxu0 %v2616
        %2683 = vmatpush.bf16.msra.mxu0 %v2612
        %2684 = vmatmul.bf16.gmra.mxu0 %v2483
        %v2685 = vpop.f32.mrf.mxu0
        %v2686 = vadd.f32 0.0, %v2685
        %v2687 = vpop.f32.mrf.mxu0
        %v2688 = vadd.f32 0.0, %v2687
        %2689 = vdwg.mxu0
        %2690 = vmatpush.bf16.msra.mxu0 %v2641
        %2691 = vmatpush.bf16.msra.mxu0 %v2637
        %2692 = vmatpush.bf16.msra.mxu0 %v2633
        %2693 = vmatpush.bf16.msra.mxu0 %v2629
        %2694 = vmatpush.bf16.msra.mxu0 %v2625
        %2695 = vmatpush.bf16.msra.mxu0 %v2621
        %2696 = vmatpush.bf16.msra.mxu0 %v2617
        %2697 = vmatpush.bf16.msra.mxu0 %v2613
        %2698 = vmatmul.bf16.gmra.mxu0 %v2483
        %v2699 = vpop.f32.mrf.mxu0
        %v2700 = vadd.f32 0.0, %v2699
        %v2701 = vpop.f32.mrf.mxu0
        %v2702 = vadd.f32 0.0, %v2701
        %2703 = vdwg.mxu0
        %2704 = vmatpush.bf16.msra.mxu0 %v2642
        %2705 = vmatpush.bf16.msra.mxu0 %v2638
        %2706 = vmatpush.bf16.msra.mxu0 %v2634
        %2707 = vmatpush.bf16.msra.mxu0 %v2630
        %2708 = vmatpush.bf16.msra.mxu0 %v2626
        %2709 = vmatpush.bf16.msra.mxu0 %v2622
        %2710 = vmatpush.bf16.msra.mxu0 %v2618
        %2711 = vmatpush.bf16.msra.mxu0 %v2614
        %2712 = vmatmul.bf16.gmra.mxu0 %v2483
        %v2713 = vpop.f32.mrf.mxu0
        %v2714 = vadd.f32 0.0, %v2713
        %v2715 = vpop.f32.mrf.mxu0
        %v2716 = vadd.f32 0.0, %v2715
        %2717 = vdwg.mxu0
        %2718 = vmatpush.bf16.msra.mxu0 %v2643
        %2719 = vmatpush.bf16.msra.mxu0 %v2639
        %2720 = vmatpush.bf16.msra.mxu0 %v2635
        %2721 = vmatpush.bf16.msra.mxu0 %v2631
        %2722 = vmatpush.bf16.msra.mxu0 %v2627
        %2723 = vmatpush.bf16.msra.mxu0 %v2623
        %2724 = vmatpush.bf16.msra.mxu0 %v2619
        %2725 = vmatpush.bf16.msra.mxu0 %v2615
        %2726 = vmatmul.bf16.gmra.mxu0 %v2483
        %v2727 = vpop.f32.mrf.mxu0
        %v2728 = vadd.f32 0.0, %v2727
        %v2729 = vpop.f32.mrf.mxu0
        %v2730 = vadd.f32 0.0, %v2729
        %2731 = vdwg.mxu0
        %s2732 = smul.u32 %s2482, 8
        %s2733 = smul.addr %s2732, 4
        %s2734 = scalar_lea.vmem %s251, %s2733
        %v2735 = vld [vmem:[%s2734] sm:$0xff]
        %v2736 = vld [vmem:[%s2734 + $0x8] sm:$0xff]
        %v2737 = vld [vmem:[%s2734 + $0x10] sm:$0xff]
        %v2738 = vld [vmem:[%s2734 + $0x18] sm:$0xff]
        %v2739 = vunpack.c.l.bf16 %v2735
        %v2740 = vunpack.c.h.bf16 %v2735
        %v2741 = vunpack.c.l.bf16 %v2736
        %v2742 = vunpack.c.h.bf16 %v2736
        %v2743 = vunpack.c.l.bf16 %v2737
        %v2744 = vunpack.c.h.bf16 %v2737
        %v2745 = vunpack.c.l.bf16 %v2738
        %v2746 = vunpack.c.h.bf16 %v2738
        %v2747 = vadd.f32 %v2739, %v2686
        %v2748 = vadd.f32 %v2740, %v2700
        %v2749 = vadd.f32 %v2741, %v2714
        %v2750 = vadd.f32 %v2742, %v2728
        %v2751 = vadd.f32 %v2743, %v2688
        %v2752 = vadd.f32 %v2744, %v2702
        %v2753 = vadd.f32 %v2745, %v2716
        %v2754 = vadd.f32 %v2746, %v2730
        %v2755 = vmul.f32 %v2747, 0.5
        %v2756 = vmul.f32 %v2751, 0.5
        %v2757 = vtanh.pop %v2755
        %v2758 = vtanh.pop %v2756
        %v2759 = vmul.f32 %v2757, 0.5
        %v2760 = vmul.f32 %v2758, 0.5
        %v2761 = vadd.f32 %v2759, 0.5
        %v2762 = vadd.f32 %v2760, 0.5
        %v2763 = vmul.f32 %v2748, 0.5
        %v2764 = vmul.f32 %v2752, 0.5
        %v2765 = vtanh.pop %v2763
        %v2766 = vtanh.pop %v2764
        %v2767 = vmul.f32 %v2765, 0.5
        %v2768 = vmul.f32 %v2766, 0.5
        %v2769 = vadd.f32 %v2767, 0.5
        %v2770 = vadd.f32 %v2768, 0.5
        %v2771 = vtanh.pop %v2749
        %v2772 = vtanh.pop %v2753
        %v2773 = vmul.f32 %v2750, 0.5
        %v2774 = vmul.f32 %v2754, 0.5
        %v2775 = vtanh.pop %v2773
        %v2776 = vtanh.pop %v2774
        %v2777 = vmul.f32 %v2775, 0.5
        %v2778 = vmul.f32 %v2776, 0.5
        %v2779 = vadd.f32 %v2777, 0.5
        %v2780 = vadd.f32 %v2778, 0.5
        %v2781 = vmul.f32 %v2769, %v2471
        %v2782 = vmul.f32 %v2770, %v2472
        %v2783 = vmul.f32 %v2761, %v2771
        %v2784 = vmul.f32 %v2762, %v2772
        %v2785 = vadd.f32 %v2781, %v2783
        %v2786 = vadd.f32 %v2782, %v2784
        %v2787 = vtanh.pop %v2785
        %v2788 = vtanh.pop %v2786
        %v2789 = vmul.f32 %v2779, %v2787
        %v2790 = vmul.f32 %v2780, %v2788
        %s2791 = smul.u32 %s2482, 16
        %s2792 = scalar_lea.vmem %s231, %s2791 [#allocation4]
        %2793 = vst [vmem:[%s2792] sm:$0xff] %v2789
        %2794 = vst [vmem:[%s2792 + $0x8] sm:$0xff] %v2790
        %2795 = vst [vmem:[#allocation2] sm:$0xff] %v2789
        %2796 = vst [vmem:[#allocation2 + $0x8] sm:$0xff] %v2790
        %2797 = vst [vmem:[#allocation3] sm:$0xff] %v2785
        %2798 = vst [vmem:[#allocation3 + $0x8] sm:$0xff] %v2786
        %s2799 = sand.u32 %s120, 1
        %s2800 = sand.u32 %s120, 1
        %s2801 = smul.addr %s2800, 128
        %s2802 = scalar_lea.vmem [#allocation4], %s2801
        // Predicated region
        $region33: #{encoder_forward.3} parent=27 // pred_check
          %p2803 = pneg %p130
        $region34: #{encoder_forward.3} parent=27 // pred_check_branch
          %2805 = sbr.rel (%p2803) target = $region36
        $region35: #{encoder_forward.3} parent=27 // pred_region
          %s2806 = ssub.s32 1, %s18
          %s2807 = smul.u32 %s2806, %s20
          %s2808 = ssub.s32 0, %s20
          %s2809 = smul.u32 %s18, %s2808
          %s2810 = sadd.s32 %s2807, %s2809
          %s2811 = smul.u32 8, %s2810
          %s2812 = smul.u32 2, %s19
          %s2813 = smul.addr %s2812, 2
          %s2814 = sadd.s32 %s18, %s2813
          %s2815 = smul.addr %s2811, 4
          %s2816 = sadd.s32 %s2814, %s2815
          %s2817 = smul.addr %s2816, 8
          %s2818 = scalar_lea.vmem %s2, %s2817
          // Predicated region
          $region37: #{encoder_forward.3} parent=35 // pred_check
            _
          $region38: #{encoder_forward.3} parent=35 // pred_check_branch
            %2820 = sbr.rel (0) target = $region40
          $region39: #{encoder_forward.3} parent=35 // pred_region
            // Predicated region
            $region41: #{encoder_forward.3} parent=39 // pred_check
              _
            $region42: #{encoder_forward.3} parent=39 // pred_check_branch
              %2822 = sbr.rel (0) target = $region44
            $region43: #{encoder_forward.3} parent=39 // pred_region
              // Predicated region
              $region56: #{encoder_forward.3} parent=43 // pred_check
                _
              $region57: #{encoder_forward.3} parent=43 // pred_check_branch
                %2868 = sbr.rel (0) target = $region59
              $region58: #{encoder_forward.3} parent=43 // pred_region
                loop: start=0, step=1, limit=1
                $region60: #{encoder_forward.3} parent=58 // loop_pre_header
                  _
                $region61: #{encoder_forward.3} parent=58 // loop_header
                  %s2870 = sphi 0, %s2874
                  %p2871 = scmp.ge.s32.totalorder %s2870, 1
                  %s2875 = sphi %s2802, %s2802
                  %s2876 = sphi %s2818, %s2818
                $region62: #{encoder_forward.3} parent=58 // loop_header_branch
                  %2873 = sbr.rel (%p2871) target = $region66
                $region63: #{encoder_forward.3} parent=58 // loop_body
                  %v2877 = vld [vmem:[%s2875] sm:$0xff]
                  %2878 = vst [vmem:[%s2876] sm:$0xff] %v2877
                  %v2879 = vld [vmem:[%s2875 + $0x8] sm:$0xff]
                  %2880 = vst [vmem:[%s2876 + $0x10] sm:$0xff] %v2879
                  %v2881 = vld [vmem:[%s2875 + $0x10] sm:$0xff]
                  %2882 = vst [vmem:[%s2876 + $0x20] sm:$0xff] %v2881
                  %v2883 = vld [vmem:[%s2875 + $0x18] sm:$0xff]
                  %2884 = vst [vmem:[%s2876 + $0x30] sm:$0xff] %v2883
                  %v2885 = vld [vmem:[%s2875 + $0x20] sm:$0xff]
                  %2886 = vst [vmem:[%s2876 + $0x40] sm:$0xff] %v2885
                  %v2887 = vld [vmem:[%s2875 + $0x28] sm:$0xff]
                  %2888 = vst [vmem:[%s2876 + $0x50] sm:$0xff] %v2887
                  %v2889 = vld [vmem:[%s2875 + $0x30] sm:$0xff]
                  %2890 = vst [vmem:[%s2876 + $0x60] sm:$0xff] %v2889
                  %v2891 = vld [vmem:[%s2875 + $0x38] sm:$0xff]
                  %2892 = vst [vmem:[%s2876 + $0x70] sm:$0xff] %v2891
                  %v2893 = vld [vmem:[%s2875 + $0x40] sm:$0xff]
                  %2894 = vst [vmem:[%s2876 + $0x80] sm:$0xff] %v2893
                  %v2895 = vld [vmem:[%s2875 + $0x48] sm:$0xff]
                  %2896 = vst [vmem:[%s2876 + $0x90] sm:$0xff] %v2895
                  %v2897 = vld [vmem:[%s2875 + $0x50] sm:$0xff]
                  %2898 = vst [vmem:[%s2876 + $0xa0] sm:$0xff] %v2897
                  %v2899 = vld [vmem:[%s2875 + $0x58] sm:$0xff]
                  %2900 = vst [vmem:[%s2876 + $0xb0] sm:$0xff] %v2899
                  %v2901 = vld [vmem:[%s2875 + $0x60] sm:$0xff]
                  %2902 = vst [vmem:[%s2876 + $0xc0] sm:$0xff] %v2901
                  %v2903 = vld [vmem:[%s2875 + $0x68] sm:$0xff]
                  %2904 = vst [vmem:[%s2876 + $0xd0] sm:$0xff] %v2903
                  %v2905 = vld [vmem:[%s2875 + $0x70] sm:$0xff]
                  %2906 = vst [vmem:[%s2876 + $0xe0] sm:$0xff] %v2905
                  %v2907 = vld [vmem:[%s2875 + $0x78] sm:$0xff]
                  %2908 = vst [vmem:[%s2876 + $0xf0] sm:$0xff] %v2907
                $region64: #{encoder_forward.3} parent=58 // loop_footer
                  %s2874 = sadd.s32 1, %s2870
                $region65: #{encoder_forward.3} parent=58 // loop_footer_branch
                  %2869 = sbr.rel target = $region61
                $region66: #{encoder_forward.3} parent=58 // loop_exit
                  _
              $region59: #{encoder_forward.3} parent=43 // pred_fallthru
                _
              // Predicated region
              $region67: #{encoder_forward.3} parent=43 // pred_check
                _
              $region68: #{encoder_forward.3} parent=43 // pred_check_branch
                %2910 = sbr.rel target = $region70
              $region69: #{encoder_forward.3} parent=43 // pred_region
                _
              $region70: #{encoder_forward.3} parent=43 // pred_fallthru
                _
            $region44: #{encoder_forward.3} parent=39 // pred_fallthru
              _
            // Predicated region
            $region45: #{encoder_forward.3} parent=39 // pred_check
              _
            $region46: #{encoder_forward.3} parent=39 // pred_check_branch
              %2824 = sbr.rel target = $region48
            $region47: #{encoder_forward.3} parent=39 // pred_region
              %s2826 = ssub.s32 256, 1
              loop: start=0, step=1, limit=1
              $region49: #{encoder_forward.3} parent=47 // loop_pre_header
                _
              $region50: #{encoder_forward.3} parent=47 // loop_header
                %s2828 = sphi 0, %s2832
                %p2829 = scmp.ge.s32.totalorder %s2828, 1
                %s2833 = sphi %s2802, %s2802
                %s2834 = sphi %s2818, %s2818
              $region51: #{encoder_forward.3} parent=47 // loop_header_branch
                %2831 = sbr.rel (%p2829) target = $region55
              $region52: #{encoder_forward.3} parent=47 // loop_body
                %v2835 = vld [vmem:[%s2833] sm:%s2826]
                %2836 = vst [vmem:[%s2834] sm:%s2826] %v2835
                %v2837 = vld [vmem:[%s2833 + $0x8] sm:%s2826]
                %2838 = vst [vmem:[%s2834 + $0x10] sm:%s2826] %v2837
                %v2839 = vld [vmem:[%s2833 + $0x10] sm:%s2826]
                %2840 = vst [vmem:[%s2834 + $0x20] sm:%s2826] %v2839
                %v2841 = vld [vmem:[%s2833 + $0x18] sm:%s2826]
                %2842 = vst [vmem:[%s2834 + $0x30] sm:%s2826] %v2841
                %v2843 = vld [vmem:[%s2833 + $0x20] sm:%s2826]
                %2844 = vst [vmem:[%s2834 + $0x40] sm:%s2826] %v2843
                %v2845 = vld [vmem:[%s2833 + $0x28] sm:%s2826]
                %2846 = vst [vmem:[%s2834 + $0x50] sm:%s2826] %v2845
                %v2847 = vld [vmem:[%s2833 + $0x30] sm:%s2826]
                %2848 = vst [vmem:[%s2834 + $0x60] sm:%s2826] %v2847
                %v2849 = vld [vmem:[%s2833 + $0x38] sm:%s2826]
                %2850 = vst [vmem:[%s2834 + $0x70] sm:%s2826] %v2849
                %v2851 = vld [vmem:[%s2833 + $0x40] sm:%s2826]
                %2852 = vst [vmem:[%s2834 + $0x80] sm:%s2826] %v2851
                %v2853 = vld [vmem:[%s2833 + $0x48] sm:%s2826]
                %2854 = vst [vmem:[%s2834 + $0x90] sm:%s2826] %v2853
                %v2855 = vld [vmem:[%s2833 + $0x50] sm:%s2826]
                %2856 = vst [vmem:[%s2834 + $0xa0] sm:%s2826] %v2855
                %v2857 = vld [vmem:[%s2833 + $0x58] sm:%s2826]
                %2858 = vst [vmem:[%s2834 + $0xb0] sm:%s2826] %v2857
                %v2859 = vld [vmem:[%s2833 + $0x60] sm:%s2826]
                %2860 = vst [vmem:[%s2834 + $0xc0] sm:%s2826] %v2859
                %v2861 = vld [vmem:[%s2833 + $0x68] sm:%s2826]
                %2862 = vst [vmem:[%s2834 + $0xd0] sm:%s2826] %v2861
                %v2863 = vld [vmem:[%s2833 + $0x70] sm:%s2826]
                %2864 = vst [vmem:[%s2834 + $0xe0] sm:%s2826] %v2863
                %v2865 = vld [vmem:[%s2833 + $0x78] sm:%s2826]
                %2866 = vst [vmem:[%s2834 + $0xf0] sm:%s2826] %v2865
              $region53: #{encoder_forward.3} parent=47 // loop_footer
                %s2832 = sadd.s32 1, %s2828
              $region54: #{encoder_forward.3} parent=47 // loop_footer_branch
                %2827 = sbr.rel target = $region50
              $region55: #{encoder_forward.3} parent=47 // loop_exit
                _
            $region48: #{encoder_forward.3} parent=39 // pred_fallthru
              _
          $region40: #{encoder_forward.3} parent=35 // pred_fallthru
            _
          %2911 = vnop
        $region36: #{encoder_forward.3} parent=27 // pred_fallthru
          _
      $region28: #{encoder_forward.3} parent=5 // pred_fallthru
        _
      %p2912 = scmp.le.s32.totalorder 2, %s8
      // Predicated region
      $region71: #{encoder_forward.3} parent=5 // pred_check
        %p2913 = pneg %p2912
      $region72: #{encoder_forward.3} parent=5 // pred_check_branch
        %2915 = sbr.rel (%p2913) target = $region74
      $region73: #{encoder_forward.3} parent=5 // pred_region
        %s2916 = ssub.s32 %s8, 2
        // Predicated region
        $region75: #{encoder_forward.3} parent=73 // pred_check
          %p2917 = pneg %p136
        $region76: #{encoder_forward.3} parent=73 // pred_check_branch
          %2919 = sbr.rel (%p2917) target = $region78
        $region77: #{encoder_forward.3} parent=73 // pred_region
          %s2920 = sand.u32 %s121, 1
          %s2921 = sand.u32 %s121, 1
          %s2922 = smul.addr %s2921, 128
          %s2923 = scalar_lea.vmem [#allocation4], %s2922
        $region78: #{encoder_forward.3} parent=73 // pred_fallthru
          _
      $region74: #{encoder_forward.3} parent=5 // pred_fallthru
        _
    $region6: #{encoder_forward.3} parent=1 // loop_footer
      %s12 = sadd.s32 1, %s8
    $region7: #{encoder_forward.3} parent=1 // loop_footer_branch
      %7 = sbr.rel target = $region3
    $region8: #{encoder_forward.3} parent=1 // loop_exit
      _

</llo_original>
